<compile_context>
chip_gen: v6e
topology: v6e:2x2x1
jax: 0.10.0
libtpu: 0.0.40
codegen_flags: <defaults>
</compile_context>

<pallas_src>
import math
import jax
import jax.numpy as jnp
from jax import lax
from jax.experimental import pallas as pl
from jax.experimental.pallas import tpu as pltpu

D_DEPTH = 4               # torch.stack([x1..x4], dim=2)
C_IN = 4                  # Conv3d in_channels
C1_RAW = 180              # conv1 out channels
C1_PAD = 256              # lane/sublane-friendly padded conv1 out channels
K_RAW = 36                # 3*3*C_IN per-depth contraction
K_PAD = 48                # padded K (multiple of bf16 sublane tile 16); row K_RAW is the ones-row
C2 = 512                  # conv2 out channels
K2 = D_DEPTH * C1_PAD     # stacked conv2 contraction (1024)
ONES_CH = C1_PAD - 1      # padded conv1 channel used as a constant-1 feature (bias2 fold)
TM_MAX = 512              # max spatial tile (lanes) per grid step


def _round_up(x, m):
    return ((x + m - 1) // m) * m


def _choose_tm(m):
    """Spatial tile: a multiple of 128, at most TM_MAX."""
    return min(TM_MAX, _round_up(max(m, 1), 128))


# ----------------------------------------------------------------------------
# Fused Pallas kernel: conv1+BN1+ReLU+conv2+BN2+ReLU for one (batch, M-tile)
# ----------------------------------------------------------------------------
def _fused_conv_act_kernel(cols_ref, w1_ref, w2_ref, o_ref, y1_ref):
    """cols_ref: (1, D, K_PAD, TM) bf16  transposed im2col (spatial on lanes);
                 row K_RAW is constant 1.0 (bias fold), rows > K_RAW are 0.
       w1_ref  : (C1_PAD, K_PAD)  bf16   conv1 weight, BN1 scale+bias folded in;
                 row ONES_CH yields a constant-1 channel after ReLU.
       w2_ref  : (C2, D*C1_PAD)   bf16   conv2 weight, BN2 scale folded in,
                 bias2 folded into column (depth 0, ONES_CH).
       o_ref   : (1, C2, TM)      bf16
       y1_ref  : (D*C1_PAD, TM)   bf16   VMEM scratch (stacked conv1 activations)
    """
    w1 = w1_ref[...]
    for d in range(D_DEPTH):                        # short fixed loop, unrolled
        z1 = jnp.dot(w1, cols_ref[0, d], preferred_element_type=jnp.float32)  # (C1_PAD, TM) f32
        y1_ref[pl.ds(d * C1_PAD, C1_PAD), :] = jnp.maximum(z1, 0.0).astype(jnp.bfloat16)
    # Single stacked conv2 matmul: depth accumulation happens on the MXU (K=1024).
    z2 = jnp.dot(w2_ref[...], y1_ref[...], preferred_element_type=jnp.float32)  # (C2, TM) f32
    o_ref[0] = jnp.maximum(z2, 0.0).astype(o_ref.dtype)


def fused_conv_act(cols, w1, w2, tm):
    """cols: (B, D, K_PAD, M_pad) bf16 -> (B, C2, M_pad) bf16."""
    B, D, Kp, Mp = cols.shape
    Cp = w1.shape[0]
    Co, Kd = w2.shape
    assert Mp % tm == 0 and tm % 128 == 0
    assert Kd == D * Cp
    return pl.pallas_call(
        _fused_conv_act_kernel,
        out_shape=jax.ShapeDtypeStruct((B, Co, Mp), jnp.bfloat16),
        grid=(B, Mp // tm),
        in_specs=[
            pl.BlockSpec((1, D, Kp, tm), lambda b, m: (b, 0, 0, m)),   # per-step cols tile
            pl.BlockSpec((Cp, Kp), lambda b, m: (0, 0)),               # resident w1
            pl.BlockSpec((Co, Kd), lambda b, m: (0, 0)),               # resident stacked w2
        ],
        out_specs=pl.BlockSpec((1, Co, tm), lambda b, m: (b, 0, m)),
        scratch_shapes=[pltpu.VMEM((Kd, tm), jnp.bfloat16)],           # stacked y1
        compiler_params=pltpu.CompilerParams(
            dimension_semantics=("parallel", "parallel"),
            vmem_limit_bytes=32 * 1024 * 1024,
        ),
    )(cols, w1, w2)


# ----------------------------------------------------------------------------
# JAX glue: transposed, lane-dense, bf16 im2col (3x3 / stride 2 / pad 1)
# ----------------------------------------------------------------------------
def im2col_transposed(act, tm):
    """act: (B, C_IN, D, H, W) f32 -> (cols (B, D, K_PAD, M_pad) bf16, Ho, Wo, M_pad).

    Row index (per depth) is k = (kh*3 + kw)*C_IN + c; row K_RAW is a constant
    1.0 (bias fold); remaining K rows are 0.  Column index is p = i*Wo + j
    (spatial on lanes), zero-padded to M_pad = multiple of tm.
    """
    B, C, D, H, W = act.shape
    Ho = (H - 1) // 2 + 1
    Wo = (W - 1) // 2 + 1
    M = Ho * Wo
    M_pad = _round_up(M, tm)
    xp = jnp.pad(act, ((0, 0), (0, 0), (0, 0), (1, 1), (1, 1)))
    slabs = [xp[:, :, :, kh:kh + 2 * Ho - 1:2, kw:kw + 2 * Wo - 1:2]
             for kh in range(3) for kw in range(3)]
    cols = jnp.stack(slabs, axis=3)                  # (B, C, D, 9, Ho, Wo)
    cols = cols.transpose(0, 2, 3, 1, 4, 5)          # (B, D, 9, C, Ho, Wo)
    cols = cols.reshape(B, D, K_RAW, M)              # k = (kh*3+kw)*C + c
    ones_row = jnp.ones((B, D, 1, M), cols.dtype)    # bias-fold row
    zero_rows = jnp.zeros((B, D, K_PAD - K_RAW - 1, M), cols.dtype)
    cols = jnp.concatenate([cols, ones_row, zero_rows], axis=2)      # (B, D, K_PAD, M)
    cols = jnp.pad(cols, ((0, 0), (0, 0), (0, 0), (0, M_pad - M)))   # lane-dense M
    return cols.astype(jnp.bfloat16), Ho, Wo, M_pad


# ----------------------------------------------------------------------------
# Parameter construction (deterministic synthetic; eval-mode BN folded)
# ----------------------------------------------------------------------------
def init_params(key):
    ks = jax.random.split(key, 10)
    eps = 1e-5

    # Conv3d(4 -> 180, kernel (1,3,3), stride (1,2,2), pad (0,1,1), no bias)
    w1_raw = jax.random.normal(ks[0], (C1_RAW, C_IN, 1, 3, 3), jnp.float32) / math.sqrt(C_IN * 9)
    g1 = 1.0 + 0.1 * jax.random.normal(ks[1], (C1_RAW,), jnp.float32)
    b1 = 0.1 * jax.random.normal(ks[2], (C1_RAW,), jnp.float32)
    m1 = 0.1 * jax.random.normal(ks[3], (C1_RAW,), jnp.float32)
    v1 = jnp.abs(jax.random.normal(ks[4], (C1_RAW,), jnp.float32)) + 0.5
    scale1 = g1 / jnp.sqrt(v1 + eps)
    bias1 = b1 - m1 * scale1

    # Conv3d(180 -> 512, kernel (4,1,1), stride 1, no bias)
    w2_raw = jax.random.normal(ks[5], (C2, C1_RAW, D_DEPTH, 1, 1), jnp.float32) / math.sqrt(C1_RAW * D_DEPTH)
    g2 = 1.0 + 0.1 * jax.random.normal(ks[6], (C2,), jnp.float32)
    b2 = 0.1 * jax.random.normal(ks[7], (C2,), jnp.float32)
    m2 = 0.1 * jax.random.normal(ks[8], (C2,), jnp.float32)
    v2 = jnp.abs(jax.random.normal(ks[9], (C2,), jnp.float32)) + 0.5
    scale2 = g2 / jnp.sqrt(v2 + eps)
    bias2 = b2 - m2 * scale2

    # ---- kernel-ready weights: BN + biases folded, padded, bf16 ------------
    # conv1: (o,c,1,kh,kw) -> (k=(kh*3+kw)*C+c, o), fold scale1, pad to (256,48).
    w1_mat = jnp.transpose(w1_raw[:, :, 0], (2, 3, 1, 0)).reshape(K_RAW, C1_RAW)
    w1_fold = (w1_mat * scale1[None, :]).T                                # (180, 36)
    w1_t = jnp.zeros((C1_PAD, K_PAD), jnp.float32)
    w1_t = w1_t.at[:C1_RAW, :K_RAW].set(w1_fold)
    w1_t = w1_t.at[:C1_RAW, K_RAW].set(bias1)     # bias1 via the cols ones-row (bf16-rounded)
    w1_t = w1_t.at[ONES_CH, K_RAW].set(1.0)       # constant-1 channel for bias2 fold
    # Other padded channels: weights=0 -> ReLU output exactly 0.

    # conv2: (o,c,d) -> stacked (o, d*C1_PAD + c), fold scale2, bias2 via ONES_CH of depth 0.
    w2_dco = jnp.transpose(w2_raw[:, :, :, 0, 0], (2, 0, 1))              # (D, 512, 180)
    w2_fold = w2_dco * scale2[None, :, None]
    w2_t = jnp.zeros((D_DEPTH, C2, C1_PAD), jnp.float32)
    w2_t = w2_t.at[:, :, :C1_RAW].set(w2_fold)
    w2_t = w2_t.at[0, :, ONES_CH].set(bias2)      # bias2 fold (bf16-rounded)
    w2_t = jnp.transpose(w2_t, (1, 0, 2)).reshape(C2, K2)                 # (512, 1024)

    return {
        "w1_raw": w1_raw, "w2_raw": w2_raw,
        "scale1": scale1, "bias1": bias1, "scale2": scale2, "bias2": bias2,
        "w1_t": w1_t.astype(jnp.bfloat16),
        "w2_t": w2_t.astype(jnp.bfloat16),
        # Unused-by-forward module parameter (kept for shape fidelity):
        "timeembed": jnp.zeros((1, 4, 111, 111), jnp.float32),
    }


# ----------------------------------------------------------------------------
# Forward pass (matches MMNetEmbed.forward for the parts defined in-source)
# ----------------------------------------------------------------------------
def mmnet_embed_forward(params, onset, x1, x2, x3, x4, if_shuffle=False):
    B = onset.shape[0]
    # act = torch.stack([x1..x4], dim=2).float() -> (B, C=4, D=4, H, W)
    act = jnp.stack([x1, x2, x3, x4], axis=2).astype(jnp.float32)
    H, W = act.shape[-2:]
    Ho = (H - 1) // 2 + 1
    Wo = (W - 1) // 2 + 1
    tm = _choose_tm(Ho * Wo)
    cols, Ho, Wo, M_pad = im2col_transposed(act, tm)
    y = fused_conv_act(cols, params["w1_t"], params["w2_t"], tm)   # (B, 512, M_pad) bf16
    # Drop M padding; torch.squeeze removes the size-1 depth dim -> (B, 512, Ho, Wo)
    act_out = y[:, :, :Ho * Wo].reshape(B, C2, Ho, Wo)
    # TODO(synk): torch.squeeze would also drop the batch dim when B == 1.
    # TODO(synk): downstream consumes bf16 activations; keep an f32 variant if
    #             resnet18_pos_attention turns out to be precision-sensitive.

    # self.resize(onset): torchvision Resize([14,14]) (bilinear).
    onset_14 = jax.image.resize(onset.astype(jnp.float32),
                                (B, onset.shape[1], 14, 14), method="bilinear")
    # TODO(synk): torchvision Resize uses antialias on downscale; jax.image.resize
    #             bilinear has no antialias, so onset_14 is not bit-exact.
    # TODO(synk): VisionTransformer_POS (vit_pos) and resnet18_pos_attention
    #             (main_branch) are external classes not defined in the provided
    #             source; the final `embedding` cannot be reproduced here.
    return act_out, onset_14


# ----------------------------------------------------------------------------
# References for correctness checks
# ----------------------------------------------------------------------------
def conv_act_reference(params, x1, x2, x3, x4):
    """Pure-JAX f32 reference of the conv_act stack (true conv semantics)."""
    B, Cin, H, W = x1.shape
    act = jnp.stack([x1, x2, x3, x4], axis=2).astype(jnp.float32)  # (B,4,4,H,W)
    x2d = jnp.transpose(act, (0, 2, 1, 3, 4)).reshape(B * D_DEPTH, Cin, H, W)
    w1 = params["w1_raw"][:, :, 0]                                 # (180,4,3,3)
    y = lax.conv_general_dilated(x2d, w1, window_strides=(2, 2),
                                 padding=((1, 1), (1, 1)),
                                 dimension_numbers=("NCHW", "OIHW", "NCHW"),
                                 precision=lax.Precision.HIGHEST)
    Ho, Wo = y.shape[-2:]
    y = y.reshape(B, D_DEPTH, C1_RAW, Ho, Wo).transpose(0, 2, 1, 3, 4)
    s1 = params["scale1"].reshape(1, C1_RAW, 1, 1, 1)
    b1 = params["bias1"].reshape(1, C1_RAW, 1, 1, 1)
    y = jnp.maximum(y * s1 + b1, 0.0)
    w2 = params["w2_raw"].reshape(C2, C1_RAW, D_DEPTH)
    z = jnp.einsum("bcdhw,ocd->bohw", y, w2, precision=lax.Precision.HIGHEST)
    s2 = params["scale2"].reshape(1, C2, 1, 1)
    b2 = params["bias2"].reshape(1, C2, 1, 1)
    return jnp.maximum(z * s2 + b2, 0.0)


def conv_act_mirrored_reference(cols, w1, w2):
    """Same bf16 operands / same folded math as the kernel, via XLA einsums."""
    z1 = jnp.einsum("ok,bdkm->bdom", w1.astype(jnp.float32), cols.astype(jnp.float32),
                    precision=lax.Precision.HIGHEST)
    y1 = jnp.maximum(z1, 0.0).astype(jnp.bfloat16)                  # (B, D, C1_PAD, Mp)
    B_, D_, Cp, Mp = y1.shape
    y1s = y1.reshape(B_, D_ * Cp, Mp)
    z2 = jnp.einsum("ok,bkm->bom", w2.astype(jnp.float32), y1s.astype(jnp.float32),
                    precision=lax.Precision.HIGHEST)
    return jnp.maximum(z2, 0.0).astype(jnp.bfloat16)


if __name__ == "__main__":
    key = jax.random.PRNGKey(0)
    kp, k_on, k1, k2, k3, k4 = jax.random.split(key, 6)
    params = init_params(kp)

    B, H, W = 2, 16, 16
    onset = jax.random.normal(k_on, (B, 3, H, W), jnp.float32)
    x1 = jax.random.normal(k1, (B, 4, H, W), jnp.float32)
    x2 = jax.random.normal(k2, (B, 4, H, W), jnp.float32)
    x3 = jax.random.normal(k3, (B, 4, H, W), jnp.float32)
    x4 = jax.random.normal(k4, (B, 4, H, W), jnp.float32)

    fwd = jax.jit(lambda p, o, a, b, c, d: mmnet_embed_forward(p, o, a, b, c, d))
    act_out, onset_14 = fwd(params, onset, x1, x2, x3, x4)
    jax.block_until_ready(act_out)
    jax.block_until_ready(onset_14)

    assert act_out.shape == (B, C2, H // 2, W // 2), act_out.shape
    assert onset_14.shape == (B, 3, 14, 14), onset_14.shape
    act_f32_out = act_out.astype(jnp.float32)

    # 1) Kernel vs XLA mirror of the exact same bf16 folded math.
    #    Both sides end in a bf16 cast, so the tolerance is ~1 bf16 ULP of the
    #    output (accumulation-order rounding flips), i.e. <1% relative.
    act5d = jnp.stack([x1, x2, x3, x4], axis=2).astype(jnp.float32)
    Ho, Wo = H // 2, W // 2
    tm = _choose_tm(Ho * Wo)
    cols, Ho, Wo, M_pad = im2col_transposed(act5d, tm)
    mirror = conv_act_mirrored_reference(cols, params["w1_t"], params["w2_t"])
    mirror = mirror[:, :, :Ho * Wo].reshape(B, C2, Ho, Wo).astype(jnp.float32)
    tight_rel = float(jnp.max(jnp.abs(act_f32_out - mirror)) /
                      (jnp.max(jnp.abs(mirror)) + 1e-6))
    assert tight_rel < 0.02, f"kernel vs mirrored-math mismatch: rel={tight_rel}"

    # 2) Kernel vs the true f32 conv/BN/ReLU reference (loose, bf16 operands/output).
    ref = conv_act_reference(params, x1, x2, x3, x4)
    rel_err = float(jnp.max(jnp.abs(act_f32_out - ref)) / (jnp.max(jnp.abs(ref)) + 1e-6))
    assert rel_err < 0.05, f"kernel vs f32 conv reference mismatch: rel={rel_err}"

    print("KERNEL_OK")
</pallas_src>

<mosaic_0001>
module attributes {stable_mosaic.version = 11 : i64} {
  func.func @_fused_conv_act_kernel(%arg0: i32, %arg1: i32, %arg2: memref<1x4x48x128xbf16, #tpu.memory_space<vmem>>, %arg3: memref<256x48xbf16, #tpu.memory_space<vmem>>, %arg4: memref<512x1024xbf16, #tpu.memory_space<vmem>>, %arg5: memref<1x512x128xbf16, #tpu.memory_space<vmem>>, %arg6: memref<1024x128xbf16, #tpu.memory_space<vmem>>) attributes {dimension_semantics = [#tpu.dimension_semantics<parallel>, #tpu.dimension_semantics<parallel>], iteration_bounds = array<i64: 2, 1>, scalar_prefetch = 0 : i64, scratch_operands = 1 : i64, tpu.core_type = #tpu.core_type<tc>, window_params = [{transform_indices = @transform_0, window_bounds = array<i64: 1, 4, 48, 128>}, {pipeline_mode = #tpu.pipeline_mode<synchronous>, transform_indices = @transform_1, window_bounds = array<i64: 256, 48>}, {pipeline_mode = #tpu.pipeline_mode<synchronous>, transform_indices = @transform_2, window_bounds = array<i64: 512, 1024>}, {transform_indices = @transform_3, window_bounds = array<i64: 1, 512, 128>}]} {
    %c0 = arith.constant 0 : index
    %c0_0 = arith.constant 0 : index
    %0 = vector.load %arg3[%c0, %c0_0] : memref<256x48xbf16, #tpu.memory_space<vmem>>, vector<256x48xbf16>
    %c0_1 = arith.constant 0 : index
    %c0_2 = arith.constant 0 : index
    %c0_3 = arith.constant 0 : index
    %c0_4 = arith.constant 0 : index
    %1 = vector.load %arg2[%c0_1, %c0_2, %c0_3, %c0_4] : memref<1x4x48x128xbf16, #tpu.memory_space<vmem>>, vector<1x1x48x128xbf16>
    %2 = vector.shape_cast %1 : vector<1x1x48x128xbf16> to vector<48x128xbf16>
    %cst = arith.constant dense<0.000000e+00> : vector<256x128xf32>
    %3 = tpu.matmul %0, %2, %cst {dimension_numbers = #tpu.dot_dimension_numbers<[1], [0], [0], [1], [0, 0, 1, 1], [], []>} : vector<256x48xbf16>, vector<48x128xbf16>, vector<256x128xf32> -> vector<256x128xf32>
    %cst_5 = arith.constant 0.000000e+00 : f32
    %4 = vector.broadcast %cst_5 : f32 to vector<256x128xf32>
    %5 = arith.maximumf %3, %4 : vector<256x128xf32>
    %6 = arith.truncf %5 : vector<256x128xf32> to vector<256x128xbf16>
    %c0_6 = arith.constant 0 : index
    %c0_7 = arith.constant 0 : index
    %7 = vector.load %arg6[%c0_6, %c0_7] : memref<1024x128xbf16, #tpu.memory_space<vmem>>, vector<256x128xbf16>
    tpu.vector_store %arg6[%c0_6, %c0_7], %6 {strides = array<i32>} : memref<1024x128xbf16, #tpu.memory_space<vmem>>, vector<256x128xbf16>,
    %c0_8 = arith.constant 0 : index
    %c1 = arith.constant 1 : index
    %c0_9 = arith.constant 0 : index
    %c0_10 = arith.constant 0 : index
    %8 = vector.load %arg2[%c0_8, %c1, %c0_9, %c0_10] : memref<1x4x48x128xbf16, #tpu.memory_space<vmem>>, vector<1x1x48x128xbf16>
    %9 = vector.shape_cast %8 : vector<1x1x48x128xbf16> to vector<48x128xbf16>
    %cst_11 = arith.constant dense<0.000000e+00> : vector<256x128xf32>
    %10 = tpu.matmul %0, %9, %cst_11 {dimension_numbers = #tpu.dot_dimension_numbers<[1], [0], [0], [1], [0, 0, 1, 1], [], []>} : vector<256x48xbf16>, vector<48x128xbf16>, vector<256x128xf32> -> vector<256x128xf32>
    %cst_12 = arith.constant 0.000000e+00 : f32
    %11 = vector.broadcast %cst_12 : f32 to vector<256x128xf32>
    %12 = arith.maximumf %10, %11 : vector<256x128xf32>
    %13 = arith.truncf %12 : vector<256x128xf32> to vector<256x128xbf16>
    %c256 = arith.constant 256 : index
    %c0_13 = arith.constant 0 : index
    %14 = vector.load %arg6[%c256, %c0_13] : memref<1024x128xbf16, #tpu.memory_space<vmem>>, vector<256x128xbf16>
    tpu.vector_store %arg6[%c256, %c0_13], %13 {strides = array<i32>} : memref<1024x128xbf16, #tpu.memory_space<vmem>>, vector<256x128xbf16>,
    %c0_14 = arith.constant 0 : index
    %c2 = arith.constant 2 : index
    %c0_15 = arith.constant 0 : index
    %c0_16 = arith.constant 0 : index
    %15 = vector.load %arg2[%c0_14, %c2, %c0_15, %c0_16] : memref<1x4x48x128xbf16, #tpu.memory_space<vmem>>, vector<1x1x48x128xbf16>
    %16 = vector.shape_cast %15 : vector<1x1x48x128xbf16> to vector<48x128xbf16>
    %cst_17 = arith.constant dense<0.000000e+00> : vector<256x128xf32>
    %17 = tpu.matmul %0, %16, %cst_17 {dimension_numbers = #tpu.dot_dimension_numbers<[1], [0], [0], [1], [0, 0, 1, 1], [], []>} : vector<256x48xbf16>, vector<48x128xbf16>, vector<256x128xf32> -> vector<256x128xf32>
    %cst_18 = arith.constant 0.000000e+00 : f32
    %18 = vector.broadcast %cst_18 : f32 to vector<256x128xf32>
    %19 = arith.maximumf %17, %18 : vector<256x128xf32>
    %20 = arith.truncf %19 : vector<256x128xf32> to vector<256x128xbf16>
    %c512 = arith.constant 512 : index
    %c0_19 = arith.constant 0 : index
    %21 = vector.load %arg6[%c512, %c0_19] : memref<1024x128xbf16, #tpu.memory_space<vmem>>, vector<256x128xbf16>
    tpu.vector_store %arg6[%c512, %c0_19], %20 {strides = array<i32>} : memref<1024x128xbf16, #tpu.memory_space<vmem>>, vector<256x128xbf16>,
    %c0_20 = arith.constant 0 : index
    %c3 = arith.constant 3 : index
    %c0_21 = arith.constant 0 : index
    %c0_22 = arith.constant 0 : index
    %22 = vector.load %arg2[%c0_20, %c3, %c0_21, %c0_22] : memref<1x4x48x128xbf16, #tpu.memory_space<vmem>>, vector<1x1x48x128xbf16>
    %23 = vector.shape_cast %22 : vector<1x1x48x128xbf16> to vector<48x128xbf16>
    %cst_23 = arith.constant dense<0.000000e+00> : vector<256x128xf32>
    %24 = tpu.matmul %0, %23, %cst_23 {dimension_numbers = #tpu.dot_dimension_numbers<[1], [0], [0], [1], [0, 0, 1, 1], [], []>} : vector<256x48xbf16>, vector<48x128xbf16>, vector<256x128xf32> -> vector<256x128xf32>
    %cst_24 = arith.constant 0.000000e+00 : f32
    %25 = vector.broadcast %cst_24 : f32 to vector<256x128xf32>
    %26 = arith.maximumf %24, %25 : vector<256x128xf32>
    %27 = arith.truncf %26 : vector<256x128xf32> to vector<256x128xbf16>
    %c768 = arith.constant 768 : index
    %c0_25 = arith.constant 0 : index
    %28 = vector.load %arg6[%c768, %c0_25] : memref<1024x128xbf16, #tpu.memory_space<vmem>>, vector<256x128xbf16>
    tpu.vector_store %arg6[%c768, %c0_25], %27 {strides = array<i32>} : memref<1024x128xbf16, #tpu.memory_space<vmem>>, vector<256x128xbf16>,
    %c0_26 = arith.constant 0 : index
    %c0_27 = arith.constant 0 : index
    %29 = vector.load %arg4[%c0_26, %c0_27] : memref<512x1024xbf16, #tpu.memory_space<vmem>>, vector<512x1024xbf16>
    %c0_28 = arith.constant 0 : index
    %c0_29 = arith.constant 0 : index
    %30 = vector.load %arg6[%c0_28, %c0_29] : memref<1024x128xbf16, #tpu.memory_space<vmem>>, vector<1024x128xbf16>
    %cst_30 = arith.constant dense<0.000000e+00> : vector<512x128xf32>
    %31 = tpu.matmul %29, %30, %cst_30 {dimension_numbers = #tpu.dot_dimension_numbers<[1], [0], [0], [1], [0, 0, 1, 1], [], []>} : vector<512x1024xbf16>, vector<1024x128xbf16>, vector<512x128xf32> -> vector<512x128xf32>
    %cst_31 = arith.constant 0.000000e+00 : f32
    %32 = vector.broadcast %cst_31 : f32 to vector<512x128xf32>
    %33 = arith.maximumf %31, %32 : vector<512x128xf32>
    %34 = arith.truncf %33 : vector<512x128xf32> to vector<512x128xbf16>
    %c0_32 = arith.constant 0 : index
    %c0_33 = arith.constant 0 : index
    %c0_34 = arith.constant 0 : index
    %35 = vector.load %arg5[%c0_32, %c0_33, %c0_34] : memref<1x512x128xbf16, #tpu.memory_space<vmem>>, vector<1x512x128xbf16>
    %36 = vector.shape_cast %35 : vector<1x512x128xbf16> to vector<512x128xbf16>
    %37 = vector.shape_cast %34 : vector<512x128xbf16> to vector<1x512x128xbf16>
    tpu.vector_store %arg5[%c0_32, %c0_33, %c0_34], %37 {strides = array<i32>} : memref<1x512x128xbf16, #tpu.memory_space<vmem>>, vector<1x512x128xbf16>,
    return
  }
  func.func @transform_0(%arg0: i32, %arg1: i32) -> (i32, i32, i32, i32) {
    %c0_i32 = arith.constant 0 : i32
    %c0_i32_0 = arith.constant 0 : i32
    %c0_i32_1 = arith.constant 0 : i32
    return %arg0, %c0_i32, %c0_i32_0, %arg1 : i32, i32, i32, i32
  }
  func.func @transform_1(%arg0: i32, %arg1: i32) -> (i32, i32) {
    %c0_i32 = arith.constant 0 : i32
    %c0_i32_0 = arith.constant 0 : i32
    %c0_i32_1 = arith.constant 0 : i32
    return %c0_i32, %c0_i32_0 : i32, i32
  }
  func.func @transform_2(%arg0: i32, %arg1: i32) -> (i32, i32) {
    %c0_i32 = arith.constant 0 : i32
    %c0_i32_0 = arith.constant 0 : i32
    %c0_i32_1 = arith.constant 0 : i32
    return %c0_i32, %c0_i32_0 : i32, i32
  }
  func.func @transform_3(%arg0: i32, %arg1: i32) -> (i32, i32, i32) {
    %c0_i32 = arith.constant 0 : i32
    %c0_i32_0 = arith.constant 0 : i32
    return %arg0, %c0_i32, %arg1 : i32, i32, i32
  }
}

</mosaic_0001>

<llo_original>
// kernel: _lambda_.1
$region0: #{_lambda_.1}
  #allocation0 [shape = 'u32[]', space=smem, size = 0x4, offset = 0x4, fixed_abs, tag = 'smem constant byte address 0x4 - core index']
  #allocation1 [shape = 'u32[144,128]{1,0:T(1,128)}', space=vmem, size = 0x12000, scoped, tag = 'internal scratch']
  #allocation2 [shape = 'bf16[1024,128]{1,0:T(8,128)(2,1)}', space=vmem, size = 0x40000, scoped, tag = 'scratch operand']
  %s0 = inlined_call_operand.vmem [shape: bf16[2,4,48,128], index: 0, kind: input, shape index: {}]
  %s1 = inlined_call_operand.vmem [shape: bf16[256,48], index: 1, kind: input, shape index: {}]
  %s2 = inlined_call_operand.vmem [shape: bf16[512,1024], index: 2, kind: input, shape index: {}]
  %s3 = inlined_call_operand.vmem [shape: bf16[2,512,128], index: 3, kind: output, shape index: {}]
  %s4 = sld [smem:[#allocation0]]
  $region45: #{_lambda_.1} parent=0
    _
  %s6 = ssub.s32 1, %s4
  %s7 = scalar_select 0, %s6, %s4
  loop: start=0, step=1, limit=4
  $region2: #{_lambda_.1} parent=0 // loop_pre_header
    _
  $region3: #{_lambda_.1} parent=0 // loop_header
    %s9 = sphi 0, %s13
    %p10 = scmp.ge.s32.totalorder %s9, 4
    %s16 = sphi 0, %s28
    %s17 = sphi 0, %s24
    %s18 = sphi 0, %s16
    %s19 = sphi 0, %s17
    %s20 = sphi 0, %s18
    %s21 = sphi 0, %s19
    %s33 = sphi 0, %s35
    %s36 = sphi 0, %s33
    %s37 = sphi 0, %s36
    %s53 = sphi 0, %s37
    %s57 = sphi 0, %s57
    %s59 = sphi 0, %s57
    %s60 = sphi 0, %s59
    %s74 = sphi 0, %s60
    %s78 = sphi 0, %s78
    %s80 = sphi 0, %s78
    %s81 = sphi 0, %s80
    %s95 = sphi 0, %s81
    %s103 = sphi 0, %s105
    %s106 = sphi 0, %s103
    %s107 = sphi 0, %s106
    %s123 = sphi 0, %s107
  $region4: #{_lambda_.1} parent=0 // loop_header_branch
    %12 = sbr.rel (%p10) target = $region8
  $region5: #{_lambda_.1} parent=0 // loop_body
    %s14 = ssub.s32 %s9, 1
    %s15 = ssub.s32 %s9, 2
    %s22 = sadd.s32 1, %s17
    %p23 = scmp.ge.s32.totalorder %s22, 1
    %s24 = scalar_select %p23, 0, %s22
    %s25 = sadd.s32 1, %s16
    %s26 = scalar_select %p23, %s25, %s16
    %p27 = scmp.ge.s32.totalorder %s26, 2
    %s28 = scalar_select %p27, 0, %s26
    %s29 = ssub.s32 %s16, %s28
    %s30 = ssub.s32 %s17, %s24
    %s31 = sor.u32 %s29, %s30
    %p32 = scmp.eq.s32.totalorder %s31, 0
    %s34 = sadd.s32 %s33, 1
    %s35 = scalar_select %p32, %s33, %s34
    %p38 = pneg %p32
    %p39 = scmp.eq.s32.totalorder %s9, 1
    %p40 = por %p38, %p39
    %p41 = scmp.ne.s32.totalorder %s33, %s36
    %p42 = scmp.eq.s32.totalorder %s9, 0
    %p43 = por %p41, %p42
    %p44 = scmp.ne.s32.totalorder %s33, %s36
    %p45 = scmp.eq.s32.totalorder %s14, 1
    %p46 = por %p44, %p45
    %p47 = scmp.ne.s32.totalorder %s36, %s37
    %p48 = scmp.eq.s32.totalorder %s14, 0
    %p49 = por %p47, %p48
    %p50 = scmp.ne.s32.totalorder %s36, %s37
    %p51 = scmp.eq.s32.totalorder %s15, 1
    %p52 = por %p50, %p51
    %p54 = scmp.ne.s32.totalorder %s37, %s53
    %p55 = scmp.eq.s32.totalorder %s15, 0
    %p56 = por %p54, %p55
    %s58 = sadd.s32 %s57, 1
    %p61 = scmp.eq.s32.totalorder %s9, 1
    %p62 = scmp.ne.s32.totalorder %s57, %s59
    %p63 = scmp.eq.s32.totalorder %s9, 0
    %p64 = por %p62, %p63
    %p65 = scmp.ne.s32.totalorder %s57, %s59
    %p66 = scmp.eq.s32.totalorder %s14, 1
    %p67 = por %p65, %p66
    %p68 = scmp.ne.s32.totalorder %s59, %s60
    %p69 = scmp.eq.s32.totalorder %s14, 0
    %p70 = por %p68, %p69
    %p71 = scmp.ne.s32.totalorder %s59, %s60
    %p72 = scmp.eq.s32.totalorder %s15, 1
    %p73 = por %p71, %p72
    %p75 = scmp.ne.s32.totalorder %s60, %s74
    %p76 = scmp.eq.s32.totalorder %s15, 0
    %p77 = por %p75, %p76
    %s79 = sadd.s32 %s78, 1
    %p82 = scmp.eq.s32.totalorder %s9, 1
    %p83 = scmp.ne.s32.totalorder %s78, %s80
    %p84 = scmp.eq.s32.totalorder %s9, 0
    %p85 = por %p83, %p84
    %p86 = scmp.ne.s32.totalorder %s78, %s80
    %p87 = scmp.eq.s32.totalorder %s14, 1
    %p88 = por %p86, %p87
    %p89 = scmp.ne.s32.totalorder %s80, %s81
    %p90 = scmp.eq.s32.totalorder %s14, 0
    %p91 = por %p89, %p90
    %p92 = scmp.ne.s32.totalorder %s80, %s81
    %p93 = scmp.eq.s32.totalorder %s15, 1
    %p94 = por %p92, %p93
    %p96 = scmp.ne.s32.totalorder %s81, %s95
    %p97 = scmp.eq.s32.totalorder %s15, 0
    %p98 = por %p96, %p97
    %s99 = ssub.s32 %s16, %s28
    %s100 = ssub.s32 %s17, %s24
    %s101 = sor.u32 %s99, %s100
    %p102 = scmp.eq.s32.totalorder %s101, 0
    %s104 = sadd.s32 %s103, 1
    %s105 = scalar_select %p102, %s103, %s104
    %p108 = pneg %p102
    %p109 = scmp.eq.s32.totalorder %s9, 1
    %p110 = por %p108, %p109
    %p111 = scmp.ne.s32.totalorder %s103, %s106
    %p112 = scmp.eq.s32.totalorder %s9, 0
    %p113 = por %p111, %p112
    %p114 = scmp.ne.s32.totalorder %s103, %s106
    %p115 = scmp.eq.s32.totalorder %s14, 1
    %p116 = por %p114, %p115
    %p117 = scmp.ne.s32.totalorder %s106, %s107
    %p118 = scmp.eq.s32.totalorder %s14, 0
    %p119 = por %p117, %p118
    %p120 = scmp.ne.s32.totalorder %s106, %s107
    %p121 = scmp.eq.s32.totalorder %s15, 1
    %p122 = por %p120, %p121
    %p124 = scmp.ne.s32.totalorder %s107, %s123
    %p125 = scmp.eq.s32.totalorder %s15, 0
    %p126 = por %p124, %p125
    %p127 = scmp.le.s32.totalorder 1, %s9
    %p128 = scmp.lt.s32.totalorder %s9, 3
    %p129 = pnand %p127, %p128
    %p130 = pneg %p129
    // Predicated region
    $region9: #{_lambda_.1} parent=5 // pred_check
      _
    $region10: #{_lambda_.1} parent=5 // pred_check_branch
      %132 = sbr.rel (%p129) target = $region12
    $region11: #{_lambda_.1} parent=5 // pred_region
      %s133 = ssub.s32 %s9, 1
      // Predicated region
      $region13: #{_lambda_.1} parent=11 // pred_check
        %p134 = pneg %p70
      $region14: #{_lambda_.1} parent=11 // pred_check_branch
        %136 = sbr.rel (%p134) target = $region16
      $region15: #{_lambda_.1} parent=11 // pred_region
        _
      $region16: #{_lambda_.1} parent=11 // pred_fallthru
        _
      // Predicated region
      $region17: #{_lambda_.1} parent=11 // pred_check
        %p137 = pneg %p91
      $region18: #{_lambda_.1} parent=11 // pred_check_branch
        %139 = sbr.rel (%p137) target = $region20
      $region19: #{_lambda_.1} parent=11 // pred_region
        _
      $region20: #{_lambda_.1} parent=11 // pred_fallthru
        _
    $region12: #{_lambda_.1} parent=5 // pred_fallthru
      _
    %p140 = scmp.lt.s32.totalorder %s9, 2
    // Predicated region
    $region21: #{_lambda_.1} parent=5 // pred_check
      %p141 = pneg %p140
    $region22: #{_lambda_.1} parent=5 // pred_check_branch
      %143 = sbr.rel (%p141) target = $region24
    $region23: #{_lambda_.1} parent=5 // pred_region
      // Predicated region
      $region25: #{_lambda_.1} parent=23 // pred_check
        %p144 = pneg %p43
      $region26: #{_lambda_.1} parent=23 // pred_check_branch
        %146 = sbr.rel (%p144) target = $region28
      $region27: #{_lambda_.1} parent=23 // pred_region
        %p147 = scmp.lt.s32.totalorder %s16, 1
        %s148 = scalar_select %p147, %s16, 1
        %p149 = scmp.lt.s32.totalorder %s17, 0
        %s150 = scalar_select %p149, %s17, 0
        %s151 = smul.addr %s148, 24
        %s152 = sadd.s32 %s150, %s151
        %s153 = smul.addr %s152, 4
        %s154 = scalar_lea.vmem %s0, %s153
      $region28: #{_lambda_.1} parent=23 // pred_fallthru
        _
    $region24: #{_lambda_.1} parent=5 // pred_fallthru
      _
    %p155 = scmp.le.s32.totalorder 1, %s9
    %p156 = scmp.lt.s32.totalorder %s9, 3
    %p157 = pnand %p155, %p156
    %p158 = pneg %p157
    // Predicated region
    $region29: #{_lambda_.1} parent=5 // pred_check
      _
    $region30: #{_lambda_.1} parent=5 // pred_check_branch
      %160 = sbr.rel (%p157) target = $region32
    $region31: #{_lambda_.1} parent=5 // pred_region
      %s161 = ssub.s32 %s9, 1
      %p162 = scmp.lt.s32.totalorder %s18, 1
      %s163 = scalar_select %p162, %s18, 1
      %p164 = scmp.lt.s32.totalorder %s19, 0
      %s165 = scalar_select %p164, %s19, 0
      %s166 = smul.addr %s163, 24
      %s167 = sadd.s32 %s165, %s166
      %s168 = smul.addr %s167, 4
      %s169 = scalar_lea.vmem %s0, %s168
      %p170 = pneg %p49
      %p171 = pneg %p46
      %p172 = pneg %p70
      %p173 = pneg %p67
      %p174 = pneg %p91
      %p175 = pneg %p88
      %p176 = pneg %p119
      %p177 = pneg %p116
      %p178 = scmp.lt.s32.totalorder %s18, 1
      %s179 = scalar_select %p178, %s18, 1
      %p180 = scmp.lt.s32.totalorder %s19, 0
      %s181 = scalar_select %p180, %s19, 0
      %s182 = smul.addr %s179, 64
      %s183 = sadd.s32 %s181, %s182
      %s184 = smul.addr %s183, 4
      %s185 = scalar_lea.vmem %s3, %s184
      %p186 = scmp.lt.s32.totalorder %s18, 1
      %s187 = scalar_select %p186, %s18, 1
      %p188 = scmp.lt.s32.totalorder %s19, 0
      %s189 = scalar_select %p188, %s19, 0
      %s190 = smul.addr %s187, 24
      %s191 = sadd.s32 %s189, %s190
      %s192 = smul.addr %s191, 4
      %s193 = scalar_lea.vmem %s0, %s192
      %p194 = scmp.lt.s32.totalorder %s18, 1
      %s195 = scalar_select %p194, %s18, 1
      %p196 = scmp.lt.s32.totalorder %s19, 0
      %s197 = scalar_select %p196, %s19, 0
      %s198 = smul.addr %s195, 64
      %s199 = sadd.s32 %s197, %s198
      %s200 = smul.addr %s199, 4
      %s201 = scalar_lea.vmem %s3, %s200
      %v203 = vld [vmem:[%s1] sm:$0xf]
      %v204 = vld [vmem:[%s1 + $0x4] sm:$0xf]
      %v205 = vld [vmem:[%s1 + $0x8] sm:$0xf]
      %v206 = vld [vmem:[%s1 + $0xc] sm:$0xf]
      %v207 = vld [vmem:[%s1 + $0x10] sm:$0xf]
      %v208 = vld [vmem:[%s1 + $0x14] sm:$0xf]
      %v209 = vld [vmem:[%s1 + $0x18] sm:$0xf]
      %v210 = vld [vmem:[%s1 + $0x1c] sm:$0xf]
      %v211 = vld [vmem:[%s1 + $0x20] sm:$0xf]
      %v212 = vld [vmem:[%s1 + $0x24] sm:$0xf]
      %v213 = vld [vmem:[%s1 + $0x28] sm:$0xf]
      %v214 = vld [vmem:[%s1 + $0x2c] sm:$0xf]
      %v215 = vld [vmem:[%s1 + $0x30] sm:$0xf]
      %v216 = vld [vmem:[%s1 + $0x34] sm:$0xf]
      %v217 = vld [vmem:[%s1 + $0x38] sm:$0xf]
      %v218 = vld [vmem:[%s1 + $0x3c] sm:$0xf]
      %v219 = vld [vmem:[%s1 + $0x40] sm:$0xf]
      %v220 = vld [vmem:[%s1 + $0x44] sm:$0xf]
      %v221 = vld [vmem:[%s1 + $0x48] sm:$0xf]
      %v222 = vld [vmem:[%s1 + $0x4c] sm:$0xf]
      %v223 = vld [vmem:[%s1 + $0x50] sm:$0xf]
      %v224 = vld [vmem:[%s1 + $0x54] sm:$0xf]
      %v225 = vld [vmem:[%s1 + $0x58] sm:$0xf]
      %v226 = vld [vmem:[%s1 + $0x5c] sm:$0xf]
      %v227 = vld [vmem:[%s1 + $0x60] sm:$0xf]
      %v228 = vld [vmem:[%s1 + $0x64] sm:$0xf]
      %v229 = vld [vmem:[%s1 + $0x68] sm:$0xf]
      %v230 = vld [vmem:[%s1 + $0x6c] sm:$0xf]
      %v231 = vld [vmem:[%s1 + $0x70] sm:$0xf]
      %v232 = vld [vmem:[%s1 + $0x74] sm:$0xf]
      %v233 = vld [vmem:[%s1 + $0x78] sm:$0xf]
      %v234 = vld [vmem:[%s1 + $0x7c] sm:$0xf]
      %v235 = vld [vmem:[%s193] sm:$0xf]
      %v236 = vld [vmem:[%s193 + $0x4] sm:$0xf]
      %v237 = vld [vmem:[%s193 + $0x8] sm:$0xf]
      %v238 = vld [vmem:[%s193 + $0xc] sm:$0xf]
      %v239 = vld [vmem:[%s193 + $0x10] sm:$0xf]
      %v240 = vld [vmem:[%s193 + $0x14] sm:$0xf]
      %v273 = vunpack.c.l.b16 %v203
      %v274 = vunpack.c.l.b16 %v204
      %v275 = vunpack.c.l.b16 %v205
      %v276 = vunpack.c.l.b16 %v206
      %v277 = vunpack.c.l.b16 %v207
      %v278 = vunpack.c.l.b16 %v208
      %v279 = vunpack.c.l.b16 %v209
      %v280 = vunpack.c.l.b16 %v210
      %v281 = vunpack.c.l.b16 %v211
      %v282 = vunpack.c.l.b16 %v212
      %v283 = vunpack.c.l.b16 %v213
      %v284 = vunpack.c.l.b16 %v214
      %v285 = vunpack.c.l.b16 %v215
      %v286 = vunpack.c.l.b16 %v216
      %v287 = vunpack.c.l.b16 %v217
      %v288 = vunpack.c.l.b16 %v218
      %v289 = vunpack.c.l.b16 %v219
      %v290 = vunpack.c.l.b16 %v220
      %v291 = vunpack.c.l.b16 %v221
      %v292 = vunpack.c.l.b16 %v222
      %v293 = vunpack.c.l.b16 %v223
      %v294 = vunpack.c.l.b16 %v224
      %v295 = vunpack.c.l.b16 %v225
      %v296 = vunpack.c.l.b16 %v226
      %v297 = vunpack.c.l.b16 %v227
      %v298 = vunpack.c.l.b16 %v228
      %v299 = vunpack.c.l.b16 %v229
      %v300 = vunpack.c.l.b16 %v230
      %v301 = vunpack.c.l.b16 %v231
      %v302 = vunpack.c.l.b16 %v232
      %v303 = vunpack.c.l.b16 %v233
      %v304 = vunpack.c.l.b16 %v234
      %v305 = vpack.c.b16 %v274, %v273
      %v306 = vpack.c.b16 %v276, %v275
      %v307 = vpack.c.b16 %v278, %v277
      %v308 = vpack.c.b16 %v280, %v279
      %v309 = vpack.c.b16 %v282, %v281
      %v310 = vpack.c.b16 %v284, %v283
      %v311 = vpack.c.b16 %v286, %v285
      %v312 = vpack.c.b16 %v288, %v287
      %v313 = vpack.c.b16 %v290, %v289
      %v314 = vpack.c.b16 %v292, %v291
      %v315 = vpack.c.b16 %v294, %v293
      %v316 = vpack.c.b16 %v296, %v295
      %v317 = vpack.c.b16 %v298, %v297
      %v318 = vpack.c.b16 %v300, %v299
      %v319 = vpack.c.b16 %v302, %v301
      %v320 = vpack.c.b16 %v304, %v303
      %v327 = vunpack.c.l.b16 %v235
      %v328 = vunpack.c.l.b16 %v236
      %v329 = vunpack.c.l.b16 %v237
      %v330 = vunpack.c.l.b16 %v238
      %v331 = vunpack.c.l.b16 %v239
      %v332 = vunpack.c.l.b16 %v240
      %v333 = vpack.c.b16 %v328, %v327
      %v334 = vpack.c.b16 %v330, %v329
      %v335 = vpack.c.b16 %v332, %v331
      %vm339 = vcmask 392192
      %v341 = vsel %vm339, %v305, 0
      %v344 = vsel %vm339, %v306, 0
      %v347 = vsel %vm339, %v307, 0
      %v350 = vsel %vm339, %v308, 0
      %v353 = vsel %vm339, %v309, 0
      %v356 = vsel %vm339, %v310, 0
      %v359 = vsel %vm339, %v311, 0
      %v362 = vsel %vm339, %v312, 0
      %v365 = vsel %vm339, %v313, 0
      %v368 = vsel %vm339, %v314, 0
      %v371 = vsel %vm339, %v315, 0
      %v374 = vsel %vm339, %v316, 0
      %v377 = vsel %vm339, %v317, 0
      %v380 = vsel %vm339, %v318, 0
      %v383 = vsel %vm339, %v319, 0
      %v386 = vsel %vm339, %v320, 0
      %388 = vmatprep.subr.bf16.mxu0 0
      %389 = vmatpush1.bf16.msra.mxu0 0
      %390 = vmatprep.subr.bf16.mxu0 0
      %391 = vmatpush1.bf16.msra.mxu0 0
      %392 = vmatprep.subr.bf16.mxu0 0
      %393 = vmatpush1.bf16.msra.mxu0 0
      %394 = vmatprep.subr.bf16.mxu0 0
      %395 = vmatpush1.bf16.msra.mxu0 0
      %396 = vmatprep.subr.bf16.mxu0 0
      %397 = vmatpush1.bf16.msra.mxu0 0
      %398 = vmatprep.subr.bf16.mxu0 0
      %399 = vmatpush1.bf16.msra.mxu0 %v335
      %400 = vmatprep.subr.bf16.mxu0 0
      %401 = vmatpush1.bf16.msra.mxu0 %v334
      %402 = vmatprep.subr.bf16.mxu0 0
      %403 = vmatpush1.bf16.msra.mxu0 %v333
      %404 = vmatprep.subr.bf16.mxu0 0
      %405 = vmatpush2.bf16.msra.mxu0 0
      %406 = vmatprep.subr.bf16.mxu0 0
      %407 = vmatpush2.bf16.msra.mxu0 0
      %408 = vmatprep.subr.bf16.mxu0 0
      %409 = vmatpush2.bf16.msra.mxu0 0
      %410 = vmatprep.subr.bf16.mxu0 0
      %411 = vmatpush2.bf16.msra.mxu0 0
      %412 = vmatprep.subr.bf16.mxu0 0
      %413 = vmatpush2.bf16.msra.mxu0 0
      %414 = vmatprep.subr.bf16.mxu0 0
      %415 = vmatpush2.bf16.msra.mxu0 0
      %416 = vmatprep.subr.bf16.mxu0 0
      %417 = vmatpush2.bf16.msra.mxu0 0
      %418 = vmatprep.subr.bf16.mxu0 0
      %419 = vmatpush2.bf16.msra.mxu0 0
      %420 = vmatprep.mubr.bf16.mxu0 0
      %421 = vmatmul.mubr.bf16.gmra.mxu0 %v341
      %v422 = vpop.f32.mrf.mxu0
      %v423 = vadd.f32 0.0, %v422
      %v424 = vpop.f32.mrf.mxu0
      %v425 = vpop.f32.mrf.mxu0
      %v426 = vadd.f32 0.0, %v425
      %v427 = vpop.f32.mrf.mxu0
      %428 = vmatprep.mubr.bf16.mxu0 0
      %429 = vmatmul.mubr.bf16.gmra.mxu0 %v344
      %v430 = vpop.f32.mrf.mxu0
      %v431 = vadd.f32 0.0, %v430
      %v432 = vpop.f32.mrf.mxu0
      %v433 = vpop.f32.mrf.mxu0
      %v434 = vadd.f32 0.0, %v433
      %v435 = vpop.f32.mrf.mxu0
      %436 = vmatprep.mubr.bf16.mxu0 0
      %437 = vmatmul.mubr.bf16.gmra.mxu0 %v347
      %v438 = vpop.f32.mrf.mxu0
      %v439 = vadd.f32 0.0, %v438
      %v440 = vpop.f32.mrf.mxu0
      %v441 = vpop.f32.mrf.mxu0
      %v442 = vadd.f32 0.0, %v441
      %v443 = vpop.f32.mrf.mxu0
      %444 = vmatprep.mubr.bf16.mxu0 0
      %445 = vmatmul.mubr.bf16.gmra.mxu0 %v350
      %v446 = vpop.f32.mrf.mxu0
      %v447 = vadd.f32 0.0, %v446
      %v448 = vpop.f32.mrf.mxu0
      %v449 = vpop.f32.mrf.mxu0
      %v450 = vadd.f32 0.0, %v449
      %v451 = vpop.f32.mrf.mxu0
      %452 = vmatprep.mubr.bf16.mxu0 0
      %453 = vmatmul.mubr.bf16.gmra.mxu0 %v353
      %v454 = vpop.f32.mrf.mxu0
      %v455 = vadd.f32 0.0, %v454
      %v456 = vpop.f32.mrf.mxu0
      %v457 = vpop.f32.mrf.mxu0
      %v458 = vadd.f32 0.0, %v457
      %v459 = vpop.f32.mrf.mxu0
      %460 = vmatprep.mubr.bf16.mxu0 0
      %461 = vmatmul.mubr.bf16.gmra.mxu0 %v356
      %v462 = vpop.f32.mrf.mxu0
      %v463 = vadd.f32 0.0, %v462
      %v464 = vpop.f32.mrf.mxu0
      %v465 = vpop.f32.mrf.mxu0
      %v466 = vadd.f32 0.0, %v465
      %v467 = vpop.f32.mrf.mxu0
      %468 = vmatprep.mubr.bf16.mxu0 0
      %469 = vmatmul.mubr.bf16.gmra.mxu0 %v359
      %v470 = vpop.f32.mrf.mxu0
      %v471 = vadd.f32 0.0, %v470
      %v472 = vpop.f32.mrf.mxu0
      %v473 = vpop.f32.mrf.mxu0
      %v474 = vadd.f32 0.0, %v473
      %v475 = vpop.f32.mrf.mxu0
      %476 = vmatprep.mubr.bf16.mxu0 0
      %477 = vmatmul.mubr.bf16.gmra.mxu0 %v362
      %v478 = vpop.f32.mrf.mxu0
      %v479 = vadd.f32 0.0, %v478
      %v480 = vpop.f32.mrf.mxu0
      %v481 = vpop.f32.mrf.mxu0
      %v482 = vadd.f32 0.0, %v481
      %v483 = vpop.f32.mrf.mxu0
      %484 = vmatprep.mubr.bf16.mxu0 0
      %485 = vmatmul.mubr.bf16.gmra.mxu0 %v365
      %v486 = vpop.f32.mrf.mxu0
      %v487 = vadd.f32 0.0, %v486
      %v488 = vpop.f32.mrf.mxu0
      %v489 = vpop.f32.mrf.mxu0
      %v490 = vadd.f32 0.0, %v489
      %v491 = vpop.f32.mrf.mxu0
      %492 = vmatprep.mubr.bf16.mxu0 0
      %493 = vmatmul.mubr.bf16.gmra.mxu0 %v368
      %v494 = vpop.f32.mrf.mxu0
      %v495 = vadd.f32 0.0, %v494
      %v496 = vpop.f32.mrf.mxu0
      %v497 = vpop.f32.mrf.mxu0
      %v498 = vadd.f32 0.0, %v497
      %v499 = vpop.f32.mrf.mxu0
      %500 = vmatprep.mubr.bf16.mxu0 0
      %501 = vmatmul.mubr.bf16.gmra.mxu0 %v371
      %v502 = vpop.f32.mrf.mxu0
      %v503 = vadd.f32 0.0, %v502
      %v504 = vpop.f32.mrf.mxu0
      %v505 = vpop.f32.mrf.mxu0
      %v506 = vadd.f32 0.0, %v505
      %v507 = vpop.f32.mrf.mxu0
      %508 = vmatprep.mubr.bf16.mxu0 0
      %509 = vmatmul.mubr.bf16.gmra.mxu0 %v374
      %v510 = vpop.f32.mrf.mxu0
      %v511 = vadd.f32 0.0, %v510
      %v512 = vpop.f32.mrf.mxu0
      %v513 = vpop.f32.mrf.mxu0
      %v514 = vadd.f32 0.0, %v513
      %v515 = vpop.f32.mrf.mxu0
      %516 = vmatprep.mubr.bf16.mxu0 0
      %517 = vmatmul.mubr.bf16.gmra.mxu0 %v377
      %v518 = vpop.f32.mrf.mxu0
      %v519 = vadd.f32 0.0, %v518
      %v520 = vpop.f32.mrf.mxu0
      %v521 = vpop.f32.mrf.mxu0
      %v522 = vadd.f32 0.0, %v521
      %v523 = vpop.f32.mrf.mxu0
      %524 = vmatprep.mubr.bf16.mxu0 0
      %525 = vmatmul.mubr.bf16.gmra.mxu0 %v380
      %v526 = vpop.f32.mrf.mxu0
      %v527 = vadd.f32 0.0, %v526
      %v528 = vpop.f32.mrf.mxu0
      %v529 = vpop.f32.mrf.mxu0
      %v530 = vadd.f32 0.0, %v529
      %v531 = vpop.f32.mrf.mxu0
      %532 = vmatprep.mubr.bf16.mxu0 0
      %533 = vmatmul.mubr.bf16.gmra.mxu0 %v383
      %v534 = vpop.f32.mrf.mxu0
      %v535 = vadd.f32 0.0, %v534
      %v536 = vpop.f32.mrf.mxu0
      %v537 = vpop.f32.mrf.mxu0
      %v538 = vadd.f32 0.0, %v537
      %v539 = vpop.f32.mrf.mxu0
      %540 = vmatprep.mubr.bf16.mxu0 0
      %541 = vmatmul.mubr.bf16.gmra.mxu0 %v386
      %v542 = vpop.f32.mrf.mxu0
      %v543 = vadd.f32 0.0, %v542
      %v544 = vpop.f32.mrf.mxu0
      %v545 = vpop.f32.mrf.mxu0
      %v546 = vadd.f32 0.0, %v545
      %v547 = vpop.f32.mrf.mxu0
      %548 = vdwg.mxu0
      %v549 = vmax.f32 %v423, 0.0
      %v550 = vmax.f32 %v426, 0.0
      %v551 = vmax.f32 %v431, 0.0
      %v552 = vmax.f32 %v434, 0.0
      %v553 = vmax.f32 %v439, 0.0
      %v554 = vmax.f32 %v442, 0.0
      %v555 = vmax.f32 %v447, 0.0
      %v556 = vmax.f32 %v450, 0.0
      %v557 = vmax.f32 %v455, 0.0
      %v558 = vmax.f32 %v458, 0.0
      %v559 = vmax.f32 %v463, 0.0
      %v560 = vmax.f32 %v466, 0.0
      %v561 = vmax.f32 %v471, 0.0
      %v562 = vmax.f32 %v474, 0.0
      %v563 = vmax.f32 %v479, 0.0
      %v564 = vmax.f32 %v482, 0.0
      %v565 = vmax.f32 %v487, 0.0
      %v566 = vmax.f32 %v490, 0.0
      %v567 = vmax.f32 %v495, 0.0
      %v568 = vmax.f32 %v498, 0.0
      %v569 = vmax.f32 %v503, 0.0
      %v570 = vmax.f32 %v506, 0.0
      %v571 = vmax.f32 %v511, 0.0
      %v572 = vmax.f32 %v514, 0.0
      %v573 = vmax.f32 %v519, 0.0
      %v574 = vmax.f32 %v522, 0.0
      %v575 = vmax.f32 %v527, 0.0
      %v576 = vmax.f32 %v530, 0.0
      %v577 = vmax.f32 %v535, 0.0
      %v578 = vmax.f32 %v538, 0.0
      %v579 = vmax.f32 %v543, 0.0
      %v580 = vmax.f32 %v546, 0.0
      %v581 = vpack.c.bf16 %v550, %v549
      %v582 = vpack.c.bf16 %v552, %v551
      %v583 = vpack.c.bf16 %v554, %v553
      %v584 = vpack.c.bf16 %v556, %v555
      %v585 = vpack.c.bf16 %v558, %v557
      %v586 = vpack.c.bf16 %v560, %v559
      %v587 = vpack.c.bf16 %v562, %v561
      %v588 = vpack.c.bf16 %v564, %v563
      %v589 = vpack.c.bf16 %v566, %v565
      %v590 = vpack.c.bf16 %v568, %v567
      %v591 = vpack.c.bf16 %v570, %v569
      %v592 = vpack.c.bf16 %v572, %v571
      %v593 = vpack.c.bf16 %v574, %v573
      %v594 = vpack.c.bf16 %v576, %v575
      %v595 = vpack.c.bf16 %v578, %v577
      %v596 = vpack.c.bf16 %v580, %v579
      %v613 = vunpack.c.l.b16 %v581
      %v614 = vunpack.c.h.b16 %v581
      %v615 = vunpack.c.l.b16 %v582
      %v616 = vunpack.c.h.b16 %v582
      %v617 = vunpack.c.l.b16 %v583
      %v618 = vunpack.c.h.b16 %v583
      %v619 = vunpack.c.l.b16 %v584
      %v620 = vunpack.c.h.b16 %v584
      %v621 = vunpack.c.l.b16 %v585
      %v622 = vunpack.c.h.b16 %v585
      %v623 = vunpack.c.l.b16 %v586
      %v624 = vunpack.c.h.b16 %v586
      %v625 = vunpack.c.l.b16 %v587
      %v626 = vunpack.c.h.b16 %v587
      %v627 = vunpack.c.l.b16 %v588
      %v628 = vunpack.c.h.b16 %v588
      %v629 = vunpack.c.l.b16 %v589
      %v630 = vunpack.c.h.b16 %v589
      %v631 = vunpack.c.l.b16 %v590
      %v632 = vunpack.c.h.b16 %v590
      %v633 = vunpack.c.l.b16 %v591
      %v634 = vunpack.c.h.b16 %v591
      %v635 = vunpack.c.l.b16 %v592
      %v636 = vunpack.c.h.b16 %v592
      %v637 = vunpack.c.l.b16 %v593
      %v638 = vunpack.c.h.b16 %v593
      %v639 = vunpack.c.l.b16 %v594
      %v640 = vunpack.c.h.b16 %v594
      %v641 = vunpack.c.l.b16 %v595
      %v642 = vunpack.c.h.b16 %v595
      %v643 = vunpack.c.l.b16 %v596
      %v644 = vunpack.c.h.b16 %v596
      %v645 = vpack.c.b16 %v613, %v613
      %v646 = vpack.c.b16 %v614, %v614
      %v647 = vpack.c.b16 %v615, %v615
      %v648 = vpack.c.b16 %v616, %v616
      %v649 = vpack.c.b16 %v617, %v617
      %v650 = vpack.c.b16 %v618, %v618
      %v651 = vpack.c.b16 %v619, %v619
      %v652 = vpack.c.b16 %v620, %v620
      %v653 = vpack.c.b16 %v621, %v621
      %v654 = vpack.c.b16 %v622, %v622
      %v655 = vpack.c.b16 %v623, %v623
      %v656 = vpack.c.b16 %v624, %v624
      %v657 = vpack.c.b16 %v625, %v625
      %v658 = vpack.c.b16 %v626, %v626
      %v659 = vpack.c.b16 %v627, %v627
      %v660 = vpack.c.b16 %v628, %v628
      %v661 = vpack.c.b16 %v629, %v629
      %v662 = vpack.c.b16 %v630, %v630
      %v663 = vpack.c.b16 %v631, %v631
      %v664 = vpack.c.b16 %v632, %v632
      %v665 = vpack.c.b16 %v633, %v633
      %v666 = vpack.c.b16 %v634, %v634
      %v667 = vpack.c.b16 %v635, %v635
      %v668 = vpack.c.b16 %v636, %v636
      %v669 = vpack.c.b16 %v637, %v637
      %v670 = vpack.c.b16 %v638, %v638
      %v671 = vpack.c.b16 %v639, %v639
      %v672 = vpack.c.b16 %v640, %v640
      %v673 = vpack.c.b16 %v641, %v641
      %v674 = vpack.c.b16 %v642, %v642
      %v675 = vpack.c.b16 %v643, %v643
      %v676 = vpack.c.b16 %v644, %v644
      %709 = vst [vmem:[#allocation2] sm:$0xf] %v645
      %710 = vst [vmem:[#allocation2 + $0x4] sm:$0xf] %v646
      %711 = vst [vmem:[#allocation2 + $0x8] sm:$0xf] %v647
      %712 = vst [vmem:[#allocation2 + $0xc] sm:$0xf] %v648
      %713 = vst [vmem:[#allocation2 + $0x10] sm:$0xf] %v649
      %714 = vst [vmem:[#allocation2 + $0x14] sm:$0xf] %v650
      %715 = vst [vmem:[#allocation2 + $0x18] sm:$0xf] %v651
      %716 = vst [vmem:[#allocation2 + $0x1c] sm:$0xf] %v652
      %717 = vst [vmem:[#allocation2 + $0x20] sm:$0xf] %v653
      %718 = vst [vmem:[#allocation2 + $0x24] sm:$0xf] %v654
      %719 = vst [vmem:[#allocation2 + $0x28] sm:$0xf] %v655
      %720 = vst [vmem:[#allocation2 + $0x2c] sm:$0xf] %v656
      %721 = vst [vmem:[#allocation2 + $0x30] sm:$0xf] %v657
      %722 = vst [vmem:[#allocation2 + $0x34] sm:$0xf] %v658
      %723 = vst [vmem:[#allocation2 + $0x38] sm:$0xf] %v659
      %724 = vst [vmem:[#allocation2 + $0x3c] sm:$0xf] %v660
      %725 = vst [vmem:[#allocation2 + $0x40] sm:$0xf] %v661
      %726 = vst [vmem:[#allocation2 + $0x44] sm:$0xf] %v662
      %727 = vst [vmem:[#allocation2 + $0x48] sm:$0xf] %v663
      %728 = vst [vmem:[#allocation2 + $0x4c] sm:$0xf] %v664
      %729 = vst [vmem:[#allocation2 + $0x50] sm:$0xf] %v665
      %730 = vst [vmem:[#allocation2 + $0x54] sm:$0xf] %v666
      %731 = vst [vmem:[#allocation2 + $0x58] sm:$0xf] %v667
      %732 = vst [vmem:[#allocation2 + $0x5c] sm:$0xf] %v668
      %733 = vst [vmem:[#allocation2 + $0x60] sm:$0xf] %v669
      %734 = vst [vmem:[#allocation2 + $0x64] sm:$0xf] %v670
      %735 = vst [vmem:[#allocation2 + $0x68] sm:$0xf] %v671
      %736 = vst [vmem:[#allocation2 + $0x6c] sm:$0xf] %v672
      %737 = vst [vmem:[#allocation2 + $0x70] sm:$0xf] %v673
      %738 = vst [vmem:[#allocation2 + $0x74] sm:$0xf] %v674
      %739 = vst [vmem:[#allocation2 + $0x78] sm:$0xf] %v675
      %740 = vst [vmem:[#allocation2 + $0x7c] sm:$0xf] %v676
      %s741 = scalar_lea.vmem %s193, 24
      %v742 = vld [vmem:[%s741] sm:$0xf]
      %v743 = vld [vmem:[%s741 + $0x4] sm:$0xf]
      %v744 = vld [vmem:[%s741 + $0x8] sm:$0xf]
      %v745 = vld [vmem:[%s741 + $0xc] sm:$0xf]
      %v746 = vld [vmem:[%s741 + $0x10] sm:$0xf]
      %v747 = vld [vmem:[%s741 + $0x14] sm:$0xf]
      %v754 = vunpack.c.l.b16 %v742
      %v755 = vunpack.c.l.b16 %v743
      %v756 = vunpack.c.l.b16 %v744
      %v757 = vunpack.c.l.b16 %v745
      %v758 = vunpack.c.l.b16 %v746
      %v759 = vunpack.c.l.b16 %v747
      %v760 = vpack.c.b16 %v755, %v754
      %v761 = vpack.c.b16 %v757, %v756
      %v762 = vpack.c.b16 %v759, %v758
      %766 = vmatprep.subr.bf16.mxu0 0
      %767 = vmatpush1.bf16.msra.mxu0 0
      %768 = vmatprep.subr.bf16.mxu0 0
      %769 = vmatpush1.bf16.msra.mxu0 0
      %770 = vmatprep.subr.bf16.mxu0 0
      %771 = vmatpush1.bf16.msra.mxu0 0
      %772 = vmatprep.subr.bf16.mxu0 0
      %773 = vmatpush1.bf16.msra.mxu0 0
      %774 = vmatprep.subr.bf16.mxu0 0
      %775 = vmatpush1.bf16.msra.mxu0 0
      %776 = vmatprep.subr.bf16.mxu0 0
      %777 = vmatpush1.bf16.msra.mxu0 %v762
      %778 = vmatprep.subr.bf16.mxu0 0
      %779 = vmatpush1.bf16.msra.mxu0 %v761
      %780 = vmatprep.subr.bf16.mxu0 0
      %781 = vmatpush1.bf16.msra.mxu0 %v760
      %782 = vmatprep.subr.bf16.mxu0 0
      %783 = vmatpush2.bf16.msra.mxu0 0
      %784 = vmatprep.subr.bf16.mxu0 0
      %785 = vmatpush2.bf16.msra.mxu0 0
      %786 = vmatprep.subr.bf16.mxu0 0
      %787 = vmatpush2.bf16.msra.mxu0 0
      %788 = vmatprep.subr.bf16.mxu0 0
      %789 = vmatpush2.bf16.msra.mxu0 0
      %790 = vmatprep.subr.bf16.mxu0 0
      %791 = vmatpush2.bf16.msra.mxu0 0
      %792 = vmatprep.subr.bf16.mxu0 0
      %793 = vmatpush2.bf16.msra.mxu0 0
      %794 = vmatprep.subr.bf16.mxu0 0
      %795 = vmatpush2.bf16.msra.mxu0 0
      %796 = vmatprep.subr.bf16.mxu0 0
      %797 = vmatpush2.bf16.msra.mxu0 0
      %798 = vmatprep.mubr.bf16.mxu0 0
      %799 = vmatmul.mubr.bf16.gmra.mxu0 %v341
      %v800 = vpop.f32.mrf.mxu0
      %v801 = vadd.f32 0.0, %v800
      %v802 = vpop.f32.mrf.mxu0
      %v803 = vpop.f32.mrf.mxu0
      %v804 = vadd.f32 0.0, %v803
      %v805 = vpop.f32.mrf.mxu0
      %806 = vmatprep.mubr.bf16.mxu0 0
      %807 = vmatmul.mubr.bf16.gmra.mxu0 %v344
      %v808 = vpop.f32.mrf.mxu0
      %v809 = vadd.f32 0.0, %v808
      %v810 = vpop.f32.mrf.mxu0
      %v811 = vpop.f32.mrf.mxu0
      %v812 = vadd.f32 0.0, %v811
      %v813 = vpop.f32.mrf.mxu0
      %814 = vmatprep.mubr.bf16.mxu0 0
      %815 = vmatmul.mubr.bf16.gmra.mxu0 %v347
      %v816 = vpop.f32.mrf.mxu0
      %v817 = vadd.f32 0.0, %v816
      %v818 = vpop.f32.mrf.mxu0
      %v819 = vpop.f32.mrf.mxu0
      %v820 = vadd.f32 0.0, %v819
      %v821 = vpop.f32.mrf.mxu0
      %822 = vmatprep.mubr.bf16.mxu0 0
      %823 = vmatmul.mubr.bf16.gmra.mxu0 %v350
      %v824 = vpop.f32.mrf.mxu0
      %v825 = vadd.f32 0.0, %v824
      %v826 = vpop.f32.mrf.mxu0
      %v827 = vpop.f32.mrf.mxu0
      %v828 = vadd.f32 0.0, %v827
      %v829 = vpop.f32.mrf.mxu0
      %830 = vmatprep.mubr.bf16.mxu0 0
      %831 = vmatmul.mubr.bf16.gmra.mxu0 %v353
      %v832 = vpop.f32.mrf.mxu0
      %v833 = vadd.f32 0.0, %v832
      %v834 = vpop.f32.mrf.mxu0
      %v835 = vpop.f32.mrf.mxu0
      %v836 = vadd.f32 0.0, %v835
      %v837 = vpop.f32.mrf.mxu0
      %838 = vmatprep.mubr.bf16.mxu0 0
      %839 = vmatmul.mubr.bf16.gmra.mxu0 %v356
      %v840 = vpop.f32.mrf.mxu0
      %v841 = vadd.f32 0.0, %v840
      %v842 = vpop.f32.mrf.mxu0
      %v843 = vpop.f32.mrf.mxu0
      %v844 = vadd.f32 0.0, %v843
      %v845 = vpop.f32.mrf.mxu0
      %846 = vmatprep.mubr.bf16.mxu0 0
      %847 = vmatmul.mubr.bf16.gmra.mxu0 %v359
      %v848 = vpop.f32.mrf.mxu0
      %v849 = vadd.f32 0.0, %v848
      %v850 = vpop.f32.mrf.mxu0
      %v851 = vpop.f32.mrf.mxu0
      %v852 = vadd.f32 0.0, %v851
      %v853 = vpop.f32.mrf.mxu0
      %854 = vmatprep.mubr.bf16.mxu0 0
      %855 = vmatmul.mubr.bf16.gmra.mxu0 %v362
      %v856 = vpop.f32.mrf.mxu0
      %v857 = vadd.f32 0.0, %v856
      %v858 = vpop.f32.mrf.mxu0
      %v859 = vpop.f32.mrf.mxu0
      %v860 = vadd.f32 0.0, %v859
      %v861 = vpop.f32.mrf.mxu0
      %862 = vmatprep.mubr.bf16.mxu0 0
      %863 = vmatmul.mubr.bf16.gmra.mxu0 %v365
      %v864 = vpop.f32.mrf.mxu0
      %v865 = vadd.f32 0.0, %v864
      %v866 = vpop.f32.mrf.mxu0
      %v867 = vpop.f32.mrf.mxu0
      %v868 = vadd.f32 0.0, %v867
      %v869 = vpop.f32.mrf.mxu0
      %870 = vmatprep.mubr.bf16.mxu0 0
      %871 = vmatmul.mubr.bf16.gmra.mxu0 %v368
      %v872 = vpop.f32.mrf.mxu0
      %v873 = vadd.f32 0.0, %v872
      %v874 = vpop.f32.mrf.mxu0
      %v875 = vpop.f32.mrf.mxu0
      %v876 = vadd.f32 0.0, %v875
      %v877 = vpop.f32.mrf.mxu0
      %878 = vmatprep.mubr.bf16.mxu0 0
      %879 = vmatmul.mubr.bf16.gmra.mxu0 %v371
      %v880 = vpop.f32.mrf.mxu0
      %v881 = vadd.f32 0.0, %v880
      %v882 = vpop.f32.mrf.mxu0
      %v883 = vpop.f32.mrf.mxu0
      %v884 = vadd.f32 0.0, %v883
      %v885 = vpop.f32.mrf.mxu0
      %886 = vmatprep.mubr.bf16.mxu0 0
      %887 = vmatmul.mubr.bf16.gmra.mxu0 %v374
      %v888 = vpop.f32.mrf.mxu0
      %v889 = vadd.f32 0.0, %v888
      %v890 = vpop.f32.mrf.mxu0
      %v891 = vpop.f32.mrf.mxu0
      %v892 = vadd.f32 0.0, %v891
      %v893 = vpop.f32.mrf.mxu0
      %894 = vmatprep.mubr.bf16.mxu0 0
      %895 = vmatmul.mubr.bf16.gmra.mxu0 %v377
      %v896 = vpop.f32.mrf.mxu0
      %v897 = vadd.f32 0.0, %v896
      %v898 = vpop.f32.mrf.mxu0
      %v899 = vpop.f32.mrf.mxu0
      %v900 = vadd.f32 0.0, %v899
      %v901 = vpop.f32.mrf.mxu0
      %902 = vmatprep.mubr.bf16.mxu0 0
      %903 = vmatmul.mubr.bf16.gmra.mxu0 %v380
      %v904 = vpop.f32.mrf.mxu0
      %v905 = vadd.f32 0.0, %v904
      %v906 = vpop.f32.mrf.mxu0
      %v907 = vpop.f32.mrf.mxu0
      %v908 = vadd.f32 0.0, %v907
      %v909 = vpop.f32.mrf.mxu0
      %910 = vmatprep.mubr.bf16.mxu0 0
      %911 = vmatmul.mubr.bf16.gmra.mxu0 %v383
      %v912 = vpop.f32.mrf.mxu0
      %v913 = vadd.f32 0.0, %v912
      %v914 = vpop.f32.mrf.mxu0
      %v915 = vpop.f32.mrf.mxu0
      %v916 = vadd.f32 0.0, %v915
      %v917 = vpop.f32.mrf.mxu0
      %918 = vmatprep.mubr.bf16.mxu0 0
      %919 = vmatmul.mubr.bf16.gmra.mxu0 %v386
      %v920 = vpop.f32.mrf.mxu0
      %v921 = vadd.f32 0.0, %v920
      %v922 = vpop.f32.mrf.mxu0
      %v923 = vpop.f32.mrf.mxu0
      %v924 = vadd.f32 0.0, %v923
      %v925 = vpop.f32.mrf.mxu0
      %926 = vdwg.mxu0
      %v927 = vmax.f32 %v801, 0.0
      %v928 = vmax.f32 %v804, 0.0
      %v929 = vmax.f32 %v809, 0.0
      %v930 = vmax.f32 %v812, 0.0
      %v931 = vmax.f32 %v817, 0.0
      %v932 = vmax.f32 %v820, 0.0
      %v933 = vmax.f32 %v825, 0.0
      %v934 = vmax.f32 %v828, 0.0
      %v935 = vmax.f32 %v833, 0.0
      %v936 = vmax.f32 %v836, 0.0
      %v937 = vmax.f32 %v841, 0.0
      %v938 = vmax.f32 %v844, 0.0
      %v939 = vmax.f32 %v849, 0.0
      %v940 = vmax.f32 %v852, 0.0
      %v941 = vmax.f32 %v857, 0.0
      %v942 = vmax.f32 %v860, 0.0
      %v943 = vmax.f32 %v865, 0.0
      %v944 = vmax.f32 %v868, 0.0
      %v945 = vmax.f32 %v873, 0.0
      %v946 = vmax.f32 %v876, 0.0
      %v947 = vmax.f32 %v881, 0.0
      %v948 = vmax.f32 %v884, 0.0
      %v949 = vmax.f32 %v889, 0.0
      %v950 = vmax.f32 %v892, 0.0
      %v951 = vmax.f32 %v897, 0.0
      %v952 = vmax.f32 %v900, 0.0
      %v953 = vmax.f32 %v905, 0.0
      %v954 = vmax.f32 %v908, 0.0
      %v955 = vmax.f32 %v913, 0.0
      %v956 = vmax.f32 %v916, 0.0
      %v957 = vmax.f32 %v921, 0.0
      %v958 = vmax.f32 %v924, 0.0
      %v959 = vpack.c.bf16 %v928, %v927
      %v960 = vpack.c.bf16 %v930, %v929
      %v961 = vpack.c.bf16 %v932, %v931
      %v962 = vpack.c.bf16 %v934, %v933
      %v963 = vpack.c.bf16 %v936, %v935
      %v964 = vpack.c.bf16 %v938, %v937
      %v965 = vpack.c.bf16 %v940, %v939
      %v966 = vpack.c.bf16 %v942, %v941
      %v967 = vpack.c.bf16 %v944, %v943
      %v968 = vpack.c.bf16 %v946, %v945
      %v969 = vpack.c.bf16 %v948, %v947
      %v970 = vpack.c.bf16 %v950, %v949
      %v971 = vpack.c.bf16 %v952, %v951
      %v972 = vpack.c.bf16 %v954, %v953
      %v973 = vpack.c.bf16 %v956, %v955
      %v974 = vpack.c.bf16 %v958, %v957
      %v991 = vunpack.c.l.b16 %v959
      %v992 = vunpack.c.h.b16 %v959
      %v993 = vunpack.c.l.b16 %v960
      %v994 = vunpack.c.h.b16 %v960
      %v995 = vunpack.c.l.b16 %v961
      %v996 = vunpack.c.h.b16 %v961
      %v997 = vunpack.c.l.b16 %v962
      %v998 = vunpack.c.h.b16 %v962
      %v999 = vunpack.c.l.b16 %v963
      %v1000 = vunpack.c.h.b16 %v963
      %v1001 = vunpack.c.l.b16 %v964
      %v1002 = vunpack.c.h.b16 %v964
      %v1003 = vunpack.c.l.b16 %v965
      %v1004 = vunpack.c.h.b16 %v965
      %v1005 = vunpack.c.l.b16 %v966
      %v1006 = vunpack.c.h.b16 %v966
      %v1007 = vunpack.c.l.b16 %v967
      %v1008 = vunpack.c.h.b16 %v967
      %v1009 = vunpack.c.l.b16 %v968
      %v1010 = vunpack.c.h.b16 %v968
      %v1011 = vunpack.c.l.b16 %v969
      %v1012 = vunpack.c.h.b16 %v969
      %v1013 = vunpack.c.l.b16 %v970
      %v1014 = vunpack.c.h.b16 %v970
      %v1015 = vunpack.c.l.b16 %v971
      %v1016 = vunpack.c.h.b16 %v971
      %v1017 = vunpack.c.l.b16 %v972
      %v1018 = vunpack.c.h.b16 %v972
      %v1019 = vunpack.c.l.b16 %v973
      %v1020 = vunpack.c.h.b16 %v973
      %v1021 = vunpack.c.l.b16 %v974
      %v1022 = vunpack.c.h.b16 %v974
      %v1023 = vpack.c.b16 %v991, %v991
      %v1024 = vpack.c.b16 %v992, %v992
      %v1025 = vpack.c.b16 %v993, %v993
      %v1026 = vpack.c.b16 %v994, %v994
      %v1027 = vpack.c.b16 %v995, %v995
      %v1028 = vpack.c.b16 %v996, %v996
      %v1029 = vpack.c.b16 %v997, %v997
      %v1030 = vpack.c.b16 %v998, %v998
      %v1031 = vpack.c.b16 %v999, %v999
      %v1032 = vpack.c.b16 %v1000, %v1000
      %v1033 = vpack.c.b16 %v1001, %v1001
      %v1034 = vpack.c.b16 %v1002, %v1002
      %v1035 = vpack.c.b16 %v1003, %v1003
      %v1036 = vpack.c.b16 %v1004, %v1004
      %v1037 = vpack.c.b16 %v1005, %v1005
      %v1038 = vpack.c.b16 %v1006, %v1006
      %v1039 = vpack.c.b16 %v1007, %v1007
      %v1040 = vpack.c.b16 %v1008, %v1008
      %v1041 = vpack.c.b16 %v1009, %v1009
      %v1042 = vpack.c.b16 %v1010, %v1010
      %v1043 = vpack.c.b16 %v1011, %v1011
      %v1044 = vpack.c.b16 %v1012, %v1012
      %v1045 = vpack.c.b16 %v1013, %v1013
      %v1046 = vpack.c.b16 %v1014, %v1014
      %v1047 = vpack.c.b16 %v1015, %v1015
      %v1048 = vpack.c.b16 %v1016, %v1016
      %v1049 = vpack.c.b16 %v1017, %v1017
      %v1050 = vpack.c.b16 %v1018, %v1018
      %v1051 = vpack.c.b16 %v1019, %v1019
      %v1052 = vpack.c.b16 %v1020, %v1020
      %v1053 = vpack.c.b16 %v1021, %v1021
      %v1054 = vpack.c.b16 %v1022, %v1022
      %1087 = vst [vmem:[#allocation2 + $0x80] sm:$0xf] %v1023
      %1088 = vst [vmem:[#allocation2 + $0x84] sm:$0xf] %v1024
      %1089 = vst [vmem:[#allocation2 + $0x88] sm:$0xf] %v1025
      %1090 = vst [vmem:[#allocation2 + $0x8c] sm:$0xf] %v1026
      %1091 = vst [vmem:[#allocation2 + $0x90] sm:$0xf] %v1027
      %1092 = vst [vmem:[#allocation2 + $0x94] sm:$0xf] %v1028
      %1093 = vst [vmem:[#allocation2 + $0x98] sm:$0xf] %v1029
      %1094 = vst [vmem:[#allocation2 + $0x9c] sm:$0xf] %v1030
      %1095 = vst [vmem:[#allocation2 + $0xa0] sm:$0xf] %v1031
      %1096 = vst [vmem:[#allocation2 + $0xa4] sm:$0xf] %v1032
      %1097 = vst [vmem:[#allocation2 + $0xa8] sm:$0xf] %v1033
      %1098 = vst [vmem:[#allocation2 + $0xac] sm:$0xf] %v1034
      %1099 = vst [vmem:[#allocation2 + $0xb0] sm:$0xf] %v1035
      %1100 = vst [vmem:[#allocation2 + $0xb4] sm:$0xf] %v1036
      %1101 = vst [vmem:[#allocation2 + $0xb8] sm:$0xf] %v1037
      %1102 = vst [vmem:[#allocation2 + $0xbc] sm:$0xf] %v1038
      %1103 = vst [vmem:[#allocation2 + $0xc0] sm:$0xf] %v1039
      %1104 = vst [vmem:[#allocation2 + $0xc4] sm:$0xf] %v1040
      %1105 = vst [vmem:[#allocation2 + $0xc8] sm:$0xf] %v1041
      %1106 = vst [vmem:[#allocation2 + $0xcc] sm:$0xf] %v1042
      %1107 = vst [vmem:[#allocation2 + $0xd0] sm:$0xf] %v1043
      %1108 = vst [vmem:[#allocation2 + $0xd4] sm:$0xf] %v1044
      %1109 = vst [vmem:[#allocation2 + $0xd8] sm:$0xf] %v1045
      %1110 = vst [vmem:[#allocation2 + $0xdc] sm:$0xf] %v1046
      %1111 = vst [vmem:[#allocation2 + $0xe0] sm:$0xf] %v1047
      %1112 = vst [vmem:[#allocation2 + $0xe4] sm:$0xf] %v1048
      %1113 = vst [vmem:[#allocation2 + $0xe8] sm:$0xf] %v1049
      %1114 = vst [vmem:[#allocation2 + $0xec] sm:$0xf] %v1050
      %1115 = vst [vmem:[#allocation2 + $0xf0] sm:$0xf] %v1051
      %1116 = vst [vmem:[#allocation2 + $0xf4] sm:$0xf] %v1052
      %1117 = vst [vmem:[#allocation2 + $0xf8] sm:$0xf] %v1053
      %1118 = vst [vmem:[#allocation2 + $0xfc] sm:$0xf] %v1054
      %s1119 = scalar_lea.vmem %s193, 48
      %v1120 = vld [vmem:[%s1119] sm:$0xf]
      %v1121 = vld [vmem:[%s1119 + $0x4] sm:$0xf]
      %v1122 = vld [vmem:[%s1119 + $0x8] sm:$0xf]
      %v1123 = vld [vmem:[%s1119 + $0xc] sm:$0xf]
      %v1124 = vld [vmem:[%s1119 + $0x10] sm:$0xf]
      %v1125 = vld [vmem:[%s1119 + $0x14] sm:$0xf]
      %v1132 = vunpack.c.l.b16 %v1120
      %v1133 = vunpack.c.l.b16 %v1121
      %v1134 = vunpack.c.l.b16 %v1122
      %v1135 = vunpack.c.l.b16 %v1123
      %v1136 = vunpack.c.l.b16 %v1124
      %v1137 = vunpack.c.l.b16 %v1125
      %v1138 = vpack.c.b16 %v1133, %v1132
      %v1139 = vpack.c.b16 %v1135, %v1134
      %v1140 = vpack.c.b16 %v1137, %v1136
      %1144 = vmatprep.subr.bf16.mxu0 0
      %1145 = vmatpush1.bf16.msra.mxu0 0
      %1146 = vmatprep.subr.bf16.mxu0 0
      %1147 = vmatpush1.bf16.msra.mxu0 0
      %1148 = vmatprep.subr.bf16.mxu0 0
      %1149 = vmatpush1.bf16.msra.mxu0 0
      %1150 = vmatprep.subr.bf16.mxu0 0
      %1151 = vmatpush1.bf16.msra.mxu0 0
      %1152 = vmatprep.subr.bf16.mxu0 0
      %1153 = vmatpush1.bf16.msra.mxu0 0
      %1154 = vmatprep.subr.bf16.mxu0 0
      %1155 = vmatpush1.bf16.msra.mxu0 %v1140
      %1156 = vmatprep.subr.bf16.mxu0 0
      %1157 = vmatpush1.bf16.msra.mxu0 %v1139
      %1158 = vmatprep.subr.bf16.mxu0 0
      %1159 = vmatpush1.bf16.msra.mxu0 %v1138
      %1160 = vmatprep.subr.bf16.mxu0 0
      %1161 = vmatpush2.bf16.msra.mxu0 0
      %1162 = vmatprep.subr.bf16.mxu0 0
      %1163 = vmatpush2.bf16.msra.mxu0 0
      %1164 = vmatprep.subr.bf16.mxu0 0
      %1165 = vmatpush2.bf16.msra.mxu0 0
      %1166 = vmatprep.subr.bf16.mxu0 0
      %1167 = vmatpush2.bf16.msra.mxu0 0
      %1168 = vmatprep.subr.bf16.mxu0 0
      %1169 = vmatpush2.bf16.msra.mxu0 0
      %1170 = vmatprep.subr.bf16.mxu0 0
      %1171 = vmatpush2.bf16.msra.mxu0 0
      %1172 = vmatprep.subr.bf16.mxu0 0
      %1173 = vmatpush2.bf16.msra.mxu0 0
      %1174 = vmatprep.subr.bf16.mxu0 0
      %1175 = vmatpush2.bf16.msra.mxu0 0
      %1176 = vmatprep.mubr.bf16.mxu0 0
      %1177 = vmatmul.mubr.bf16.gmra.mxu0 %v341
      %v1178 = vpop.f32.mrf.mxu0
      %v1179 = vadd.f32 0.0, %v1178
      %v1180 = vpop.f32.mrf.mxu0
      %v1181 = vpop.f32.mrf.mxu0
      %v1182 = vadd.f32 0.0, %v1181
      %v1183 = vpop.f32.mrf.mxu0
      %1184 = vmatprep.mubr.bf16.mxu0 0
      %1185 = vmatmul.mubr.bf16.gmra.mxu0 %v344
      %v1186 = vpop.f32.mrf.mxu0
      %v1187 = vadd.f32 0.0, %v1186
      %v1188 = vpop.f32.mrf.mxu0
      %v1189 = vpop.f32.mrf.mxu0
      %v1190 = vadd.f32 0.0, %v1189
      %v1191 = vpop.f32.mrf.mxu0
      %1192 = vmatprep.mubr.bf16.mxu0 0
      %1193 = vmatmul.mubr.bf16.gmra.mxu0 %v347
      %v1194 = vpop.f32.mrf.mxu0
      %v1195 = vadd.f32 0.0, %v1194
      %v1196 = vpop.f32.mrf.mxu0
      %v1197 = vpop.f32.mrf.mxu0
      %v1198 = vadd.f32 0.0, %v1197
      %v1199 = vpop.f32.mrf.mxu0
      %1200 = vmatprep.mubr.bf16.mxu0 0
      %1201 = vmatmul.mubr.bf16.gmra.mxu0 %v350
      %v1202 = vpop.f32.mrf.mxu0
      %v1203 = vadd.f32 0.0, %v1202
      %v1204 = vpop.f32.mrf.mxu0
      %v1205 = vpop.f32.mrf.mxu0
      %v1206 = vadd.f32 0.0, %v1205
      %v1207 = vpop.f32.mrf.mxu0
      %1208 = vmatprep.mubr.bf16.mxu0 0
      %1209 = vmatmul.mubr.bf16.gmra.mxu0 %v353
      %v1210 = vpop.f32.mrf.mxu0
      %v1211 = vadd.f32 0.0, %v1210
      %v1212 = vpop.f32.mrf.mxu0
      %v1213 = vpop.f32.mrf.mxu0
      %v1214 = vadd.f32 0.0, %v1213
      %v1215 = vpop.f32.mrf.mxu0
      %1216 = vmatprep.mubr.bf16.mxu0 0
      %1217 = vmatmul.mubr.bf16.gmra.mxu0 %v356
      %v1218 = vpop.f32.mrf.mxu0
      %v1219 = vadd.f32 0.0, %v1218
      %v1220 = vpop.f32.mrf.mxu0
      %v1221 = vpop.f32.mrf.mxu0
      %v1222 = vadd.f32 0.0, %v1221
      %v1223 = vpop.f32.mrf.mxu0
      %1224 = vmatprep.mubr.bf16.mxu0 0
      %1225 = vmatmul.mubr.bf16.gmra.mxu0 %v359
      %v1226 = vpop.f32.mrf.mxu0
      %v1227 = vadd.f32 0.0, %v1226
      %v1228 = vpop.f32.mrf.mxu0
      %v1229 = vpop.f32.mrf.mxu0
      %v1230 = vadd.f32 0.0, %v1229
      %v1231 = vpop.f32.mrf.mxu0
      %1232 = vmatprep.mubr.bf16.mxu0 0
      %1233 = vmatmul.mubr.bf16.gmra.mxu0 %v362
      %v1234 = vpop.f32.mrf.mxu0
      %v1235 = vadd.f32 0.0, %v1234
      %v1236 = vpop.f32.mrf.mxu0
      %v1237 = vpop.f32.mrf.mxu0
      %v1238 = vadd.f32 0.0, %v1237
      %v1239 = vpop.f32.mrf.mxu0
      %1240 = vmatprep.mubr.bf16.mxu0 0
      %1241 = vmatmul.mubr.bf16.gmra.mxu0 %v365
      %v1242 = vpop.f32.mrf.mxu0
      %v1243 = vadd.f32 0.0, %v1242
      %v1244 = vpop.f32.mrf.mxu0
      %v1245 = vpop.f32.mrf.mxu0
      %v1246 = vadd.f32 0.0, %v1245
      %v1247 = vpop.f32.mrf.mxu0
      %1248 = vmatprep.mubr.bf16.mxu0 0
      %1249 = vmatmul.mubr.bf16.gmra.mxu0 %v368
      %v1250 = vpop.f32.mrf.mxu0
      %v1251 = vadd.f32 0.0, %v1250
      %v1252 = vpop.f32.mrf.mxu0
      %v1253 = vpop.f32.mrf.mxu0
      %v1254 = vadd.f32 0.0, %v1253
      %v1255 = vpop.f32.mrf.mxu0
      %1256 = vmatprep.mubr.bf16.mxu0 0
      %1257 = vmatmul.mubr.bf16.gmra.mxu0 %v371
      %v1258 = vpop.f32.mrf.mxu0
      %v1259 = vadd.f32 0.0, %v1258
      %v1260 = vpop.f32.mrf.mxu0
      %v1261 = vpop.f32.mrf.mxu0
      %v1262 = vadd.f32 0.0, %v1261
      %v1263 = vpop.f32.mrf.mxu0
      %1264 = vmatprep.mubr.bf16.mxu0 0
      %1265 = vmatmul.mubr.bf16.gmra.mxu0 %v374
      %v1266 = vpop.f32.mrf.mxu0
      %v1267 = vadd.f32 0.0, %v1266
      %v1268 = vpop.f32.mrf.mxu0
      %v1269 = vpop.f32.mrf.mxu0
      %v1270 = vadd.f32 0.0, %v1269
      %v1271 = vpop.f32.mrf.mxu0
      %1272 = vmatprep.mubr.bf16.mxu0 0
      %1273 = vmatmul.mubr.bf16.gmra.mxu0 %v377
      %v1274 = vpop.f32.mrf.mxu0
      %v1275 = vadd.f32 0.0, %v1274
      %v1276 = vpop.f32.mrf.mxu0
      %v1277 = vpop.f32.mrf.mxu0
      %v1278 = vadd.f32 0.0, %v1277
      %v1279 = vpop.f32.mrf.mxu0
      %1280 = vmatprep.mubr.bf16.mxu0 0
      %1281 = vmatmul.mubr.bf16.gmra.mxu0 %v380
      %v1282 = vpop.f32.mrf.mxu0
      %v1283 = vadd.f32 0.0, %v1282
      %v1284 = vpop.f32.mrf.mxu0
      %v1285 = vpop.f32.mrf.mxu0
      %v1286 = vadd.f32 0.0, %v1285
      %v1287 = vpop.f32.mrf.mxu0
      %1288 = vmatprep.mubr.bf16.mxu0 0
      %1289 = vmatmul.mubr.bf16.gmra.mxu0 %v383
      %v1290 = vpop.f32.mrf.mxu0
      %v1291 = vadd.f32 0.0, %v1290
      %v1292 = vpop.f32.mrf.mxu0
      %v1293 = vpop.f32.mrf.mxu0
      %v1294 = vadd.f32 0.0, %v1293
      %v1295 = vpop.f32.mrf.mxu0
      %1296 = vmatprep.mubr.bf16.mxu0 0
      %1297 = vmatmul.mubr.bf16.gmra.mxu0 %v386
      %v1298 = vpop.f32.mrf.mxu0
      %v1299 = vadd.f32 0.0, %v1298
      %v1300 = vpop.f32.mrf.mxu0
      %v1301 = vpop.f32.mrf.mxu0
      %v1302 = vadd.f32 0.0, %v1301
      %v1303 = vpop.f32.mrf.mxu0
      %1304 = vdwg.mxu0
      %v1305 = vmax.f32 %v1179, 0.0
      %v1306 = vmax.f32 %v1182, 0.0
      %v1307 = vmax.f32 %v1187, 0.0
      %v1308 = vmax.f32 %v1190, 0.0
      %v1309 = vmax.f32 %v1195, 0.0
      %v1310 = vmax.f32 %v1198, 0.0
      %v1311 = vmax.f32 %v1203, 0.0
      %v1312 = vmax.f32 %v1206, 0.0
      %v1313 = vmax.f32 %v1211, 0.0
      %v1314 = vmax.f32 %v1214, 0.0
      %v1315 = vmax.f32 %v1219, 0.0
      %v1316 = vmax.f32 %v1222, 0.0
      %v1317 = vmax.f32 %v1227, 0.0
      %v1318 = vmax.f32 %v1230, 0.0
      %v1319 = vmax.f32 %v1235, 0.0
      %v1320 = vmax.f32 %v1238, 0.0
      %v1321 = vmax.f32 %v1243, 0.0
      %v1322 = vmax.f32 %v1246, 0.0
      %v1323 = vmax.f32 %v1251, 0.0
      %v1324 = vmax.f32 %v1254, 0.0
      %v1325 = vmax.f32 %v1259, 0.0
      %v1326 = vmax.f32 %v1262, 0.0
      %v1327 = vmax.f32 %v1267, 0.0
      %v1328 = vmax.f32 %v1270, 0.0
      %v1329 = vmax.f32 %v1275, 0.0
      %v1330 = vmax.f32 %v1278, 0.0
      %v1331 = vmax.f32 %v1283, 0.0
      %v1332 = vmax.f32 %v1286, 0.0
      %v1333 = vmax.f32 %v1291, 0.0
      %v1334 = vmax.f32 %v1294, 0.0
      %v1335 = vmax.f32 %v1299, 0.0
      %v1336 = vmax.f32 %v1302, 0.0
      %v1337 = vpack.c.bf16 %v1306, %v1305
      %v1338 = vpack.c.bf16 %v1308, %v1307
      %v1339 = vpack.c.bf16 %v1310, %v1309
      %v1340 = vpack.c.bf16 %v1312, %v1311
      %v1341 = vpack.c.bf16 %v1314, %v1313
      %v1342 = vpack.c.bf16 %v1316, %v1315
      %v1343 = vpack.c.bf16 %v1318, %v1317
      %v1344 = vpack.c.bf16 %v1320, %v1319
      %v1345 = vpack.c.bf16 %v1322, %v1321
      %v1346 = vpack.c.bf16 %v1324, %v1323
      %v1347 = vpack.c.bf16 %v1326, %v1325
      %v1348 = vpack.c.bf16 %v1328, %v1327
      %v1349 = vpack.c.bf16 %v1330, %v1329
      %v1350 = vpack.c.bf16 %v1332, %v1331
      %v1351 = vpack.c.bf16 %v1334, %v1333
      %v1352 = vpack.c.bf16 %v1336, %v1335
      %v1369 = vunpack.c.l.b16 %v1337
      %v1370 = vunpack.c.h.b16 %v1337
      %v1371 = vunpack.c.l.b16 %v1338
      %v1372 = vunpack.c.h.b16 %v1338
      %v1373 = vunpack.c.l.b16 %v1339
      %v1374 = vunpack.c.h.b16 %v1339
      %v1375 = vunpack.c.l.b16 %v1340
      %v1376 = vunpack.c.h.b16 %v1340
      %v1377 = vunpack.c.l.b16 %v1341
      %v1378 = vunpack.c.h.b16 %v1341
      %v1379 = vunpack.c.l.b16 %v1342
      %v1380 = vunpack.c.h.b16 %v1342
      %v1381 = vunpack.c.l.b16 %v1343
      %v1382 = vunpack.c.h.b16 %v1343
      %v1383 = vunpack.c.l.b16 %v1344
      %v1384 = vunpack.c.h.b16 %v1344
      %v1385 = vunpack.c.l.b16 %v1345
      %v1386 = vunpack.c.h.b16 %v1345
      %v1387 = vunpack.c.l.b16 %v1346
      %v1388 = vunpack.c.h.b16 %v1346
      %v1389 = vunpack.c.l.b16 %v1347
      %v1390 = vunpack.c.h.b16 %v1347
      %v1391 = vunpack.c.l.b16 %v1348
      %v1392 = vunpack.c.h.b16 %v1348
      %v1393 = vunpack.c.l.b16 %v1349
      %v1394 = vunpack.c.h.b16 %v1349
      %v1395 = vunpack.c.l.b16 %v1350
      %v1396 = vunpack.c.h.b16 %v1350
      %v1397 = vunpack.c.l.b16 %v1351
      %v1398 = vunpack.c.h.b16 %v1351
      %v1399 = vunpack.c.l.b16 %v1352
      %v1400 = vunpack.c.h.b16 %v1352
      %v1401 = vpack.c.b16 %v1369, %v1369
      %v1402 = vpack.c.b16 %v1370, %v1370
      %v1403 = vpack.c.b16 %v1371, %v1371
      %v1404 = vpack.c.b16 %v1372, %v1372
      %v1405 = vpack.c.b16 %v1373, %v1373
      %v1406 = vpack.c.b16 %v1374, %v1374
      %v1407 = vpack.c.b16 %v1375, %v1375
      %v1408 = vpack.c.b16 %v1376, %v1376
      %v1409 = vpack.c.b16 %v1377, %v1377
      %v1410 = vpack.c.b16 %v1378, %v1378
      %v1411 = vpack.c.b16 %v1379, %v1379
      %v1412 = vpack.c.b16 %v1380, %v1380
      %v1413 = vpack.c.b16 %v1381, %v1381
      %v1414 = vpack.c.b16 %v1382, %v1382
      %v1415 = vpack.c.b16 %v1383, %v1383
      %v1416 = vpack.c.b16 %v1384, %v1384
      %v1417 = vpack.c.b16 %v1385, %v1385
      %v1418 = vpack.c.b16 %v1386, %v1386
      %v1419 = vpack.c.b16 %v1387, %v1387
      %v1420 = vpack.c.b16 %v1388, %v1388
      %v1421 = vpack.c.b16 %v1389, %v1389
      %v1422 = vpack.c.b16 %v1390, %v1390
      %v1423 = vpack.c.b16 %v1391, %v1391
      %v1424 = vpack.c.b16 %v1392, %v1392
      %v1425 = vpack.c.b16 %v1393, %v1393
      %v1426 = vpack.c.b16 %v1394, %v1394
      %v1427 = vpack.c.b16 %v1395, %v1395
      %v1428 = vpack.c.b16 %v1396, %v1396
      %v1429 = vpack.c.b16 %v1397, %v1397
      %v1430 = vpack.c.b16 %v1398, %v1398
      %v1431 = vpack.c.b16 %v1399, %v1399
      %v1432 = vpack.c.b16 %v1400, %v1400
      %1465 = vst [vmem:[#allocation2 + $0x100] sm:$0xf] %v1401
      %1466 = vst [vmem:[#allocation2 + $0x104] sm:$0xf] %v1402
      %1467 = vst [vmem:[#allocation2 + $0x108] sm:$0xf] %v1403
      %1468 = vst [vmem:[#allocation2 + $0x10c] sm:$0xf] %v1404
      %1469 = vst [vmem:[#allocation2 + $0x110] sm:$0xf] %v1405
      %1470 = vst [vmem:[#allocation2 + $0x114] sm:$0xf] %v1406
      %1471 = vst [vmem:[#allocation2 + $0x118] sm:$0xf] %v1407
      %1472 = vst [vmem:[#allocation2 + $0x11c] sm:$0xf] %v1408
      %1473 = vst [vmem:[#allocation2 + $0x120] sm:$0xf] %v1409
      %1474 = vst [vmem:[#allocation2 + $0x124] sm:$0xf] %v1410
      %1475 = vst [vmem:[#allocation2 + $0x128] sm:$0xf] %v1411
      %1476 = vst [vmem:[#allocation2 + $0x12c] sm:$0xf] %v1412
      %1477 = vst [vmem:[#allocation2 + $0x130] sm:$0xf] %v1413
      %1478 = vst [vmem:[#allocation2 + $0x134] sm:$0xf] %v1414
      %1479 = vst [vmem:[#allocation2 + $0x138] sm:$0xf] %v1415
      %1480 = vst [vmem:[#allocation2 + $0x13c] sm:$0xf] %v1416
      %1481 = vst [vmem:[#allocation2 + $0x140] sm:$0xf] %v1417
      %1482 = vst [vmem:[#allocation2 + $0x144] sm:$0xf] %v1418
      %1483 = vst [vmem:[#allocation2 + $0x148] sm:$0xf] %v1419
      %1484 = vst [vmem:[#allocation2 + $0x14c] sm:$0xf] %v1420
      %1485 = vst [vmem:[#allocation2 + $0x150] sm:$0xf] %v1421
      %1486 = vst [vmem:[#allocation2 + $0x154] sm:$0xf] %v1422
      %1487 = vst [vmem:[#allocation2 + $0x158] sm:$0xf] %v1423
      %1488 = vst [vmem:[#allocation2 + $0x15c] sm:$0xf] %v1424
      %1489 = vst [vmem:[#allocation2 + $0x160] sm:$0xf] %v1425
      %1490 = vst [vmem:[#allocation2 + $0x164] sm:$0xf] %v1426
      %1491 = vst [vmem:[#allocation2 + $0x168] sm:$0xf] %v1427
      %1492 = vst [vmem:[#allocation2 + $0x16c] sm:$0xf] %v1428
      %1493 = vst [vmem:[#allocation2 + $0x170] sm:$0xf] %v1429
      %1494 = vst [vmem:[#allocation2 + $0x174] sm:$0xf] %v1430
      %1495 = vst [vmem:[#allocation2 + $0x178] sm:$0xf] %v1431
      %1496 = vst [vmem:[#allocation2 + $0x17c] sm:$0xf] %v1432
      %s1497 = scalar_lea.vmem %s193, 72
      %v1498 = vld [vmem:[%s1497] sm:$0xf]
      %v1499 = vld [vmem:[%s1497 + $0x4] sm:$0xf]
      %v1500 = vld [vmem:[%s1497 + $0x8] sm:$0xf]
      %v1501 = vld [vmem:[%s1497 + $0xc] sm:$0xf]
      %v1502 = vld [vmem:[%s1497 + $0x10] sm:$0xf]
      %v1503 = vld [vmem:[%s1497 + $0x14] sm:$0xf]
      %v1510 = vunpack.c.l.b16 %v1498
      %v1511 = vunpack.c.l.b16 %v1499
      %v1512 = vunpack.c.l.b16 %v1500
      %v1513 = vunpack.c.l.b16 %v1501
      %v1514 = vunpack.c.l.b16 %v1502
      %v1515 = vunpack.c.l.b16 %v1503
      %v1516 = vpack.c.b16 %v1511, %v1510
      %v1517 = vpack.c.b16 %v1513, %v1512
      %v1518 = vpack.c.b16 %v1515, %v1514
      %1522 = vmatprep.subr.bf16.mxu0 0
      %1523 = vmatpush1.bf16.msra.mxu0 0
      %1524 = vmatprep.subr.bf16.mxu0 0
      %1525 = vmatpush1.bf16.msra.mxu0 0
      %1526 = vmatprep.subr.bf16.mxu0 0
      %1527 = vmatpush1.bf16.msra.mxu0 0
      %1528 = vmatprep.subr.bf16.mxu0 0
      %1529 = vmatpush1.bf16.msra.mxu0 0
      %1530 = vmatprep.subr.bf16.mxu0 0
      %1531 = vmatpush1.bf16.msra.mxu0 0
      %1532 = vmatprep.subr.bf16.mxu0 0
      %1533 = vmatpush1.bf16.msra.mxu0 %v1518
      %1534 = vmatprep.subr.bf16.mxu0 0
      %1535 = vmatpush1.bf16.msra.mxu0 %v1517
      %1536 = vmatprep.subr.bf16.mxu0 0
      %1537 = vmatpush1.bf16.msra.mxu0 %v1516
      %1538 = vmatprep.subr.bf16.mxu0 0
      %1539 = vmatpush2.bf16.msra.mxu0 0
      %1540 = vmatprep.subr.bf16.mxu0 0
      %1541 = vmatpush2.bf16.msra.mxu0 0
      %1542 = vmatprep.subr.bf16.mxu0 0
      %1543 = vmatpush2.bf16.msra.mxu0 0
      %1544 = vmatprep.subr.bf16.mxu0 0
      %1545 = vmatpush2.bf16.msra.mxu0 0
      %1546 = vmatprep.subr.bf16.mxu0 0
      %1547 = vmatpush2.bf16.msra.mxu0 0
      %1548 = vmatprep.subr.bf16.mxu0 0
      %1549 = vmatpush2.bf16.msra.mxu0 0
      %1550 = vmatprep.subr.bf16.mxu0 0
      %1551 = vmatpush2.bf16.msra.mxu0 0
      %1552 = vmatprep.subr.bf16.mxu0 0
      %1553 = vmatpush2.bf16.msra.mxu0 0
      %1554 = vmatprep.mubr.bf16.mxu0 0
      %1555 = vmatmul.mubr.bf16.gmra.mxu0 %v341
      %v1556 = vpop.f32.mrf.mxu0
      %v1557 = vadd.f32 0.0, %v1556
      %v1558 = vpop.f32.mrf.mxu0
      %v1559 = vpop.f32.mrf.mxu0
      %v1560 = vadd.f32 0.0, %v1559
      %v1561 = vpop.f32.mrf.mxu0
      %1562 = vmatprep.mubr.bf16.mxu0 0
      %1563 = vmatmul.mubr.bf16.gmra.mxu0 %v344
      %v1564 = vpop.f32.mrf.mxu0
      %v1565 = vadd.f32 0.0, %v1564
      %v1566 = vpop.f32.mrf.mxu0
      %v1567 = vpop.f32.mrf.mxu0
      %v1568 = vadd.f32 0.0, %v1567
      %v1569 = vpop.f32.mrf.mxu0
      %1570 = vmatprep.mubr.bf16.mxu0 0
      %1571 = vmatmul.mubr.bf16.gmra.mxu0 %v347
      %v1572 = vpop.f32.mrf.mxu0
      %v1573 = vadd.f32 0.0, %v1572
      %v1574 = vpop.f32.mrf.mxu0
      %v1575 = vpop.f32.mrf.mxu0
      %v1576 = vadd.f32 0.0, %v1575
      %v1577 = vpop.f32.mrf.mxu0
      %1578 = vmatprep.mubr.bf16.mxu0 0
      %1579 = vmatmul.mubr.bf16.gmra.mxu0 %v350
      %v1580 = vpop.f32.mrf.mxu0
      %v1581 = vadd.f32 0.0, %v1580
      %v1582 = vpop.f32.mrf.mxu0
      %v1583 = vpop.f32.mrf.mxu0
      %v1584 = vadd.f32 0.0, %v1583
      %v1585 = vpop.f32.mrf.mxu0
      %1586 = vmatprep.mubr.bf16.mxu0 0
      %1587 = vmatmul.mubr.bf16.gmra.mxu0 %v353
      %v1588 = vpop.f32.mrf.mxu0
      %v1589 = vadd.f32 0.0, %v1588
      %v1590 = vpop.f32.mrf.mxu0
      %v1591 = vpop.f32.mrf.mxu0
      %v1592 = vadd.f32 0.0, %v1591
      %v1593 = vpop.f32.mrf.mxu0
      %1594 = vmatprep.mubr.bf16.mxu0 0
      %1595 = vmatmul.mubr.bf16.gmra.mxu0 %v356
      %v1596 = vpop.f32.mrf.mxu0
      %v1597 = vadd.f32 0.0, %v1596
      %v1598 = vpop.f32.mrf.mxu0
      %v1599 = vpop.f32.mrf.mxu0
      %v1600 = vadd.f32 0.0, %v1599
      %v1601 = vpop.f32.mrf.mxu0
      %1602 = vmatprep.mubr.bf16.mxu0 0
      %1603 = vmatmul.mubr.bf16.gmra.mxu0 %v359
      %v1604 = vpop.f32.mrf.mxu0
      %v1605 = vadd.f32 0.0, %v1604
      %v1606 = vpop.f32.mrf.mxu0
      %v1607 = vpop.f32.mrf.mxu0
      %v1608 = vadd.f32 0.0, %v1607
      %v1609 = vpop.f32.mrf.mxu0
      %1610 = vmatprep.mubr.bf16.mxu0 0
      %1611 = vmatmul.mubr.bf16.gmra.mxu0 %v362
      %v1612 = vpop.f32.mrf.mxu0
      %v1613 = vadd.f32 0.0, %v1612
      %v1614 = vpop.f32.mrf.mxu0
      %v1615 = vpop.f32.mrf.mxu0
      %v1616 = vadd.f32 0.0, %v1615
      %v1617 = vpop.f32.mrf.mxu0
      %1618 = vmatprep.mubr.bf16.mxu0 0
      %1619 = vmatmul.mubr.bf16.gmra.mxu0 %v365
      %v1620 = vpop.f32.mrf.mxu0
      %v1621 = vadd.f32 0.0, %v1620
      %v1622 = vpop.f32.mrf.mxu0
      %v1623 = vpop.f32.mrf.mxu0
      %v1624 = vadd.f32 0.0, %v1623
      %v1625 = vpop.f32.mrf.mxu0
      %1626 = vmatprep.mubr.bf16.mxu0 0
      %1627 = vmatmul.mubr.bf16.gmra.mxu0 %v368
      %v1628 = vpop.f32.mrf.mxu0
      %v1629 = vadd.f32 0.0, %v1628
      %v1630 = vpop.f32.mrf.mxu0
      %v1631 = vpop.f32.mrf.mxu0
      %v1632 = vadd.f32 0.0, %v1631
      %v1633 = vpop.f32.mrf.mxu0
      %1634 = vmatprep.mubr.bf16.mxu0 0
      %1635 = vmatmul.mubr.bf16.gmra.mxu0 %v371
      %v1636 = vpop.f32.mrf.mxu0
      %v1637 = vadd.f32 0.0, %v1636
      %v1638 = vpop.f32.mrf.mxu0
      %v1639 = vpop.f32.mrf.mxu0
      %v1640 = vadd.f32 0.0, %v1639
      %v1641 = vpop.f32.mrf.mxu0
      %1642 = vmatprep.mubr.bf16.mxu0 0
      %1643 = vmatmul.mubr.bf16.gmra.mxu0 %v374
      %v1644 = vpop.f32.mrf.mxu0
      %v1645 = vadd.f32 0.0, %v1644
      %v1646 = vpop.f32.mrf.mxu0
      %v1647 = vpop.f32.mrf.mxu0
      %v1648 = vadd.f32 0.0, %v1647
      %v1649 = vpop.f32.mrf.mxu0
      %1650 = vmatprep.mubr.bf16.mxu0 0
      %1651 = vmatmul.mubr.bf16.gmra.mxu0 %v377
      %v1652 = vpop.f32.mrf.mxu0
      %v1653 = vadd.f32 0.0, %v1652
      %v1654 = vpop.f32.mrf.mxu0
      %v1655 = vpop.f32.mrf.mxu0
      %v1656 = vadd.f32 0.0, %v1655
      %v1657 = vpop.f32.mrf.mxu0
      %1658 = vmatprep.mubr.bf16.mxu0 0
      %1659 = vmatmul.mubr.bf16.gmra.mxu0 %v380
      %v1660 = vpop.f32.mrf.mxu0
      %v1661 = vadd.f32 0.0, %v1660
      %v1662 = vpop.f32.mrf.mxu0
      %v1663 = vpop.f32.mrf.mxu0
      %v1664 = vadd.f32 0.0, %v1663
      %v1665 = vpop.f32.mrf.mxu0
      %1666 = vmatprep.mubr.bf16.mxu0 0
      %1667 = vmatmul.mubr.bf16.gmra.mxu0 %v383
      %v1668 = vpop.f32.mrf.mxu0
      %v1669 = vadd.f32 0.0, %v1668
      %v1670 = vpop.f32.mrf.mxu0
      %v1671 = vpop.f32.mrf.mxu0
      %v1672 = vadd.f32 0.0, %v1671
      %v1673 = vpop.f32.mrf.mxu0
      %1674 = vmatprep.mubr.bf16.mxu0 0
      %1675 = vmatmul.mubr.bf16.gmra.mxu0 %v386
      %v1676 = vpop.f32.mrf.mxu0
      %v1677 = vadd.f32 0.0, %v1676
      %v1678 = vpop.f32.mrf.mxu0
      %v1679 = vpop.f32.mrf.mxu0
      %v1680 = vadd.f32 0.0, %v1679
      %v1681 = vpop.f32.mrf.mxu0
      %1682 = vdwg.mxu0
      %v1683 = vmax.f32 %v1557, 0.0
      %v1684 = vmax.f32 %v1560, 0.0
      %v1685 = vmax.f32 %v1565, 0.0
      %v1686 = vmax.f32 %v1568, 0.0
      %v1687 = vmax.f32 %v1573, 0.0
      %v1688 = vmax.f32 %v1576, 0.0
      %v1689 = vmax.f32 %v1581, 0.0
      %v1690 = vmax.f32 %v1584, 0.0
      %v1691 = vmax.f32 %v1589, 0.0
      %v1692 = vmax.f32 %v1592, 0.0
      %v1693 = vmax.f32 %v1597, 0.0
      %v1694 = vmax.f32 %v1600, 0.0
      %v1695 = vmax.f32 %v1605, 0.0
      %v1696 = vmax.f32 %v1608, 0.0
      %v1697 = vmax.f32 %v1613, 0.0
      %v1698 = vmax.f32 %v1616, 0.0
      %v1699 = vmax.f32 %v1621, 0.0
      %v1700 = vmax.f32 %v1624, 0.0
      %v1701 = vmax.f32 %v1629, 0.0
      %v1702 = vmax.f32 %v1632, 0.0
      %v1703 = vmax.f32 %v1637, 0.0
      %v1704 = vmax.f32 %v1640, 0.0
      %v1705 = vmax.f32 %v1645, 0.0
      %v1706 = vmax.f32 %v1648, 0.0
      %v1707 = vmax.f32 %v1653, 0.0
      %v1708 = vmax.f32 %v1656, 0.0
      %v1709 = vmax.f32 %v1661, 0.0
      %v1710 = vmax.f32 %v1664, 0.0
      %v1711 = vmax.f32 %v1669, 0.0
      %v1712 = vmax.f32 %v1672, 0.0
      %v1713 = vmax.f32 %v1677, 0.0
      %v1714 = vmax.f32 %v1680, 0.0
      %v1715 = vpack.c.bf16 %v1684, %v1683
      %v1716 = vpack.c.bf16 %v1686, %v1685
      %v1717 = vpack.c.bf16 %v1688, %v1687
      %v1718 = vpack.c.bf16 %v1690, %v1689
      %v1719 = vpack.c.bf16 %v1692, %v1691
      %v1720 = vpack.c.bf16 %v1694, %v1693
      %v1721 = vpack.c.bf16 %v1696, %v1695
      %v1722 = vpack.c.bf16 %v1698, %v1697
      %v1723 = vpack.c.bf16 %v1700, %v1699
      %v1724 = vpack.c.bf16 %v1702, %v1701
      %v1725 = vpack.c.bf16 %v1704, %v1703
      %v1726 = vpack.c.bf16 %v1706, %v1705
      %v1727 = vpack.c.bf16 %v1708, %v1707
      %v1728 = vpack.c.bf16 %v1710, %v1709
      %v1729 = vpack.c.bf16 %v1712, %v1711
      %v1730 = vpack.c.bf16 %v1714, %v1713
      %v1747 = vunpack.c.l.b16 %v1715
      %v1748 = vunpack.c.h.b16 %v1715
      %v1749 = vunpack.c.l.b16 %v1716
      %v1750 = vunpack.c.h.b16 %v1716
      %v1751 = vunpack.c.l.b16 %v1717
      %v1752 = vunpack.c.h.b16 %v1717
      %v1753 = vunpack.c.l.b16 %v1718
      %v1754 = vunpack.c.h.b16 %v1718
      %v1755 = vunpack.c.l.b16 %v1719
      %v1756 = vunpack.c.h.b16 %v1719
      %v1757 = vunpack.c.l.b16 %v1720
      %v1758 = vunpack.c.h.b16 %v1720
      %v1759 = vunpack.c.l.b16 %v1721
      %v1760 = vunpack.c.h.b16 %v1721
      %v1761 = vunpack.c.l.b16 %v1722
      %v1762 = vunpack.c.h.b16 %v1722
      %v1763 = vunpack.c.l.b16 %v1723
      %v1764 = vunpack.c.h.b16 %v1723
      %v1765 = vunpack.c.l.b16 %v1724
      %v1766 = vunpack.c.h.b16 %v1724
      %v1767 = vunpack.c.l.b16 %v1725
      %v1768 = vunpack.c.h.b16 %v1725
      %v1769 = vunpack.c.l.b16 %v1726
      %v1770 = vunpack.c.h.b16 %v1726
      %v1771 = vunpack.c.l.b16 %v1727
      %v1772 = vunpack.c.h.b16 %v1727
      %v1773 = vunpack.c.l.b16 %v1728
      %v1774 = vunpack.c.h.b16 %v1728
      %v1775 = vunpack.c.l.b16 %v1729
      %v1776 = vunpack.c.h.b16 %v1729
      %v1777 = vunpack.c.l.b16 %v1730
      %v1778 = vunpack.c.h.b16 %v1730
      %v1779 = vpack.c.b16 %v1747, %v1747
      %v1780 = vpack.c.b16 %v1748, %v1748
      %v1781 = vpack.c.b16 %v1749, %v1749
      %v1782 = vpack.c.b16 %v1750, %v1750
      %v1783 = vpack.c.b16 %v1751, %v1751
      %v1784 = vpack.c.b16 %v1752, %v1752
      %v1785 = vpack.c.b16 %v1753, %v1753
      %v1786 = vpack.c.b16 %v1754, %v1754
      %v1787 = vpack.c.b16 %v1755, %v1755
      %v1788 = vpack.c.b16 %v1756, %v1756
      %v1789 = vpack.c.b16 %v1757, %v1757
      %v1790 = vpack.c.b16 %v1758, %v1758
      %v1791 = vpack.c.b16 %v1759, %v1759
      %v1792 = vpack.c.b16 %v1760, %v1760
      %v1793 = vpack.c.b16 %v1761, %v1761
      %v1794 = vpack.c.b16 %v1762, %v1762
      %v1795 = vpack.c.b16 %v1763, %v1763
      %v1796 = vpack.c.b16 %v1764, %v1764
      %v1797 = vpack.c.b16 %v1765, %v1765
      %v1798 = vpack.c.b16 %v1766, %v1766
      %v1799 = vpack.c.b16 %v1767, %v1767
      %v1800 = vpack.c.b16 %v1768, %v1768
      %v1801 = vpack.c.b16 %v1769, %v1769
      %v1802 = vpack.c.b16 %v1770, %v1770
      %v1803 = vpack.c.b16 %v1771, %v1771
      %v1804 = vpack.c.b16 %v1772, %v1772
      %v1805 = vpack.c.b16 %v1773, %v1773
      %v1806 = vpack.c.b16 %v1774, %v1774
      %v1807 = vpack.c.b16 %v1775, %v1775
      %v1808 = vpack.c.b16 %v1776, %v1776
      %v1809 = vpack.c.b16 %v1777, %v1777
      %v1810 = vpack.c.b16 %v1778, %v1778
      %1843 = vst [vmem:[#allocation2 + $0x180] sm:$0xf] %v1779
      %1844 = vst [vmem:[#allocation2 + $0x184] sm:$0xf] %v1780
      %1845 = vst [vmem:[#allocation2 + $0x188] sm:$0xf] %v1781
      %1846 = vst [vmem:[#allocation2 + $0x18c] sm:$0xf] %v1782
      %1847 = vst [vmem:[#allocation2 + $0x190] sm:$0xf] %v1783
      %1848 = vst [vmem:[#allocation2 + $0x194] sm:$0xf] %v1784
      %1849 = vst [vmem:[#allocation2 + $0x198] sm:$0xf] %v1785
      %1850 = vst [vmem:[#allocation2 + $0x19c] sm:$0xf] %v1786
      %1851 = vst [vmem:[#allocation2 + $0x1a0] sm:$0xf] %v1787
      %1852 = vst [vmem:[#allocation2 + $0x1a4] sm:$0xf] %v1788
      %1853 = vst [vmem:[#allocation2 + $0x1a8] sm:$0xf] %v1789
      %1854 = vst [vmem:[#allocation2 + $0x1ac] sm:$0xf] %v1790
      %1855 = vst [vmem:[#allocation2 + $0x1b0] sm:$0xf] %v1791
      %1856 = vst [vmem:[#allocation2 + $0x1b4] sm:$0xf] %v1792
      %1857 = vst [vmem:[#allocation2 + $0x1b8] sm:$0xf] %v1793
      %1858 = vst [vmem:[#allocation2 + $0x1bc] sm:$0xf] %v1794
      %1859 = vst [vmem:[#allocation2 + $0x1c0] sm:$0xf] %v1795
      %1860 = vst [vmem:[#allocation2 + $0x1c4] sm:$0xf] %v1796
      %1861 = vst [vmem:[#allocation2 + $0x1c8] sm:$0xf] %v1797
      %1862 = vst [vmem:[#allocation2 + $0x1cc] sm:$0xf] %v1798
      %1863 = vst [vmem:[#allocation2 + $0x1d0] sm:$0xf] %v1799
      %1864 = vst [vmem:[#allocation2 + $0x1d4] sm:$0xf] %v1800
      %1865 = vst [vmem:[#allocation2 + $0x1d8] sm:$0xf] %v1801
      %1866 = vst [vmem:[#allocation2 + $0x1dc] sm:$0xf] %v1802
      %1867 = vst [vmem:[#allocation2 + $0x1e0] sm:$0xf] %v1803
      %1868 = vst [vmem:[#allocation2 + $0x1e4] sm:$0xf] %v1804
      %1869 = vst [vmem:[#allocation2 + $0x1e8] sm:$0xf] %v1805
      %1870 = vst [vmem:[#allocation2 + $0x1ec] sm:$0xf] %v1806
      %1871 = vst [vmem:[#allocation2 + $0x1f0] sm:$0xf] %v1807
      %1872 = vst [vmem:[#allocation2 + $0x1f4] sm:$0xf] %v1808
      %1873 = vst [vmem:[#allocation2 + $0x1f8] sm:$0xf] %v1809
      %1874 = vst [vmem:[#allocation2 + $0x1fc] sm:$0xf] %v1810
      %v1875 = vld [vmem:[%s2] sm:$0xff]
      %v1876 = vld [vmem:[%s2 + $0x8] sm:$0xff]
      %v1877 = vld [vmem:[%s2 + $0x10] sm:$0xff]
      %v1878 = vld [vmem:[%s2 + $0x18] sm:$0xff]
      %v1879 = vld [vmem:[%s2 + $0x20] sm:$0xff]
      %v1880 = vld [vmem:[%s2 + $0x28] sm:$0xff]
      %v1881 = vld [vmem:[%s2 + $0x30] sm:$0xff]
      %v1882 = vld [vmem:[%s2 + $0x38] sm:$0xff]
      %v1883 = vld [vmem:[%s2 + $0x40] sm:$0xff]
      %v1884 = vld [vmem:[%s2 + $0x48] sm:$0xff]
      %v1885 = vld [vmem:[%s2 + $0x50] sm:$0xff]
      %v1886 = vld [vmem:[%s2 + $0x58] sm:$0xff]
      %v1887 = vld [vmem:[%s2 + $0x60] sm:$0xff]
      %v1888 = vld [vmem:[%s2 + $0x68] sm:$0xff]
      %v1889 = vld [vmem:[%s2 + $0x70] sm:$0xff]
      %v1890 = vld [vmem:[%s2 + $0x78] sm:$0xff]
      %v1891 = vld [vmem:[%s2 + $0x80] sm:$0xff]
      %v1892 = vld [vmem:[%s2 + $0x88] sm:$0xff]
      %v1893 = vld [vmem:[%s2 + $0x90] sm:$0xff]
      %v1894 = vld [vmem:[%s2 + $0x98] sm:$0xff]
      %v1895 = vld [vmem:[%s2 + $0xa0] sm:$0xff]
      %v1896 = vld [vmem:[%s2 + $0xa8] sm:$0xff]
      %v1897 = vld [vmem:[%s2 + $0xb0] sm:$0xff]
      %v1898 = vld [vmem:[%s2 + $0xb8] sm:$0xff]
      %v1899 = vld [vmem:[%s2 + $0xc0] sm:$0xff]
      %v1900 = vld [vmem:[%s2 + $0xc8] sm:$0xff]
      %v1901 = vld [vmem:[%s2 + $0xd0] sm:$0xff]
      %v1902 = vld [vmem:[%s2 + $0xd8] sm:$0xff]
      %v1903 = vld [vmem:[%s2 + $0xe0] sm:$0xff]
      %v1904 = vld [vmem:[%s2 + $0xe8] sm:$0xff]
      %v1905 = vld [vmem:[%s2 + $0xf0] sm:$0xff]
      %v1906 = vld [vmem:[%s2 + $0xf8] sm:$0xff]
      %v1907 = vld [vmem:[%s2 + $0x100] sm:$0xff]
      %v1908 = vld [vmem:[%s2 + $0x108] sm:$0xff]
      %v1909 = vld [vmem:[%s2 + $0x110] sm:$0xff]
      %v1910 = vld [vmem:[%s2 + $0x118] sm:$0xff]
      %v1911 = vld [vmem:[%s2 + $0x120] sm:$0xff]
      %v1912 = vld [vmem:[%s2 + $0x128] sm:$0xff]
      %v1913 = vld [vmem:[%s2 + $0x130] sm:$0xff]
      %v1914 = vld [vmem:[%s2 + $0x138] sm:$0xff]
      %v1915 = vld [vmem:[%s2 + $0x140] sm:$0xff]
      %v1916 = vld [vmem:[%s2 + $0x148] sm:$0xff]
      %v1917 = vld [vmem:[%s2 + $0x150] sm:$0xff]
      %v1918 = vld [vmem:[%s2 + $0x158] sm:$0xff]
      %v1919 = vld [vmem:[%s2 + $0x160] sm:$0xff]
      %v1920 = vld [vmem:[%s2 + $0x168] sm:$0xff]
      %v1921 = vld [vmem:[%s2 + $0x170] sm:$0xff]
      %v1922 = vld [vmem:[%s2 + $0x178] sm:$0xff]
      %v1923 = vld [vmem:[%s2 + $0x180] sm:$0xff]
      %v1924 = vld [vmem:[%s2 + $0x188] sm:$0xff]
      %v1925 = vld [vmem:[%s2 + $0x190] sm:$0xff]
      %v1926 = vld [vmem:[%s2 + $0x198] sm:$0xff]
      %v1927 = vld [vmem:[%s2 + $0x1a0] sm:$0xff]
      %v1928 = vld [vmem:[%s2 + $0x1a8] sm:$0xff]
      %v1929 = vld [vmem:[%s2 + $0x1b0] sm:$0xff]
      %v1930 = vld [vmem:[%s2 + $0x1b8] sm:$0xff]
      %v1931 = vld [vmem:[%s2 + $0x1c0] sm:$0xff]
      %v1932 = vld [vmem:[%s2 + $0x1c8] sm:$0xff]
      %v1933 = vld [vmem:[%s2 + $0x1d0] sm:$0xff]
      %v1934 = vld [vmem:[%s2 + $0x1d8] sm:$0xff]
      %v1935 = vld [vmem:[%s2 + $0x1e0] sm:$0xff]
      %v1936 = vld [vmem:[%s2 + $0x1e8] sm:$0xff]
      %v1937 = vld [vmem:[%s2 + $0x1f0] sm:$0xff]
      %v1938 = vld [vmem:[%s2 + $0x1f8] sm:$0xff]
      %v1939 = vld [vmem:[%s2 + $0x200] sm:$0xff]
      %v1940 = vld [vmem:[%s2 + $0x208] sm:$0xff]
      %v1941 = vld [vmem:[%s2 + $0x210] sm:$0xff]
      %v1942 = vld [vmem:[%s2 + $0x218] sm:$0xff]
      %v1943 = vld [vmem:[%s2 + $0x220] sm:$0xff]
      %v1944 = vld [vmem:[%s2 + $0x228] sm:$0xff]
      %v1945 = vld [vmem:[%s2 + $0x230] sm:$0xff]
      %v1946 = vld [vmem:[%s2 + $0x238] sm:$0xff]
      %v1947 = vld [vmem:[%s2 + $0x240] sm:$0xff]
      %v1948 = vld [vmem:[%s2 + $0x248] sm:$0xff]
      %v1949 = vld [vmem:[%s2 + $0x250] sm:$0xff]
      %v1950 = vld [vmem:[%s2 + $0x258] sm:$0xff]
      %v1951 = vld [vmem:[%s2 + $0x260] sm:$0xff]
      %v1952 = vld [vmem:[%s2 + $0x268] sm:$0xff]
      %v1953 = vld [vmem:[%s2 + $0x270] sm:$0xff]
      %v1954 = vld [vmem:[%s2 + $0x278] sm:$0xff]
      %v1955 = vld [vmem:[%s2 + $0x280] sm:$0xff]
      %v1956 = vld [vmem:[%s2 + $0x288] sm:$0xff]
      %v1957 = vld [vmem:[%s2 + $0x290] sm:$0xff]
      %v1958 = vld [vmem:[%s2 + $0x298] sm:$0xff]
      %v1959 = vld [vmem:[%s2 + $0x2a0] sm:$0xff]
      %v1960 = vld [vmem:[%s2 + $0x2a8] sm:$0xff]
      %v1961 = vld [vmem:[%s2 + $0x2b0] sm:$0xff]
      %v1962 = vld [vmem:[%s2 + $0x2b8] sm:$0xff]
      %v1963 = vld [vmem:[%s2 + $0x2c0] sm:$0xff]
      %v1964 = vld [vmem:[%s2 + $0x2c8] sm:$0xff]
      %v1965 = vld [vmem:[%s2 + $0x2d0] sm:$0xff]
      %v1966 = vld [vmem:[%s2 + $0x2d8] sm:$0xff]
      %v1967 = vld [vmem:[%s2 + $0x2e0] sm:$0xff]
      %v1968 = vld [vmem:[%s2 + $0x2e8] sm:$0xff]
      %v1969 = vld [vmem:[%s2 + $0x2f0] sm:$0xff]
      %v1970 = vld [vmem:[%s2 + $0x2f8] sm:$0xff]
      %v1971 = vld [vmem:[%s2 + $0x300] sm:$0xff]
      %v1972 = vld [vmem:[%s2 + $0x308] sm:$0xff]
      %v1973 = vld [vmem:[%s2 + $0x310] sm:$0xff]
      %v1974 = vld [vmem:[%s2 + $0x318] sm:$0xff]
      %v1975 = vld [vmem:[%s2 + $0x320] sm:$0xff]
      %v1976 = vld [vmem:[%s2 + $0x328] sm:$0xff]
      %v1977 = vld [vmem:[%s2 + $0x330] sm:$0xff]
      %v1978 = vld [vmem:[%s2 + $0x338] sm:$0xff]
      %v1979 = vld [vmem:[%s2 + $0x340] sm:$0xff]
      %v1980 = vld [vmem:[%s2 + $0x348] sm:$0xff]
      %v1981 = vld [vmem:[%s2 + $0x350] sm:$0xff]
      %v1982 = vld [vmem:[%s2 + $0x358] sm:$0xff]
      %v1983 = vld [vmem:[%s2 + $0x360] sm:$0xff]
      %v1984 = vld [vmem:[%s2 + $0x368] sm:$0xff]
      %v1985 = vld [vmem:[%s2 + $0x370] sm:$0xff]
      %v1986 = vld [vmem:[%s2 + $0x378] sm:$0xff]
      %v1987 = vld [vmem:[%s2 + $0x380] sm:$0xff]
      %v1988 = vld [vmem:[%s2 + $0x388] sm:$0xff]
      %v1989 = vld [vmem:[%s2 + $0x390] sm:$0xff]
      %v1990 = vld [vmem:[%s2 + $0x398] sm:$0xff]
      %v1991 = vld [vmem:[%s2 + $0x3a0] sm:$0xff]
      %v1992 = vld [vmem:[%s2 + $0x3a8] sm:$0xff]
      %v1993 = vld [vmem:[%s2 + $0x3b0] sm:$0xff]
      %v1994 = vld [vmem:[%s2 + $0x3b8] sm:$0xff]
      %v1995 = vld [vmem:[%s2 + $0x3c0] sm:$0xff]
      %v1996 = vld [vmem:[%s2 + $0x3c8] sm:$0xff]
      %v1997 = vld [vmem:[%s2 + $0x3d0] sm:$0xff]
      %v1998 = vld [vmem:[%s2 + $0x3d8] sm:$0xff]
      %v1999 = vld [vmem:[%s2 + $0x3e0] sm:$0xff]
      %v2000 = vld [vmem:[%s2 + $0x3e8] sm:$0xff]
      %v2001 = vld [vmem:[%s2 + $0x3f0] sm:$0xff]
      %v2002 = vld [vmem:[%s2 + $0x3f8] sm:$0xff]
      %v2003 = vld [vmem:[%s2 + $0x400] sm:$0xff]
      %v2004 = vld [vmem:[%s2 + $0x408] sm:$0xff]
      %v2005 = vld [vmem:[%s2 + $0x410] sm:$0xff]
      %v2006 = vld [vmem:[%s2 + $0x418] sm:$0xff]
      %v2007 = vld [vmem:[%s2 + $0x420] sm:$0xff]
      %v2008 = vld [vmem:[%s2 + $0x428] sm:$0xff]
      %v2009 = vld [vmem:[%s2 + $0x430] sm:$0xff]
      %v2010 = vld [vmem:[%s2 + $0x438] sm:$0xff]
      %v2011 = vld [vmem:[%s2 + $0x440] sm:$0xff]
      %v2012 = vld [vmem:[%s2 + $0x448] sm:$0xff]
      %v2013 = vld [vmem:[%s2 + $0x450] sm:$0xff]
      %v2014 = vld [vmem:[%s2 + $0x458] sm:$0xff]
      %v2015 = vld [vmem:[%s2 + $0x460] sm:$0xff]
      %v2016 = vld [vmem:[%s2 + $0x468] sm:$0xff]
      %v2017 = vld [vmem:[%s2 + $0x470] sm:$0xff]
      %v2018 = vld [vmem:[%s2 + $0x478] sm:$0xff]
      %v2019 = vld [vmem:[%s2 + $0x480] sm:$0xff]
      %v2020 = vld [vmem:[%s2 + $0x488] sm:$0xff]
      %v2021 = vld [vmem:[%s2 + $0x490] sm:$0xff]
      %v2022 = vld [vmem:[%s2 + $0x498] sm:$0xff]
      %v2023 = vld [vmem:[%s2 + $0x4a0] sm:$0xff]
      %v2024 = vld [vmem:[%s2 + $0x4a8] sm:$0xff]
      %v2025 = vld [vmem:[%s2 + $0x4b0] sm:$0xff]
      %v2026 = vld [vmem:[%s2 + $0x4b8] sm:$0xff]
      %v2027 = vld [vmem:[%s2 + $0x4c0] sm:$0xff]
      %v2028 = vld [vmem:[%s2 + $0x4c8] sm:$0xff]
      %v2029 = vld [vmem:[%s2 + $0x4d0] sm:$0xff]
      %v2030 = vld [vmem:[%s2 + $0x4d8] sm:$0xff]
      %v2031 = vld [vmem:[%s2 + $0x4e0] sm:$0xff]
      %v2032 = vld [vmem:[%s2 + $0x4e8] sm:$0xff]
      %v2033 = vld [vmem:[%s2 + $0x4f0] sm:$0xff]
      %v2034 = vld [vmem:[%s2 + $0x4f8] sm:$0xff]
      %v2035 = vld [vmem:[%s2 + $0x500] sm:$0xff]
      %v2036 = vld [vmem:[%s2 + $0x508] sm:$0xff]
      %v2037 = vld [vmem:[%s2 + $0x510] sm:$0xff]
      %v2038 = vld [vmem:[%s2 + $0x518] sm:$0xff]
      %v2039 = vld [vmem:[%s2 + $0x520] sm:$0xff]
      %v2040 = vld [vmem:[%s2 + $0x528] sm:$0xff]
      %v2041 = vld [vmem:[%s2 + $0x530] sm:$0xff]
      %v2042 = vld [vmem:[%s2 + $0x538] sm:$0xff]
      %v2043 = vld [vmem:[%s2 + $0x540] sm:$0xff]
      %v2044 = vld [vmem:[%s2 + $0x548] sm:$0xff]
      %v2045 = vld [vmem:[%s2 + $0x550] sm:$0xff]
      %v2046 = vld [vmem:[%s2 + $0x558] sm:$0xff]
      %v2047 = vld [vmem:[%s2 + $0x560] sm:$0xff]
      %v2048 = vld [vmem:[%s2 + $0x568] sm:$0xff]
      %v2049 = vld [vmem:[%s2 + $0x570] sm:$0xff]
      %v2050 = vld [vmem:[%s2 + $0x578] sm:$0xff]
      %v2051 = vld [vmem:[%s2 + $0x580] sm:$0xff]
      %v2052 = vld [vmem:[%s2 + $0x588] sm:$0xff]
      %v2053 = vld [vmem:[%s2 + $0x590] sm:$0xff]
      %v2054 = vld [vmem:[%s2 + $0x598] sm:$0xff]
      %v2055 = vld [vmem:[%s2 + $0x5a0] sm:$0xff]
      %v2056 = vld [vmem:[%s2 + $0x5a8] sm:$0xff]
      %v2057 = vld [vmem:[%s2 + $0x5b0] sm:$0xff]
      %v2058 = vld [vmem:[%s2 + $0x5b8] sm:$0xff]
      %v2059 = vld [vmem:[%s2 + $0x5c0] sm:$0xff]
      %v2060 = vld [vmem:[%s2 + $0x5c8] sm:$0xff]
      %v2061 = vld [vmem:[%s2 + $0x5d0] sm:$0xff]
      %v2062 = vld [vmem:[%s2 + $0x5d8] sm:$0xff]
      %v2063 = vld [vmem:[%s2 + $0x5e0] sm:$0xff]
      %v2064 = vld [vmem:[%s2 + $0x5e8] sm:$0xff]
      %v2065 = vld [vmem:[%s2 + $0x5f0] sm:$0xff]
      %v2066 = vld [vmem:[%s2 + $0x5f8] sm:$0xff]
      %v2067 = vld [vmem:[%s2 + $0x600] sm:$0xff]
      %v2068 = vld [vmem:[%s2 + $0x608] sm:$0xff]
      %v2069 = vld [vmem:[%s2 + $0x610] sm:$0xff]
      %v2070 = vld [vmem:[%s2 + $0x618] sm:$0xff]
      %v2071 = vld [vmem:[%s2 + $0x620] sm:$0xff]
      %v2072 = vld [vmem:[%s2 + $0x628] sm:$0xff]
      %v2073 = vld [vmem:[%s2 + $0x630] sm:$0xff]
      %v2074 = vld [vmem:[%s2 + $0x638] sm:$0xff]
      %v2075 = vld [vmem:[%s2 + $0x640] sm:$0xff]
      %v2076 = vld [vmem:[%s2 + $0x648] sm:$0xff]
      %v2077 = vld [vmem:[%s2 + $0x650] sm:$0xff]
      %v2078 = vld [vmem:[%s2 + $0x658] sm:$0xff]
      %v2079 = vld [vmem:[%s2 + $0x660] sm:$0xff]
      %v2080 = vld [vmem:[%s2 + $0x668] sm:$0xff]
      %v2081 = vld [vmem:[%s2 + $0x670] sm:$0xff]
      %v2082 = vld [vmem:[%s2 + $0x678] sm:$0xff]
      %v2083 = vld [vmem:[%s2 + $0x680] sm:$0xff]
      %v2084 = vld [vmem:[%s2 + $0x688] sm:$0xff]
      %v2085 = vld [vmem:[%s2 + $0x690] sm:$0xff]
      %v2086 = vld [vmem:[%s2 + $0x698] sm:$0xff]
      %v2087 = vld [vmem:[%s2 + $0x6a0] sm:$0xff]
      %v2088 = vld [vmem:[%s2 + $0x6a8] sm:$0xff]
      %v2089 = vld [vmem:[%s2 + $0x6b0] sm:$0xff]
      %v2090 = vld [vmem:[%s2 + $0x6b8] sm:$0xff]
      %v2091 = vld [vmem:[%s2 + $0x6c0] sm:$0xff]
      %v2092 = vld [vmem:[%s2 + $0x6c8] sm:$0xff]
      %v2093 = vld [vmem:[%s2 + $0x6d0] sm:$0xff]
      %v2094 = vld [vmem:[%s2 + $0x6d8] sm:$0xff]
      %v2095 = vld [vmem:[%s2 + $0x6e0] sm:$0xff]
      %v2096 = vld [vmem:[%s2 + $0x6e8] sm:$0xff]
      %v2097 = vld [vmem:[%s2 + $0x6f0] sm:$0xff]
      %v2098 = vld [vmem:[%s2 + $0x6f8] sm:$0xff]
      %v2099 = vld [vmem:[%s2 + $0x700] sm:$0xff]
      %v2100 = vld [vmem:[%s2 + $0x708] sm:$0xff]
      %v2101 = vld [vmem:[%s2 + $0x710] sm:$0xff]
      %v2102 = vld [vmem:[%s2 + $0x718] sm:$0xff]
      %v2103 = vld [vmem:[%s2 + $0x720] sm:$0xff]
      %v2104 = vld [vmem:[%s2 + $0x728] sm:$0xff]
      %v2105 = vld [vmem:[%s2 + $0x730] sm:$0xff]
      %v2106 = vld [vmem:[%s2 + $0x738] sm:$0xff]
      %v2107 = vld [vmem:[%s2 + $0x740] sm:$0xff]
      %v2108 = vld [vmem:[%s2 + $0x748] sm:$0xff]
      %v2109 = vld [vmem:[%s2 + $0x750] sm:$0xff]
      %v2110 = vld [vmem:[%s2 + $0x758] sm:$0xff]
      %v2111 = vld [vmem:[%s2 + $0x760] sm:$0xff]
      %v2112 = vld [vmem:[%s2 + $0x768] sm:$0xff]
      %v2113 = vld [vmem:[%s2 + $0x770] sm:$0xff]
      %v2114 = vld [vmem:[%s2 + $0x778] sm:$0xff]
      %v2115 = vld [vmem:[%s2 + $0x780] sm:$0xff]
      %v2116 = vld [vmem:[%s2 + $0x788] sm:$0xff]
      %v2117 = vld [vmem:[%s2 + $0x790] sm:$0xff]
      %v2118 = vld [vmem:[%s2 + $0x798] sm:$0xff]
      %v2119 = vld [vmem:[%s2 + $0x7a0] sm:$0xff]
      %v2120 = vld [vmem:[%s2 + $0x7a8] sm:$0xff]
      %v2121 = vld [vmem:[%s2 + $0x7b0] sm:$0xff]
      %v2122 = vld [vmem:[%s2 + $0x7b8] sm:$0xff]
      %v2123 = vld [vmem:[%s2 + $0x7c0] sm:$0xff]
      %v2124 = vld [vmem:[%s2 + $0x7c8] sm:$0xff]
      %v2125 = vld [vmem:[%s2 + $0x7d0] sm:$0xff]
      %v2126 = vld [vmem:[%s2 + $0x7d8] sm:$0xff]
      %v2127 = vld [vmem:[%s2 + $0x7e0] sm:$0xff]
      %v2128 = vld [vmem:[%s2 + $0x7e8] sm:$0xff]
      %v2129 = vld [vmem:[%s2 + $0x7f0] sm:$0xff]
      %v2130 = vld [vmem:[%s2 + $0x7f8] sm:$0xff]
      %v2131 = vld [vmem:[#allocation2] sm:$0xf]
      %v2132 = vld [vmem:[#allocation2 + $0x4] sm:$0xf]
      %v2133 = vld [vmem:[#allocation2 + $0x8] sm:$0xf]
      %v2134 = vld [vmem:[#allocation2 + $0xc] sm:$0xf]
      %v2135 = vld [vmem:[#allocation2 + $0x10] sm:$0xf]
      %v2136 = vld [vmem:[#allocation2 + $0x14] sm:$0xf]
      %v2137 = vld [vmem:[#allocation2 + $0x18] sm:$0xf]
      %v2138 = vld [vmem:[#allocation2 + $0x1c] sm:$0xf]
      %v2139 = vld [vmem:[#allocation2 + $0x20] sm:$0xf]
      %v2140 = vld [vmem:[#allocation2 + $0x24] sm:$0xf]
      %v2141 = vld [vmem:[#allocation2 + $0x28] sm:$0xf]
      %v2142 = vld [vmem:[#allocation2 + $0x2c] sm:$0xf]
      %v2143 = vld [vmem:[#allocation2 + $0x30] sm:$0xf]
      %v2144 = vld [vmem:[#allocation2 + $0x34] sm:$0xf]
      %v2145 = vld [vmem:[#allocation2 + $0x38] sm:$0xf]
      %v2146 = vld [vmem:[#allocation2 + $0x3c] sm:$0xf]
      %v2147 = vld [vmem:[#allocation2 + $0x40] sm:$0xf]
      %v2148 = vld [vmem:[#allocation2 + $0x44] sm:$0xf]
      %v2149 = vld [vmem:[#allocation2 + $0x48] sm:$0xf]
      %v2150 = vld [vmem:[#allocation2 + $0x4c] sm:$0xf]
      %v2151 = vld [vmem:[#allocation2 + $0x50] sm:$0xf]
      %v2152 = vld [vmem:[#allocation2 + $0x54] sm:$0xf]
      %v2153 = vld [vmem:[#allocation2 + $0x58] sm:$0xf]
      %v2154 = vld [vmem:[#allocation2 + $0x5c] sm:$0xf]
      %v2155 = vld [vmem:[#allocation2 + $0x60] sm:$0xf]
      %v2156 = vld [vmem:[#allocation2 + $0x64] sm:$0xf]
      %v2157 = vld [vmem:[#allocation2 + $0x68] sm:$0xf]
      %v2158 = vld [vmem:[#allocation2 + $0x6c] sm:$0xf]
      %v2159 = vld [vmem:[#allocation2 + $0x70] sm:$0xf]
      %v2160 = vld [vmem:[#allocation2 + $0x74] sm:$0xf]
      %v2161 = vld [vmem:[#allocation2 + $0x78] sm:$0xf]
      %v2162 = vld [vmem:[#allocation2 + $0x7c] sm:$0xf]
      %v2163 = vld [vmem:[#allocation2 + $0x80] sm:$0xf]
      %v2164 = vld [vmem:[#allocation2 + $0x84] sm:$0xf]
      %v2165 = vld [vmem:[#allocation2 + $0x88] sm:$0xf]
      %v2166 = vld [vmem:[#allocation2 + $0x8c] sm:$0xf]
      %v2167 = vld [vmem:[#allocation2 + $0x90] sm:$0xf]
      %v2168 = vld [vmem:[#allocation2 + $0x94] sm:$0xf]
      %v2169 = vld [vmem:[#allocation2 + $0x98] sm:$0xf]
      %v2170 = vld [vmem:[#allocation2 + $0x9c] sm:$0xf]
      %v2171 = vld [vmem:[#allocation2 + $0xa0] sm:$0xf]
      %v2172 = vld [vmem:[#allocation2 + $0xa4] sm:$0xf]
      %v2173 = vld [vmem:[#allocation2 + $0xa8] sm:$0xf]
      %v2174 = vld [vmem:[#allocation2 + $0xac] sm:$0xf]
      %v2175 = vld [vmem:[#allocation2 + $0xb0] sm:$0xf]
      %v2176 = vld [vmem:[#allocation2 + $0xb4] sm:$0xf]
      %v2177 = vld [vmem:[#allocation2 + $0xb8] sm:$0xf]
      %v2178 = vld [vmem:[#allocation2 + $0xbc] sm:$0xf]
      %v2179 = vld [vmem:[#allocation2 + $0xc0] sm:$0xf]
      %v2180 = vld [vmem:[#allocation2 + $0xc4] sm:$0xf]
      %v2181 = vld [vmem:[#allocation2 + $0xc8] sm:$0xf]
      %v2182 = vld [vmem:[#allocation2 + $0xcc] sm:$0xf]
      %v2183 = vld [vmem:[#allocation2 + $0xd0] sm:$0xf]
      %v2184 = vld [vmem:[#allocation2 + $0xd4] sm:$0xf]
      %v2185 = vld [vmem:[#allocation2 + $0xd8] sm:$0xf]
      %v2186 = vld [vmem:[#allocation2 + $0xdc] sm:$0xf]
      %v2187 = vld [vmem:[#allocation2 + $0xe0] sm:$0xf]
      %v2188 = vld [vmem:[#allocation2 + $0xe4] sm:$0xf]
      %v2189 = vld [vmem:[#allocation2 + $0xe8] sm:$0xf]
      %v2190 = vld [vmem:[#allocation2 + $0xec] sm:$0xf]
      %v2191 = vld [vmem:[#allocation2 + $0xf0] sm:$0xf]
      %v2192 = vld [vmem:[#allocation2 + $0xf4] sm:$0xf]
      %v2193 = vld [vmem:[#allocation2 + $0xf8] sm:$0xf]
      %v2194 = vld [vmem:[#allocation2 + $0xfc] sm:$0xf]
      %v2195 = vld [vmem:[#allocation2 + $0x100] sm:$0xf]
      %v2196 = vld [vmem:[#allocation2 + $0x104] sm:$0xf]
      %v2197 = vld [vmem:[#allocation2 + $0x108] sm:$0xf]
      %v2198 = vld [vmem:[#allocation2 + $0x10c] sm:$0xf]
      %v2199 = vld [vmem:[#allocation2 + $0x110] sm:$0xf]
      %v2200 = vld [vmem:[#allocation2 + $0x114] sm:$0xf]
      %v2201 = vld [vmem:[#allocation2 + $0x118] sm:$0xf]
      %v2202 = vld [vmem:[#allocation2 + $0x11c] sm:$0xf]
      %v2203 = vld [vmem:[#allocation2 + $0x120] sm:$0xf]
      %v2204 = vld [vmem:[#allocation2 + $0x124] sm:$0xf]
      %v2205 = vld [vmem:[#allocation2 + $0x128] sm:$0xf]
      %v2206 = vld [vmem:[#allocation2 + $0x12c] sm:$0xf]
      %v2207 = vld [vmem:[#allocation2 + $0x130] sm:$0xf]
      %v2208 = vld [vmem:[#allocation2 + $0x134] sm:$0xf]
      %v2209 = vld [vmem:[#allocation2 + $0x138] sm:$0xf]
      %v2210 = vld [vmem:[#allocation2 + $0x13c] sm:$0xf]
      %v2211 = vld [vmem:[#allocation2 + $0x140] sm:$0xf]
      %v2212 = vld [vmem:[#allocation2 + $0x144] sm:$0xf]
      %v2213 = vld [vmem:[#allocation2 + $0x148] sm:$0xf]
      %v2214 = vld [vmem:[#allocation2 + $0x14c] sm:$0xf]
      %v2215 = vld [vmem:[#allocation2 + $0x150] sm:$0xf]
      %v2216 = vld [vmem:[#allocation2 + $0x154] sm:$0xf]
      %v2217 = vld [vmem:[#allocation2 + $0x158] sm:$0xf]
      %v2218 = vld [vmem:[#allocation2 + $0x15c] sm:$0xf]
      %v2219 = vld [vmem:[#allocation2 + $0x160] sm:$0xf]
      %v2220 = vld [vmem:[#allocation2 + $0x164] sm:$0xf]
      %v2221 = vld [vmem:[#allocation2 + $0x168] sm:$0xf]
      %v2222 = vld [vmem:[#allocation2 + $0x16c] sm:$0xf]
      %v2223 = vld [vmem:[#allocation2 + $0x170] sm:$0xf]
      %v2224 = vld [vmem:[#allocation2 + $0x174] sm:$0xf]
      %v2225 = vld [vmem:[#allocation2 + $0x178] sm:$0xf]
      %v2226 = vld [vmem:[#allocation2 + $0x17c] sm:$0xf]
      %v2227 = vld [vmem:[#allocation2 + $0x180] sm:$0xf]
      %v2228 = vld [vmem:[#allocation2 + $0x184] sm:$0xf]
      %v2229 = vld [vmem:[#allocation2 + $0x188] sm:$0xf]
      %v2230 = vld [vmem:[#allocation2 + $0x18c] sm:$0xf]
      %v2231 = vld [vmem:[#allocation2 + $0x190] sm:$0xf]
      %v2232 = vld [vmem:[#allocation2 + $0x194] sm:$0xf]
      %v2233 = vld [vmem:[#allocation2 + $0x198] sm:$0xf]
      %v2234 = vld [vmem:[#allocation2 + $0x19c] sm:$0xf]
      %v2235 = vld [vmem:[#allocation2 + $0x1a0] sm:$0xf]
      %v2236 = vld [vmem:[#allocation2 + $0x1a4] sm:$0xf]
      %v2237 = vld [vmem:[#allocation2 + $0x1a8] sm:$0xf]
      %v2238 = vld [vmem:[#allocation2 + $0x1ac] sm:$0xf]
      %v2239 = vld [vmem:[#allocation2 + $0x1b0] sm:$0xf]
      %v2240 = vld [vmem:[#allocation2 + $0x1b4] sm:$0xf]
      %v2241 = vld [vmem:[#allocation2 + $0x1b8] sm:$0xf]
      %v2242 = vld [vmem:[#allocation2 + $0x1bc] sm:$0xf]
      %v2243 = vld [vmem:[#allocation2 + $0x1c0] sm:$0xf]
      %v2244 = vld [vmem:[#allocation2 + $0x1c4] sm:$0xf]
      %v2245 = vld [vmem:[#allocation2 + $0x1c8] sm:$0xf]
      %v2246 = vld [vmem:[#allocation2 + $0x1cc] sm:$0xf]
      %v2247 = vld [vmem:[#allocation2 + $0x1d0] sm:$0xf]
      %v2248 = vld [vmem:[#allocation2 + $0x1d4] sm:$0xf]
      %v2249 = vld [vmem:[#allocation2 + $0x1d8] sm:$0xf]
      %v2250 = vld [vmem:[#allocation2 + $0x1dc] sm:$0xf]
      %v2251 = vld [vmem:[#allocation2 + $0x1e0] sm:$0xf]
      %v2252 = vld [vmem:[#allocation2 + $0x1e4] sm:$0xf]
      %v2253 = vld [vmem:[#allocation2 + $0x1e8] sm:$0xf]
      %v2254 = vld [vmem:[#allocation2 + $0x1ec] sm:$0xf]
      %v2255 = vld [vmem:[#allocation2 + $0x1f0] sm:$0xf]
      %v2256 = vld [vmem:[#allocation2 + $0x1f4] sm:$0xf]
      %v2257 = vld [vmem:[#allocation2 + $0x1f8] sm:$0xf]
      %v2258 = vld [vmem:[#allocation2 + $0x1fc] sm:$0xf]
      %v2515 = vunpack.c.l.b16 %v1875
      %v2516 = vunpack.c.h.b16 %v1875
      %v2517 = vunpack.c.l.b16 %v1876
      %v2518 = vunpack.c.h.b16 %v1876
      %v2519 = vunpack.c.l.b16 %v1877
      %v2520 = vunpack.c.h.b16 %v1877
      %v2521 = vunpack.c.l.b16 %v1878
      %v2522 = vunpack.c.h.b16 %v1878
      %v2523 = vunpack.c.l.b16 %v1879
      %v2524 = vunpack.c.h.b16 %v1879
      %v2525 = vunpack.c.l.b16 %v1880
      %v2526 = vunpack.c.h.b16 %v1880
      %v2527 = vunpack.c.l.b16 %v1881
      %v2528 = vunpack.c.h.b16 %v1881
      %v2529 = vunpack.c.l.b16 %v1882
      %v2530 = vunpack.c.h.b16 %v1882
      %v2531 = vunpack.c.l.b16 %v1883
      %v2532 = vunpack.c.h.b16 %v1883
      %v2533 = vunpack.c.l.b16 %v1884
      %v2534 = vunpack.c.h.b16 %v1884
      %v2535 = vunpack.c.l.b16 %v1885
      %v2536 = vunpack.c.h.b16 %v1885
      %v2537 = vunpack.c.l.b16 %v1886
      %v2538 = vunpack.c.h.b16 %v1886
      %v2539 = vunpack.c.l.b16 %v1887
      %v2540 = vunpack.c.h.b16 %v1887
      %v2541 = vunpack.c.l.b16 %v1888
      %v2542 = vunpack.c.h.b16 %v1888
      %v2543 = vunpack.c.l.b16 %v1889
      %v2544 = vunpack.c.h.b16 %v1889
      %v2545 = vunpack.c.l.b16 %v1890
      %v2546 = vunpack.c.h.b16 %v1890
      %v2547 = vunpack.c.l.b16 %v1891
      %v2548 = vunpack.c.h.b16 %v1891
      %v2549 = vunpack.c.l.b16 %v1892
      %v2550 = vunpack.c.h.b16 %v1892
      %v2551 = vunpack.c.l.b16 %v1893
      %v2552 = vunpack.c.h.b16 %v1893
      %v2553 = vunpack.c.l.b16 %v1894
      %v2554 = vunpack.c.h.b16 %v1894
      %v2555 = vunpack.c.l.b16 %v1895
      %v2556 = vunpack.c.h.b16 %v1895
      %v2557 = vunpack.c.l.b16 %v1896
      %v2558 = vunpack.c.h.b16 %v1896
      %v2559 = vunpack.c.l.b16 %v1897
      %v2560 = vunpack.c.h.b16 %v1897
      %v2561 = vunpack.c.l.b16 %v1898
      %v2562 = vunpack.c.h.b16 %v1898
      %v2563 = vunpack.c.l.b16 %v1899
      %v2564 = vunpack.c.h.b16 %v1899
      %v2565 = vunpack.c.l.b16 %v1900
      %v2566 = vunpack.c.h.b16 %v1900
      %v2567 = vunpack.c.l.b16 %v1901
      %v2568 = vunpack.c.h.b16 %v1901
      %v2569 = vunpack.c.l.b16 %v1902
      %v2570 = vunpack.c.h.b16 %v1902
      %v2571 = vunpack.c.l.b16 %v1903
      %v2572 = vunpack.c.h.b16 %v1903
      %v2573 = vunpack.c.l.b16 %v1904
      %v2574 = vunpack.c.h.b16 %v1904
      %v2575 = vunpack.c.l.b16 %v1905
      %v2576 = vunpack.c.h.b16 %v1905
      %v2577 = vunpack.c.l.b16 %v1906
      %v2578 = vunpack.c.h.b16 %v1906
      %v2579 = vunpack.c.l.b16 %v1907
      %v2580 = vunpack.c.h.b16 %v1907
      %v2581 = vunpack.c.l.b16 %v1908
      %v2582 = vunpack.c.h.b16 %v1908
      %v2583 = vunpack.c.l.b16 %v1909
      %v2584 = vunpack.c.h.b16 %v1909
      %v2585 = vunpack.c.l.b16 %v1910
      %v2586 = vunpack.c.h.b16 %v1910
      %v2587 = vunpack.c.l.b16 %v1911
      %v2588 = vunpack.c.h.b16 %v1911
      %v2589 = vunpack.c.l.b16 %v1912
      %v2590 = vunpack.c.h.b16 %v1912
      %v2591 = vunpack.c.l.b16 %v1913
      %v2592 = vunpack.c.h.b16 %v1913
      %v2593 = vunpack.c.l.b16 %v1914
      %v2594 = vunpack.c.h.b16 %v1914
      %v2595 = vunpack.c.l.b16 %v1915
      %v2596 = vunpack.c.h.b16 %v1915
      %v2597 = vunpack.c.l.b16 %v1916
      %v2598 = vunpack.c.h.b16 %v1916
      %v2599 = vunpack.c.l.b16 %v1917
      %v2600 = vunpack.c.h.b16 %v1917
      %v2601 = vunpack.c.l.b16 %v1918
      %v2602 = vunpack.c.h.b16 %v1918
      %v2603 = vunpack.c.l.b16 %v1919
      %v2604 = vunpack.c.h.b16 %v1919
      %v2605 = vunpack.c.l.b16 %v1920
      %v2606 = vunpack.c.h.b16 %v1920
      %v2607 = vunpack.c.l.b16 %v1921
      %v2608 = vunpack.c.h.b16 %v1921
      %v2609 = vunpack.c.l.b16 %v1922
      %v2610 = vunpack.c.h.b16 %v1922
      %v2611 = vunpack.c.l.b16 %v1923
      %v2612 = vunpack.c.h.b16 %v1923
      %v2613 = vunpack.c.l.b16 %v1924
      %v2614 = vunpack.c.h.b16 %v1924
      %v2615 = vunpack.c.l.b16 %v1925
      %v2616 = vunpack.c.h.b16 %v1925
      %v2617 = vunpack.c.l.b16 %v1926
      %v2618 = vunpack.c.h.b16 %v1926
      %v2619 = vunpack.c.l.b16 %v1927
      %v2620 = vunpack.c.h.b16 %v1927
      %v2621 = vunpack.c.l.b16 %v1928
      %v2622 = vunpack.c.h.b16 %v1928
      %v2623 = vunpack.c.l.b16 %v1929
      %v2624 = vunpack.c.h.b16 %v1929
      %v2625 = vunpack.c.l.b16 %v1930
      %v2626 = vunpack.c.h.b16 %v1930
      %v2627 = vunpack.c.l.b16 %v1931
      %v2628 = vunpack.c.h.b16 %v1931
      %v2629 = vunpack.c.l.b16 %v1932
      %v2630 = vunpack.c.h.b16 %v1932
      %v2631 = vunpack.c.l.b16 %v1933
      %v2632 = vunpack.c.h.b16 %v1933
      %v2633 = vunpack.c.l.b16 %v1934
      %v2634 = vunpack.c.h.b16 %v1934
      %v2635 = vunpack.c.l.b16 %v1935
      %v2636 = vunpack.c.h.b16 %v1935
      %v2637 = vunpack.c.l.b16 %v1936
      %v2638 = vunpack.c.h.b16 %v1936
      %v2639 = vunpack.c.l.b16 %v1937
      %v2640 = vunpack.c.h.b16 %v1937
      %v2641 = vunpack.c.l.b16 %v1938
      %v2642 = vunpack.c.h.b16 %v1938
      %v2643 = vunpack.c.l.b16 %v1939
      %v2644 = vunpack.c.h.b16 %v1939
      %v2645 = vunpack.c.l.b16 %v1940
      %v2646 = vunpack.c.h.b16 %v1940
      %v2647 = vunpack.c.l.b16 %v1941
      %v2648 = vunpack.c.h.b16 %v1941
      %v2649 = vunpack.c.l.b16 %v1942
      %v2650 = vunpack.c.h.b16 %v1942
      %v2651 = vunpack.c.l.b16 %v1943
      %v2652 = vunpack.c.h.b16 %v1943
      %v2653 = vunpack.c.l.b16 %v1944
      %v2654 = vunpack.c.h.b16 %v1944
      %v2655 = vunpack.c.l.b16 %v1945
      %v2656 = vunpack.c.h.b16 %v1945
      %v2657 = vunpack.c.l.b16 %v1946
      %v2658 = vunpack.c.h.b16 %v1946
      %v2659 = vunpack.c.l.b16 %v1947
      %v2660 = vunpack.c.h.b16 %v1947
      %v2661 = vunpack.c.l.b16 %v1948
      %v2662 = vunpack.c.h.b16 %v1948
      %v2663 = vunpack.c.l.b16 %v1949
      %v2664 = vunpack.c.h.b16 %v1949
      %v2665 = vunpack.c.l.b16 %v1950
      %v2666 = vunpack.c.h.b16 %v1950
      %v2667 = vunpack.c.l.b16 %v1951
      %v2668 = vunpack.c.h.b16 %v1951
      %v2669 = vunpack.c.l.b16 %v1952
      %v2670 = vunpack.c.h.b16 %v1952
      %v2671 = vunpack.c.l.b16 %v1953
      %v2672 = vunpack.c.h.b16 %v1953
      %v2673 = vunpack.c.l.b16 %v1954
      %v2674 = vunpack.c.h.b16 %v1954
      %v2675 = vunpack.c.l.b16 %v1955
      %v2676 = vunpack.c.h.b16 %v1955
      %v2677 = vunpack.c.l.b16 %v1956
      %v2678 = vunpack.c.h.b16 %v1956
      %v2679 = vunpack.c.l.b16 %v1957
      %v2680 = vunpack.c.h.b16 %v1957
      %v2681 = vunpack.c.l.b16 %v1958
      %v2682 = vunpack.c.h.b16 %v1958
      %v2683 = vunpack.c.l.b16 %v1959
      %v2684 = vunpack.c.h.b16 %v1959
      %v2685 = vunpack.c.l.b16 %v1960
      %v2686 = vunpack.c.h.b16 %v1960
      %v2687 = vunpack.c.l.b16 %v1961
      %v2688 = vunpack.c.h.b16 %v1961
      %v2689 = vunpack.c.l.b16 %v1962
      %v2690 = vunpack.c.h.b16 %v1962
      %v2691 = vunpack.c.l.b16 %v1963
      %v2692 = vunpack.c.h.b16 %v1963
      %v2693 = vunpack.c.l.b16 %v1964
      %v2694 = vunpack.c.h.b16 %v1964
      %v2695 = vunpack.c.l.b16 %v1965
      %v2696 = vunpack.c.h.b16 %v1965
      %v2697 = vunpack.c.l.b16 %v1966
      %v2698 = vunpack.c.h.b16 %v1966
      %v2699 = vunpack.c.l.b16 %v1967
      %v2700 = vunpack.c.h.b16 %v1967
      %v2701 = vunpack.c.l.b16 %v1968
      %v2702 = vunpack.c.h.b16 %v1968
      %v2703 = vunpack.c.l.b16 %v1969
      %v2704 = vunpack.c.h.b16 %v1969
      %v2705 = vunpack.c.l.b16 %v1970
      %v2706 = vunpack.c.h.b16 %v1970
      %v2707 = vunpack.c.l.b16 %v1971
      %v2708 = vunpack.c.h.b16 %v1971
      %v2709 = vunpack.c.l.b16 %v1972
      %v2710 = vunpack.c.h.b16 %v1972
      %v2711 = vunpack.c.l.b16 %v1973
      %v2712 = vunpack.c.h.b16 %v1973
      %v2713 = vunpack.c.l.b16 %v1974
      %v2714 = vunpack.c.h.b16 %v1974
      %v2715 = vunpack.c.l.b16 %v1975
      %v2716 = vunpack.c.h.b16 %v1975
      %v2717 = vunpack.c.l.b16 %v1976
      %v2718 = vunpack.c.h.b16 %v1976
      %v2719 = vunpack.c.l.b16 %v1977
      %v2720 = vunpack.c.h.b16 %v1977
      %v2721 = vunpack.c.l.b16 %v1978
      %v2722 = vunpack.c.h.b16 %v1978
      %v2723 = vunpack.c.l.b16 %v1979
      %v2724 = vunpack.c.h.b16 %v1979
      %v2725 = vunpack.c.l.b16 %v1980
      %v2726 = vunpack.c.h.b16 %v1980
      %v2727 = vunpack.c.l.b16 %v1981
      %v2728 = vunpack.c.h.b16 %v1981
      %v2729 = vunpack.c.l.b16 %v1982
      %v2730 = vunpack.c.h.b16 %v1982
      %v2731 = vunpack.c.l.b16 %v1983
      %v2732 = vunpack.c.h.b16 %v1983
      %v2733 = vunpack.c.l.b16 %v1984
      %v2734 = vunpack.c.h.b16 %v1984
      %v2735 = vunpack.c.l.b16 %v1985
      %v2736 = vunpack.c.h.b16 %v1985
      %v2737 = vunpack.c.l.b16 %v1986
      %v2738 = vunpack.c.h.b16 %v1986
      %v2739 = vunpack.c.l.b16 %v1987
      %v2740 = vunpack.c.h.b16 %v1987
      %v2741 = vunpack.c.l.b16 %v1988
      %v2742 = vunpack.c.h.b16 %v1988
      %v2743 = vunpack.c.l.b16 %v1989
      %v2744 = vunpack.c.h.b16 %v1989
      %v2745 = vunpack.c.l.b16 %v1990
      %v2746 = vunpack.c.h.b16 %v1990
      %v2747 = vunpack.c.l.b16 %v1991
      %v2748 = vunpack.c.h.b16 %v1991
      %v2749 = vunpack.c.l.b16 %v1992
      %v2750 = vunpack.c.h.b16 %v1992
      %v2751 = vunpack.c.l.b16 %v1993
      %v2752 = vunpack.c.h.b16 %v1993
      %v2753 = vunpack.c.l.b16 %v1994
      %v2754 = vunpack.c.h.b16 %v1994
      %v2755 = vunpack.c.l.b16 %v1995
      %v2756 = vunpack.c.h.b16 %v1995
      %v2757 = vunpack.c.l.b16 %v1996
      %v2758 = vunpack.c.h.b16 %v1996
      %v2759 = vunpack.c.l.b16 %v1997
      %v2760 = vunpack.c.h.b16 %v1997
      %v2761 = vunpack.c.l.b16 %v1998
      %v2762 = vunpack.c.h.b16 %v1998
      %v2763 = vunpack.c.l.b16 %v1999
      %v2764 = vunpack.c.h.b16 %v1999
      %v2765 = vunpack.c.l.b16 %v2000
      %v2766 = vunpack.c.h.b16 %v2000
      %v2767 = vunpack.c.l.b16 %v2001
      %v2768 = vunpack.c.h.b16 %v2001
      %v2769 = vunpack.c.l.b16 %v2002
      %v2770 = vunpack.c.h.b16 %v2002
      %v2771 = vunpack.c.l.b16 %v2003
      %v2772 = vunpack.c.h.b16 %v2003
      %v2773 = vunpack.c.l.b16 %v2004
      %v2774 = vunpack.c.h.b16 %v2004
      %v2775 = vunpack.c.l.b16 %v2005
      %v2776 = vunpack.c.h.b16 %v2005
      %v2777 = vunpack.c.l.b16 %v2006
      %v2778 = vunpack.c.h.b16 %v2006
      %v2779 = vunpack.c.l.b16 %v2007
      %v2780 = vunpack.c.h.b16 %v2007
      %v2781 = vunpack.c.l.b16 %v2008
      %v2782 = vunpack.c.h.b16 %v2008
      %v2783 = vunpack.c.l.b16 %v2009
      %v2784 = vunpack.c.h.b16 %v2009
      %v2785 = vunpack.c.l.b16 %v2010
      %v2786 = vunpack.c.h.b16 %v2010
      %v2787 = vunpack.c.l.b16 %v2011
      %v2788 = vunpack.c.h.b16 %v2011
      %v2789 = vunpack.c.l.b16 %v2012
      %v2790 = vunpack.c.h.b16 %v2012
      %v2791 = vunpack.c.l.b16 %v2013
      %v2792 = vunpack.c.h.b16 %v2013
      %v2793 = vunpack.c.l.b16 %v2014
      %v2794 = vunpack.c.h.b16 %v2014
      %v2795 = vunpack.c.l.b16 %v2015
      %v2796 = vunpack.c.h.b16 %v2015
      %v2797 = vunpack.c.l.b16 %v2016
      %v2798 = vunpack.c.h.b16 %v2016
      %v2799 = vunpack.c.l.b16 %v2017
      %v2800 = vunpack.c.h.b16 %v2017
      %v2801 = vunpack.c.l.b16 %v2018
      %v2802 = vunpack.c.h.b16 %v2018
      %v2803 = vunpack.c.l.b16 %v2019
      %v2804 = vunpack.c.h.b16 %v2019
      %v2805 = vunpack.c.l.b16 %v2020
      %v2806 = vunpack.c.h.b16 %v2020
      %v2807 = vunpack.c.l.b16 %v2021
      %v2808 = vunpack.c.h.b16 %v2021
      %v2809 = vunpack.c.l.b16 %v2022
      %v2810 = vunpack.c.h.b16 %v2022
      %v2811 = vunpack.c.l.b16 %v2023
      %v2812 = vunpack.c.h.b16 %v2023
      %v2813 = vunpack.c.l.b16 %v2024
      %v2814 = vunpack.c.h.b16 %v2024
      %v2815 = vunpack.c.l.b16 %v2025
      %v2816 = vunpack.c.h.b16 %v2025
      %v2817 = vunpack.c.l.b16 %v2026
      %v2818 = vunpack.c.h.b16 %v2026
      %v2819 = vunpack.c.l.b16 %v2027
      %v2820 = vunpack.c.h.b16 %v2027
      %v2821 = vunpack.c.l.b16 %v2028
      %v2822 = vunpack.c.h.b16 %v2028
      %v2823 = vunpack.c.l.b16 %v2029
      %v2824 = vunpack.c.h.b16 %v2029
      %v2825 = vunpack.c.l.b16 %v2030
      %v2826 = vunpack.c.h.b16 %v2030
      %v2827 = vunpack.c.l.b16 %v2031
      %v2828 = vunpack.c.h.b16 %v2031
      %v2829 = vunpack.c.l.b16 %v2032
      %v2830 = vunpack.c.h.b16 %v2032
      %v2831 = vunpack.c.l.b16 %v2033
      %v2832 = vunpack.c.h.b16 %v2033
      %v2833 = vunpack.c.l.b16 %v2034
      %v2834 = vunpack.c.h.b16 %v2034
      %v2835 = vunpack.c.l.b16 %v2035
      %v2836 = vunpack.c.h.b16 %v2035
      %v2837 = vunpack.c.l.b16 %v2036
      %v2838 = vunpack.c.h.b16 %v2036
      %v2839 = vunpack.c.l.b16 %v2037
      %v2840 = vunpack.c.h.b16 %v2037
      %v2841 = vunpack.c.l.b16 %v2038
      %v2842 = vunpack.c.h.b16 %v2038
      %v2843 = vunpack.c.l.b16 %v2039
      %v2844 = vunpack.c.h.b16 %v2039
      %v2845 = vunpack.c.l.b16 %v2040
      %v2846 = vunpack.c.h.b16 %v2040
      %v2847 = vunpack.c.l.b16 %v2041
      %v2848 = vunpack.c.h.b16 %v2041
      %v2849 = vunpack.c.l.b16 %v2042
      %v2850 = vunpack.c.h.b16 %v2042
      %v2851 = vunpack.c.l.b16 %v2043
      %v2852 = vunpack.c.h.b16 %v2043
      %v2853 = vunpack.c.l.b16 %v2044
      %v2854 = vunpack.c.h.b16 %v2044
      %v2855 = vunpack.c.l.b16 %v2045
      %v2856 = vunpack.c.h.b16 %v2045
      %v2857 = vunpack.c.l.b16 %v2046
      %v2858 = vunpack.c.h.b16 %v2046
      %v2859 = vunpack.c.l.b16 %v2047
      %v2860 = vunpack.c.h.b16 %v2047
      %v2861 = vunpack.c.l.b16 %v2048
      %v2862 = vunpack.c.h.b16 %v2048
      %v2863 = vunpack.c.l.b16 %v2049
      %v2864 = vunpack.c.h.b16 %v2049
      %v2865 = vunpack.c.l.b16 %v2050
      %v2866 = vunpack.c.h.b16 %v2050
      %v2867 = vunpack.c.l.b16 %v2051
      %v2868 = vunpack.c.h.b16 %v2051
      %v2869 = vunpack.c.l.b16 %v2052
      %v2870 = vunpack.c.h.b16 %v2052
      %v2871 = vunpack.c.l.b16 %v2053
      %v2872 = vunpack.c.h.b16 %v2053
      %v2873 = vunpack.c.l.b16 %v2054
      %v2874 = vunpack.c.h.b16 %v2054
      %v2875 = vunpack.c.l.b16 %v2055
      %v2876 = vunpack.c.h.b16 %v2055
      %v2877 = vunpack.c.l.b16 %v2056
      %v2878 = vunpack.c.h.b16 %v2056
      %v2879 = vunpack.c.l.b16 %v2057
      %v2880 = vunpack.c.h.b16 %v2057
      %v2881 = vunpack.c.l.b16 %v2058
      %v2882 = vunpack.c.h.b16 %v2058
      %v2883 = vunpack.c.l.b16 %v2059
      %v2884 = vunpack.c.h.b16 %v2059
      %v2885 = vunpack.c.l.b16 %v2060
      %v2886 = vunpack.c.h.b16 %v2060
      %v2887 = vunpack.c.l.b16 %v2061
      %v2888 = vunpack.c.h.b16 %v2061
      %v2889 = vunpack.c.l.b16 %v2062
      %v2890 = vunpack.c.h.b16 %v2062
      %v2891 = vunpack.c.l.b16 %v2063
      %v2892 = vunpack.c.h.b16 %v2063
      %v2893 = vunpack.c.l.b16 %v2064
      %v2894 = vunpack.c.h.b16 %v2064
      %v2895 = vunpack.c.l.b16 %v2065
      %v2896 = vunpack.c.h.b16 %v2065
      %v2897 = vunpack.c.l.b16 %v2066
      %v2898 = vunpack.c.h.b16 %v2066
      %v2899 = vunpack.c.l.b16 %v2067
      %v2900 = vunpack.c.h.b16 %v2067
      %v2901 = vunpack.c.l.b16 %v2068
      %v2902 = vunpack.c.h.b16 %v2068
      %v2903 = vunpack.c.l.b16 %v2069
      %v2904 = vunpack.c.h.b16 %v2069
      %v2905 = vunpack.c.l.b16 %v2070
      %v2906 = vunpack.c.h.b16 %v2070
      %v2907 = vunpack.c.l.b16 %v2071
      %v2908 = vunpack.c.h.b16 %v2071
      %v2909 = vunpack.c.l.b16 %v2072
      %v2910 = vunpack.c.h.b16 %v2072
      %v2911 = vunpack.c.l.b16 %v2073
      %v2912 = vunpack.c.h.b16 %v2073
      %v2913 = vunpack.c.l.b16 %v2074
      %v2914 = vunpack.c.h.b16 %v2074
      %v2915 = vunpack.c.l.b16 %v2075
      %v2916 = vunpack.c.h.b16 %v2075
      %v2917 = vunpack.c.l.b16 %v2076
      %v2918 = vunpack.c.h.b16 %v2076
      %v2919 = vunpack.c.l.b16 %v2077
      %v2920 = vunpack.c.h.b16 %v2077
      %v2921 = vunpack.c.l.b16 %v2078
      %v2922 = vunpack.c.h.b16 %v2078
      %v2923 = vunpack.c.l.b16 %v2079
      %v2924 = vunpack.c.h.b16 %v2079
      %v2925 = vunpack.c.l.b16 %v2080
      %v2926 = vunpack.c.h.b16 %v2080
      %v2927 = vunpack.c.l.b16 %v2081
      %v2928 = vunpack.c.h.b16 %v2081
      %v2929 = vunpack.c.l.b16 %v2082
      %v2930 = vunpack.c.h.b16 %v2082
      %v2931 = vunpack.c.l.b16 %v2083
      %v2932 = vunpack.c.h.b16 %v2083
      %v2933 = vunpack.c.l.b16 %v2084
      %v2934 = vunpack.c.h.b16 %v2084
      %v2935 = vunpack.c.l.b16 %v2085
      %v2936 = vunpack.c.h.b16 %v2085
      %v2937 = vunpack.c.l.b16 %v2086
      %v2938 = vunpack.c.h.b16 %v2086
      %v2939 = vunpack.c.l.b16 %v2087
      %v2940 = vunpack.c.h.b16 %v2087
      %v2941 = vunpack.c.l.b16 %v2088
      %v2942 = vunpack.c.h.b16 %v2088
      %v2943 = vunpack.c.l.b16 %v2089
      %v2944 = vunpack.c.h.b16 %v2089
      %v2945 = vunpack.c.l.b16 %v2090
      %v2946 = vunpack.c.h.b16 %v2090
      %v2947 = vunpack.c.l.b16 %v2091
      %v2948 = vunpack.c.h.b16 %v2091
      %v2949 = vunpack.c.l.b16 %v2092
      %v2950 = vunpack.c.h.b16 %v2092
      %v2951 = vunpack.c.l.b16 %v2093
      %v2952 = vunpack.c.h.b16 %v2093
      %v2953 = vunpack.c.l.b16 %v2094
      %v2954 = vunpack.c.h.b16 %v2094
      %v2955 = vunpack.c.l.b16 %v2095
      %v2956 = vunpack.c.h.b16 %v2095
      %v2957 = vunpack.c.l.b16 %v2096
      %v2958 = vunpack.c.h.b16 %v2096
      %v2959 = vunpack.c.l.b16 %v2097
      %v2960 = vunpack.c.h.b16 %v2097
      %v2961 = vunpack.c.l.b16 %v2098
      %v2962 = vunpack.c.h.b16 %v2098
      %v2963 = vunpack.c.l.b16 %v2099
      %v2964 = vunpack.c.h.b16 %v2099
      %v2965 = vunpack.c.l.b16 %v2100
      %v2966 = vunpack.c.h.b16 %v2100
      %v2967 = vunpack.c.l.b16 %v2101
      %v2968 = vunpack.c.h.b16 %v2101
      %v2969 = vunpack.c.l.b16 %v2102
      %v2970 = vunpack.c.h.b16 %v2102
      %v2971 = vunpack.c.l.b16 %v2103
      %v2972 = vunpack.c.h.b16 %v2103
      %v2973 = vunpack.c.l.b16 %v2104
      %v2974 = vunpack.c.h.b16 %v2104
      %v2975 = vunpack.c.l.b16 %v2105
      %v2976 = vunpack.c.h.b16 %v2105
      %v2977 = vunpack.c.l.b16 %v2106
      %v2978 = vunpack.c.h.b16 %v2106
      %v2979 = vunpack.c.l.b16 %v2107
      %v2980 = vunpack.c.h.b16 %v2107
      %v2981 = vunpack.c.l.b16 %v2108
      %v2982 = vunpack.c.h.b16 %v2108
      %v2983 = vunpack.c.l.b16 %v2109
      %v2984 = vunpack.c.h.b16 %v2109
      %v2985 = vunpack.c.l.b16 %v2110
      %v2986 = vunpack.c.h.b16 %v2110
      %v2987 = vunpack.c.l.b16 %v2111
      %v2988 = vunpack.c.h.b16 %v2111
      %v2989 = vunpack.c.l.b16 %v2112
      %v2990 = vunpack.c.h.b16 %v2112
      %v2991 = vunpack.c.l.b16 %v2113
      %v2992 = vunpack.c.h.b16 %v2113
      %v2993 = vunpack.c.l.b16 %v2114
      %v2994 = vunpack.c.h.b16 %v2114
      %v2995 = vunpack.c.l.b16 %v2115
      %v2996 = vunpack.c.h.b16 %v2115
      %v2997 = vunpack.c.l.b16 %v2116
      %v2998 = vunpack.c.h.b16 %v2116
      %v2999 = vunpack.c.l.b16 %v2117
      %v3000 = vunpack.c.h.b16 %v2117
      %v3001 = vunpack.c.l.b16 %v2118
      %v3002 = vunpack.c.h.b16 %v2118
      %v3003 = vunpack.c.l.b16 %v2119
      %v3004 = vunpack.c.h.b16 %v2119
      %v3005 = vunpack.c.l.b16 %v2120
      %v3006 = vunpack.c.h.b16 %v2120
      %v3007 = vunpack.c.l.b16 %v2121
      %v3008 = vunpack.c.h.b16 %v2121
      %v3009 = vunpack.c.l.b16 %v2122
      %v3010 = vunpack.c.h.b16 %v2122
      %v3011 = vunpack.c.l.b16 %v2123
      %v3012 = vunpack.c.h.b16 %v2123
      %v3013 = vunpack.c.l.b16 %v2124
      %v3014 = vunpack.c.h.b16 %v2124
      %v3015 = vunpack.c.l.b16 %v2125
      %v3016 = vunpack.c.h.b16 %v2125
      %v3017 = vunpack.c.l.b16 %v2126
      %v3018 = vunpack.c.h.b16 %v2126
      %v3019 = vunpack.c.l.b16 %v2127
      %v3020 = vunpack.c.h.b16 %v2127
      %v3021 = vunpack.c.l.b16 %v2128
      %v3022 = vunpack.c.h.b16 %v2128
      %v3023 = vunpack.c.l.b16 %v2129
      %v3024 = vunpack.c.h.b16 %v2129
      %v3025 = vunpack.c.l.b16 %v2130
      %v3026 = vunpack.c.h.b16 %v2130
      %v3027 = vpack.c.b16 %v2523, %v2515
      %v3028 = vpack.c.b16 %v2524, %v2516
      %v3029 = vpack.c.b16 %v2525, %v2517
      %v3030 = vpack.c.b16 %v2526, %v2518
      %v3031 = vpack.c.b16 %v2527, %v2519
      %v3032 = vpack.c.b16 %v2528, %v2520
      %v3033 = vpack.c.b16 %v2529, %v2521
      %v3034 = vpack.c.b16 %v2530, %v2522
      %v3035 = vpack.c.b16 %v2539, %v2531
      %v3036 = vpack.c.b16 %v2540, %v2532
      %v3037 = vpack.c.b16 %v2541, %v2533
      %v3038 = vpack.c.b16 %v2542, %v2534
      %v3039 = vpack.c.b16 %v2543, %v2535
      %v3040 = vpack.c.b16 %v2544, %v2536
      %v3041 = vpack.c.b16 %v2545, %v2537
      %v3042 = vpack.c.b16 %v2546, %v2538
      %v3043 = vpack.c.b16 %v2555, %v2547
      %v3044 = vpack.c.b16 %v2556, %v2548
      %v3045 = vpack.c.b16 %v2557, %v2549
      %v3046 = vpack.c.b16 %v2558, %v2550
      %v3047 = vpack.c.b16 %v2559, %v2551
      %v3048 = vpack.c.b16 %v2560, %v2552
      %v3049 = vpack.c.b16 %v2561, %v2553
      %v3050 = vpack.c.b16 %v2562, %v2554
      %v3051 = vpack.c.b16 %v2571, %v2563
      %v3052 = vpack.c.b16 %v2572, %v2564
      %v3053 = vpack.c.b16 %v2573, %v2565
      %v3054 = vpack.c.b16 %v2574, %v2566
      %v3055 = vpack.c.b16 %v2575, %v2567
      %v3056 = vpack.c.b16 %v2576, %v2568
      %v3057 = vpack.c.b16 %v2577, %v2569
      %v3058 = vpack.c.b16 %v2578, %v2570
      %v3059 = vpack.c.b16 %v2587, %v2579
      %v3060 = vpack.c.b16 %v2588, %v2580
      %v3061 = vpack.c.b16 %v2589, %v2581
      %v3062 = vpack.c.b16 %v2590, %v2582
      %v3063 = vpack.c.b16 %v2591, %v2583
      %v3064 = vpack.c.b16 %v2592, %v2584
      %v3065 = vpack.c.b16 %v2593, %v2585
      %v3066 = vpack.c.b16 %v2594, %v2586
      %v3067 = vpack.c.b16 %v2603, %v2595
      %v3068 = vpack.c.b16 %v2604, %v2596
      %v3069 = vpack.c.b16 %v2605, %v2597
      %v3070 = vpack.c.b16 %v2606, %v2598
      %v3071 = vpack.c.b16 %v2607, %v2599
      %v3072 = vpack.c.b16 %v2608, %v2600
      %v3073 = vpack.c.b16 %v2609, %v2601
      %v3074 = vpack.c.b16 %v2610, %v2602
      %v3075 = vpack.c.b16 %v2619, %v2611
      %v3076 = vpack.c.b16 %v2620, %v2612
      %v3077 = vpack.c.b16 %v2621, %v2613
      %v3078 = vpack.c.b16 %v2622, %v2614
      %v3079 = vpack.c.b16 %v2623, %v2615
      %v3080 = vpack.c.b16 %v2624, %v2616
      %v3081 = vpack.c.b16 %v2625, %v2617
      %v3082 = vpack.c.b16 %v2626, %v2618
      %v3083 = vpack.c.b16 %v2635, %v2627
      %v3084 = vpack.c.b16 %v2636, %v2628
      %v3085 = vpack.c.b16 %v2637, %v2629
      %v3086 = vpack.c.b16 %v2638, %v2630
      %v3087 = vpack.c.b16 %v2639, %v2631
      %v3088 = vpack.c.b16 %v2640, %v2632
      %v3089 = vpack.c.b16 %v2641, %v2633
      %v3090 = vpack.c.b16 %v2642, %v2634
      %v3091 = vpack.c.b16 %v2651, %v2643
      %v3092 = vpack.c.b16 %v2652, %v2644
      %v3093 = vpack.c.b16 %v2653, %v2645
      %v3094 = vpack.c.b16 %v2654, %v2646
      %v3095 = vpack.c.b16 %v2655, %v2647
      %v3096 = vpack.c.b16 %v2656, %v2648
      %v3097 = vpack.c.b16 %v2657, %v2649
      %v3098 = vpack.c.b16 %v2658, %v2650
      %v3099 = vpack.c.b16 %v2667, %v2659
      %v3100 = vpack.c.b16 %v2668, %v2660
      %v3101 = vpack.c.b16 %v2669, %v2661
      %v3102 = vpack.c.b16 %v2670, %v2662
      %v3103 = vpack.c.b16 %v2671, %v2663
      %v3104 = vpack.c.b16 %v2672, %v2664
      %v3105 = vpack.c.b16 %v2673, %v2665
      %v3106 = vpack.c.b16 %v2674, %v2666
      %v3107 = vpack.c.b16 %v2683, %v2675
      %v3108 = vpack.c.b16 %v2684, %v2676
      %v3109 = vpack.c.b16 %v2685, %v2677
      %v3110 = vpack.c.b16 %v2686, %v2678
      %v3111 = vpack.c.b16 %v2687, %v2679
      %v3112 = vpack.c.b16 %v2688, %v2680
      %v3113 = vpack.c.b16 %v2689, %v2681
      %v3114 = vpack.c.b16 %v2690, %v2682
      %v3115 = vpack.c.b16 %v2699, %v2691
      %v3116 = vpack.c.b16 %v2700, %v2692
      %v3117 = vpack.c.b16 %v2701, %v2693
      %v3118 = vpack.c.b16 %v2702, %v2694
      %v3119 = vpack.c.b16 %v2703, %v2695
      %v3120 = vpack.c.b16 %v2704, %v2696
      %v3121 = vpack.c.b16 %v2705, %v2697
      %v3122 = vpack.c.b16 %v2706, %v2698
      %v3123 = vpack.c.b16 %v2715, %v2707
      %v3124 = vpack.c.b16 %v2716, %v2708
      %v3125 = vpack.c.b16 %v2717, %v2709
      %v3126 = vpack.c.b16 %v2718, %v2710
      %v3127 = vpack.c.b16 %v2719, %v2711
      %v3128 = vpack.c.b16 %v2720, %v2712
      %v3129 = vpack.c.b16 %v2721, %v2713
      %v3130 = vpack.c.b16 %v2722, %v2714
      %v3131 = vpack.c.b16 %v2731, %v2723
      %v3132 = vpack.c.b16 %v2732, %v2724
      %v3133 = vpack.c.b16 %v2733, %v2725
      %v3134 = vpack.c.b16 %v2734, %v2726
      %v3135 = vpack.c.b16 %v2735, %v2727
      %v3136 = vpack.c.b16 %v2736, %v2728
      %v3137 = vpack.c.b16 %v2737, %v2729
      %v3138 = vpack.c.b16 %v2738, %v2730
      %v3139 = vpack.c.b16 %v2747, %v2739
      %v3140 = vpack.c.b16 %v2748, %v2740
      %v3141 = vpack.c.b16 %v2749, %v2741
      %v3142 = vpack.c.b16 %v2750, %v2742
      %v3143 = vpack.c.b16 %v2751, %v2743
      %v3144 = vpack.c.b16 %v2752, %v2744
      %v3145 = vpack.c.b16 %v2753, %v2745
      %v3146 = vpack.c.b16 %v2754, %v2746
      %v3147 = vpack.c.b16 %v2763, %v2755
      %v3148 = vpack.c.b16 %v2764, %v2756
      %v3149 = vpack.c.b16 %v2765, %v2757
      %v3150 = vpack.c.b16 %v2766, %v2758
      %v3151 = vpack.c.b16 %v2767, %v2759
      %v3152 = vpack.c.b16 %v2768, %v2760
      %v3153 = vpack.c.b16 %v2769, %v2761
      %v3154 = vpack.c.b16 %v2770, %v2762
      %v3155 = vpack.c.b16 %v2779, %v2771
      %v3156 = vpack.c.b16 %v2780, %v2772
      %v3157 = vpack.c.b16 %v2781, %v2773
      %v3158 = vpack.c.b16 %v2782, %v2774
      %v3159 = vpack.c.b16 %v2783, %v2775
      %v3160 = vpack.c.b16 %v2784, %v2776
      %v3161 = vpack.c.b16 %v2785, %v2777
      %v3162 = vpack.c.b16 %v2786, %v2778
      %v3163 = vpack.c.b16 %v2795, %v2787
      %v3164 = vpack.c.b16 %v2796, %v2788
      %v3165 = vpack.c.b16 %v2797, %v2789
      %v3166 = vpack.c.b16 %v2798, %v2790
      %v3167 = vpack.c.b16 %v2799, %v2791
      %v3168 = vpack.c.b16 %v2800, %v2792
      %v3169 = vpack.c.b16 %v2801, %v2793
      %v3170 = vpack.c.b16 %v2802, %v2794
      %v3171 = vpack.c.b16 %v2811, %v2803
      %v3172 = vpack.c.b16 %v2812, %v2804
      %v3173 = vpack.c.b16 %v2813, %v2805
      %v3174 = vpack.c.b16 %v2814, %v2806
      %v3175 = vpack.c.b16 %v2815, %v2807
      %v3176 = vpack.c.b16 %v2816, %v2808
      %v3177 = vpack.c.b16 %v2817, %v2809
      %v3178 = vpack.c.b16 %v2818, %v2810
      %v3179 = vpack.c.b16 %v2827, %v2819
      %v3180 = vpack.c.b16 %v2828, %v2820
      %v3181 = vpack.c.b16 %v2829, %v2821
      %v3182 = vpack.c.b16 %v2830, %v2822
      %v3183 = vpack.c.b16 %v2831, %v2823
      %v3184 = vpack.c.b16 %v2832, %v2824
      %v3185 = vpack.c.b16 %v2833, %v2825
      %v3186 = vpack.c.b16 %v2834, %v2826
      %v3187 = vpack.c.b16 %v2843, %v2835
      %v3188 = vpack.c.b16 %v2844, %v2836
      %v3189 = vpack.c.b16 %v2845, %v2837
      %v3190 = vpack.c.b16 %v2846, %v2838
      %v3191 = vpack.c.b16 %v2847, %v2839
      %v3192 = vpack.c.b16 %v2848, %v2840
      %v3193 = vpack.c.b16 %v2849, %v2841
      %v3194 = vpack.c.b16 %v2850, %v2842
      %v3195 = vpack.c.b16 %v2859, %v2851
      %v3196 = vpack.c.b16 %v2860, %v2852
      %v3197 = vpack.c.b16 %v2861, %v2853
      %v3198 = vpack.c.b16 %v2862, %v2854
      %v3199 = vpack.c.b16 %v2863, %v2855
      %v3200 = vpack.c.b16 %v2864, %v2856
      %v3201 = vpack.c.b16 %v2865, %v2857
      %v3202 = vpack.c.b16 %v2866, %v2858
      %v3203 = vpack.c.b16 %v2875, %v2867
      %v3204 = vpack.c.b16 %v2876, %v2868
      %v3205 = vpack.c.b16 %v2877, %v2869
      %v3206 = vpack.c.b16 %v2878, %v2870
      %v3207 = vpack.c.b16 %v2879, %v2871
      %v3208 = vpack.c.b16 %v2880, %v2872
      %v3209 = vpack.c.b16 %v2881, %v2873
      %v3210 = vpack.c.b16 %v2882, %v2874
      %v3211 = vpack.c.b16 %v2891, %v2883
      %v3212 = vpack.c.b16 %v2892, %v2884
      %v3213 = vpack.c.b16 %v2893, %v2885
      %v3214 = vpack.c.b16 %v2894, %v2886
      %v3215 = vpack.c.b16 %v2895, %v2887
      %v3216 = vpack.c.b16 %v2896, %v2888
      %v3217 = vpack.c.b16 %v2897, %v2889
      %v3218 = vpack.c.b16 %v2898, %v2890
      %v3219 = vpack.c.b16 %v2907, %v2899
      %v3220 = vpack.c.b16 %v2908, %v2900
      %v3221 = vpack.c.b16 %v2909, %v2901
      %v3222 = vpack.c.b16 %v2910, %v2902
      %v3223 = vpack.c.b16 %v2911, %v2903
      %v3224 = vpack.c.b16 %v2912, %v2904
      %v3225 = vpack.c.b16 %v2913, %v2905
      %v3226 = vpack.c.b16 %v2914, %v2906
      %v3227 = vpack.c.b16 %v2923, %v2915
      %v3228 = vpack.c.b16 %v2924, %v2916
      %v3229 = vpack.c.b16 %v2925, %v2917
      %v3230 = vpack.c.b16 %v2926, %v2918
      %v3231 = vpack.c.b16 %v2927, %v2919
      %v3232 = vpack.c.b16 %v2928, %v2920
      %v3233 = vpack.c.b16 %v2929, %v2921
      %v3234 = vpack.c.b16 %v2930, %v2922
      %v3235 = vpack.c.b16 %v2939, %v2931
      %v3236 = vpack.c.b16 %v2940, %v2932
      %v3237 = vpack.c.b16 %v2941, %v2933
      %v3238 = vpack.c.b16 %v2942, %v2934
      %v3239 = vpack.c.b16 %v2943, %v2935
      %v3240 = vpack.c.b16 %v2944, %v2936
      %v3241 = vpack.c.b16 %v2945, %v2937
      %v3242 = vpack.c.b16 %v2946, %v2938
      %v3243 = vpack.c.b16 %v2955, %v2947
      %v3244 = vpack.c.b16 %v2956, %v2948
      %v3245 = vpack.c.b16 %v2957, %v2949
      %v3246 = vpack.c.b16 %v2958, %v2950
      %v3247 = vpack.c.b16 %v2959, %v2951
      %v3248 = vpack.c.b16 %v2960, %v2952
      %v3249 = vpack.c.b16 %v2961, %v2953
      %v3250 = vpack.c.b16 %v2962, %v2954
      %v3251 = vpack.c.b16 %v2971, %v2963
      %v3252 = vpack.c.b16 %v2972, %v2964
      %v3253 = vpack.c.b16 %v2973, %v2965
      %v3254 = vpack.c.b16 %v2974, %v2966
      %v3255 = vpack.c.b16 %v2975, %v2967
      %v3256 = vpack.c.b16 %v2976, %v2968
      %v3257 = vpack.c.b16 %v2977, %v2969
      %v3258 = vpack.c.b16 %v2978, %v2970
      %v3259 = vpack.c.b16 %v2987, %v2979
      %v3260 = vpack.c.b16 %v2988, %v2980
      %v3261 = vpack.c.b16 %v2989, %v2981
      %v3262 = vpack.c.b16 %v2990, %v2982
      %v3263 = vpack.c.b16 %v2991, %v2983
      %v3264 = vpack.c.b16 %v2992, %v2984
      %v3265 = vpack.c.b16 %v2993, %v2985
      %v3266 = vpack.c.b16 %v2994, %v2986
      %v3267 = vpack.c.b16 %v3003, %v2995
      %v3268 = vpack.c.b16 %v3004, %v2996
      %v3269 = vpack.c.b16 %v3005, %v2997
      %v3270 = vpack.c.b16 %v3006, %v2998
      %v3271 = vpack.c.b16 %v3007, %v2999
      %v3272 = vpack.c.b16 %v3008, %v3000
      %v3273 = vpack.c.b16 %v3009, %v3001
      %v3274 = vpack.c.b16 %v3010, %v3002
      %v3275 = vpack.c.b16 %v3019, %v3011
      %v3276 = vpack.c.b16 %v3020, %v3012
      %v3277 = vpack.c.b16 %v3021, %v3013
      %v3278 = vpack.c.b16 %v3022, %v3014
      %v3279 = vpack.c.b16 %v3023, %v3015
      %v3280 = vpack.c.b16 %v3024, %v3016
      %v3281 = vpack.c.b16 %v3025, %v3017
      %v3282 = vpack.c.b16 %v3026, %v3018
      %v3667 = vunpack.c.l.b16 %v2131
      %v3668 = vunpack.c.l.b16 %v2132
      %v3669 = vunpack.c.l.b16 %v2133
      %v3670 = vunpack.c.l.b16 %v2134
      %v3671 = vunpack.c.l.b16 %v2135
      %v3672 = vunpack.c.l.b16 %v2136
      %v3673 = vunpack.c.l.b16 %v2137
      %v3674 = vunpack.c.l.b16 %v2138
      %v3675 = vunpack.c.l.b16 %v2139
      %v3676 = vunpack.c.l.b16 %v2140
      %v3677 = vunpack.c.l.b16 %v2141
      %v3678 = vunpack.c.l.b16 %v2142
      %v3679 = vunpack.c.l.b16 %v2143
      %v3680 = vunpack.c.l.b16 %v2144
      %v3681 = vunpack.c.l.b16 %v2145
      %v3682 = vunpack.c.l.b16 %v2146
      %v3683 = vunpack.c.l.b16 %v2147
      %v3684 = vunpack.c.l.b16 %v2148
      %v3685 = vunpack.c.l.b16 %v2149
      %v3686 = vunpack.c.l.b16 %v2150
      %v3687 = vunpack.c.l.b16 %v2151
      %v3688 = vunpack.c.l.b16 %v2152
      %v3689 = vunpack.c.l.b16 %v2153
      %v3690 = vunpack.c.l.b16 %v2154
      %v3691 = vunpack.c.l.b16 %v2155
      %v3692 = vunpack.c.l.b16 %v2156
      %v3693 = vunpack.c.l.b16 %v2157
      %v3694 = vunpack.c.l.b16 %v2158
      %v3695 = vunpack.c.l.b16 %v2159
      %v3696 = vunpack.c.l.b16 %v2160
      %v3697 = vunpack.c.l.b16 %v2161
      %v3698 = vunpack.c.l.b16 %v2162
      %v3699 = vunpack.c.l.b16 %v2163
      %v3700 = vunpack.c.l.b16 %v2164
      %v3701 = vunpack.c.l.b16 %v2165
      %v3702 = vunpack.c.l.b16 %v2166
      %v3703 = vunpack.c.l.b16 %v2167
      %v3704 = vunpack.c.l.b16 %v2168
      %v3705 = vunpack.c.l.b16 %v2169
      %v3706 = vunpack.c.l.b16 %v2170
      %v3707 = vunpack.c.l.b16 %v2171
      %v3708 = vunpack.c.l.b16 %v2172
      %v3709 = vunpack.c.l.b16 %v2173
      %v3710 = vunpack.c.l.b16 %v2174
      %v3711 = vunpack.c.l.b16 %v2175
      %v3712 = vunpack.c.l.b16 %v2176
      %v3713 = vunpack.c.l.b16 %v2177
      %v3714 = vunpack.c.l.b16 %v2178
      %v3715 = vunpack.c.l.b16 %v2179
      %v3716 = vunpack.c.l.b16 %v2180
      %v3717 = vunpack.c.l.b16 %v2181
      %v3718 = vunpack.c.l.b16 %v2182
      %v3719 = vunpack.c.l.b16 %v2183
      %v3720 = vunpack.c.l.b16 %v2184
      %v3721 = vunpack.c.l.b16 %v2185
      %v3722 = vunpack.c.l.b16 %v2186
      %v3723 = vunpack.c.l.b16 %v2187
      %v3724 = vunpack.c.l.b16 %v2188
      %v3725 = vunpack.c.l.b16 %v2189
      %v3726 = vunpack.c.l.b16 %v2190
      %v3727 = vunpack.c.l.b16 %v2191
      %v3728 = vunpack.c.l.b16 %v2192
      %v3729 = vunpack.c.l.b16 %v2193
      %v3730 = vunpack.c.l.b16 %v2194
      %v3731 = vunpack.c.l.b16 %v2195
      %v3732 = vunpack.c.l.b16 %v2196
      %v3733 = vunpack.c.l.b16 %v2197
      %v3734 = vunpack.c.l.b16 %v2198
      %v3735 = vunpack.c.l.b16 %v2199
      %v3736 = vunpack.c.l.b16 %v2200
      %v3737 = vunpack.c.l.b16 %v2201
      %v3738 = vunpack.c.l.b16 %v2202
      %v3739 = vunpack.c.l.b16 %v2203
      %v3740 = vunpack.c.l.b16 %v2204
      %v3741 = vunpack.c.l.b16 %v2205
      %v3742 = vunpack.c.l.b16 %v2206
      %v3743 = vunpack.c.l.b16 %v2207
      %v3744 = vunpack.c.l.b16 %v2208
      %v3745 = vunpack.c.l.b16 %v2209
      %v3746 = vunpack.c.l.b16 %v2210
      %v3747 = vunpack.c.l.b16 %v2211
      %v3748 = vunpack.c.l.b16 %v2212
      %v3749 = vunpack.c.l.b16 %v2213
      %v3750 = vunpack.c.l.b16 %v2214
      %v3751 = vunpack.c.l.b16 %v2215
      %v3752 = vunpack.c.l.b16 %v2216
      %v3753 = vunpack.c.l.b16 %v2217
      %v3754 = vunpack.c.l.b16 %v2218
      %v3755 = vunpack.c.l.b16 %v2219
      %v3756 = vunpack.c.l.b16 %v2220
      %v3757 = vunpack.c.l.b16 %v2221
      %v3758 = vunpack.c.l.b16 %v2222
      %v3759 = vunpack.c.l.b16 %v2223
      %v3760 = vunpack.c.l.b16 %v2224
      %v3761 = vunpack.c.l.b16 %v2225
      %v3762 = vunpack.c.l.b16 %v2226
      %v3763 = vunpack.c.l.b16 %v2227
      %v3764 = vunpack.c.l.b16 %v2228
      %v3765 = vunpack.c.l.b16 %v2229
      %v3766 = vunpack.c.l.b16 %v2230
      %v3767 = vunpack.c.l.b16 %v2231
      %v3768 = vunpack.c.l.b16 %v2232
      %v3769 = vunpack.c.l.b16 %v2233
      %v3770 = vunpack.c.l.b16 %v2234
      %v3771 = vunpack.c.l.b16 %v2235
      %v3772 = vunpack.c.l.b16 %v2236
      %v3773 = vunpack.c.l.b16 %v2237
      %v3774 = vunpack.c.l.b16 %v2238
      %v3775 = vunpack.c.l.b16 %v2239
      %v3776 = vunpack.c.l.b16 %v2240
      %v3777 = vunpack.c.l.b16 %v2241
      %v3778 = vunpack.c.l.b16 %v2242
      %v3779 = vunpack.c.l.b16 %v2243
      %v3780 = vunpack.c.l.b16 %v2244
      %v3781 = vunpack.c.l.b16 %v2245
      %v3782 = vunpack.c.l.b16 %v2246
      %v3783 = vunpack.c.l.b16 %v2247
      %v3784 = vunpack.c.l.b16 %v2248
      %v3785 = vunpack.c.l.b16 %v2249
      %v3786 = vunpack.c.l.b16 %v2250
      %v3787 = vunpack.c.l.b16 %v2251
      %v3788 = vunpack.c.l.b16 %v2252
      %v3789 = vunpack.c.l.b16 %v2253
      %v3790 = vunpack.c.l.b16 %v2254
      %v3791 = vunpack.c.l.b16 %v2255
      %v3792 = vunpack.c.l.b16 %v2256
      %v3793 = vunpack.c.l.b16 %v2257
      %v3794 = vunpack.c.l.b16 %v2258
      %v3795 = vpack.c.b16 %v3668, %v3667
      %v3796 = vpack.c.b16 %v3670, %v3669
      %v3797 = vpack.c.b16 %v3672, %v3671
      %v3798 = vpack.c.b16 %v3674, %v3673
      %v3799 = vpack.c.b16 %v3676, %v3675
      %v3800 = vpack.c.b16 %v3678, %v3677
      %v3801 = vpack.c.b16 %v3680, %v3679
      %v3802 = vpack.c.b16 %v3682, %v3681
      %v3803 = vpack.c.b16 %v3684, %v3683
      %v3804 = vpack.c.b16 %v3686, %v3685
      %v3805 = vpack.c.b16 %v3688, %v3687
      %v3806 = vpack.c.b16 %v3690, %v3689
      %v3807 = vpack.c.b16 %v3692, %v3691
      %v3808 = vpack.c.b16 %v3694, %v3693
      %v3809 = vpack.c.b16 %v3696, %v3695
      %v3810 = vpack.c.b16 %v3698, %v3697
      %v3811 = vpack.c.b16 %v3700, %v3699
      %v3812 = vpack.c.b16 %v3702, %v3701
      %v3813 = vpack.c.b16 %v3704, %v3703
      %v3814 = vpack.c.b16 %v3706, %v3705
      %v3815 = vpack.c.b16 %v3708, %v3707
      %v3816 = vpack.c.b16 %v3710, %v3709
      %v3817 = vpack.c.b16 %v3712, %v3711
      %v3818 = vpack.c.b16 %v3714, %v3713
      %v3819 = vpack.c.b16 %v3716, %v3715
      %v3820 = vpack.c.b16 %v3718, %v3717
      %v3821 = vpack.c.b16 %v3720, %v3719
      %v3822 = vpack.c.b16 %v3722, %v3721
      %v3823 = vpack.c.b16 %v3724, %v3723
      %v3824 = vpack.c.b16 %v3726, %v3725
      %v3825 = vpack.c.b16 %v3728, %v3727
      %v3826 = vpack.c.b16 %v3730, %v3729
      %v3827 = vpack.c.b16 %v3732, %v3731
      %v3828 = vpack.c.b16 %v3734, %v3733
      %v3829 = vpack.c.b16 %v3736, %v3735
      %v3830 = vpack.c.b16 %v3738, %v3737
      %v3831 = vpack.c.b16 %v3740, %v3739
      %v3832 = vpack.c.b16 %v3742, %v3741
      %v3833 = vpack.c.b16 %v3744, %v3743
      %v3834 = vpack.c.b16 %v3746, %v3745
      %v3835 = vpack.c.b16 %v3748, %v3747
      %v3836 = vpack.c.b16 %v3750, %v3749
      %v3837 = vpack.c.b16 %v3752, %v3751
      %v3838 = vpack.c.b16 %v3754, %v3753
      %v3839 = vpack.c.b16 %v3756, %v3755
      %v3840 = vpack.c.b16 %v3758, %v3757
      %v3841 = vpack.c.b16 %v3760, %v3759
      %v3842 = vpack.c.b16 %v3762, %v3761
      %v3843 = vpack.c.b16 %v3764, %v3763
      %v3844 = vpack.c.b16 %v3766, %v3765
      %v3845 = vpack.c.b16 %v3768, %v3767
      %v3846 = vpack.c.b16 %v3770, %v3769
      %v3847 = vpack.c.b16 %v3772, %v3771
      %v3848 = vpack.c.b16 %v3774, %v3773
      %v3849 = vpack.c.b16 %v3776, %v3775
      %v3850 = vpack.c.b16 %v3778, %v3777
      %v3851 = vpack.c.b16 %v3780, %v3779
      %v3852 = vpack.c.b16 %v3782, %v3781
      %v3853 = vpack.c.b16 %v3784, %v3783
      %v3854 = vpack.c.b16 %v3786, %v3785
      %v3855 = vpack.c.b16 %v3788, %v3787
      %v3856 = vpack.c.b16 %v3790, %v3789
      %v3857 = vpack.c.b16 %v3792, %v3791
      %v3858 = vpack.c.b16 %v3794, %v3793
      %3923 = vmatprep.subr.bf16.mxu0 0
      %3924 = vmatpush1.bf16.msra.mxu0 %v3802
      %3925 = vmatprep.subr.bf16.mxu0 0
      %3926 = vmatpush1.bf16.msra.mxu0 %v3801
      %3927 = vmatprep.subr.bf16.mxu0 0
      %3928 = vmatpush1.bf16.msra.mxu0 %v3800
      %3929 = vmatprep.subr.bf16.mxu0 0
      %3930 = vmatpush1.bf16.msra.mxu0 %v3799
      %3931 = vmatprep.subr.bf16.mxu0 0
      %3932 = vmatpush1.bf16.msra.mxu0 %v3798
      %3933 = vmatprep.subr.bf16.mxu0 0
      %3934 = vmatpush1.bf16.msra.mxu0 %v3797
      %3935 = vmatprep.subr.bf16.mxu0 0
      %3936 = vmatpush1.bf16.msra.mxu0 %v3796
      %3937 = vmatprep.subr.bf16.mxu0 0
      %3938 = vmatpush1.bf16.msra.mxu0 %v3795
      %3939 = vmatprep.subr.bf16.mxu0 0
      %3940 = vmatpush2.bf16.msra.mxu0 %v3810
      %3941 = vmatprep.subr.bf16.mxu0 0
      %3942 = vmatpush2.bf16.msra.mxu0 %v3809
      %3943 = vmatprep.subr.bf16.mxu0 0
      %3944 = vmatpush2.bf16.msra.mxu0 %v3808
      %3945 = vmatprep.subr.bf16.mxu0 0
      %3946 = vmatpush2.bf16.msra.mxu0 %v3807
      %3947 = vmatprep.subr.bf16.mxu0 0
      %3948 = vmatpush2.bf16.msra.mxu0 %v3806
      %3949 = vmatprep.subr.bf16.mxu0 0
      %3950 = vmatpush2.bf16.msra.mxu0 %v3805
      %3951 = vmatprep.subr.bf16.mxu0 0
      %3952 = vmatpush2.bf16.msra.mxu0 %v3804
      %3953 = vmatprep.subr.bf16.mxu0 0
      %3954 = vmatpush2.bf16.msra.mxu0 %v3803
      %3955 = vmatprep.mubr.bf16.mxu0 %v3028
      %3956 = vmatmul.mubr.bf16.gmra.mxu0 %v3027
      %v3957 = vpop.f32.mrf.mxu0
      %v3958 = vadd.f32 0.0, %v3957
      %v3959 = vpop.f32.mrf.mxu0
      %v3960 = vpop.f32.mrf.mxu0
      %v3961 = vadd.f32 0.0, %v3960
      %v3962 = vpop.f32.mrf.mxu0
      %3963 = vmatprep.mubr.bf16.mxu0 %v3036
      %3964 = vmatmul.mubr.bf16.gmra.mxu0 %v3035
      %v3965 = vpop.f32.mrf.mxu0
      %v3966 = vadd.f32 0.0, %v3965
      %v3967 = vpop.f32.mrf.mxu0
      %v3968 = vpop.f32.mrf.mxu0
      %v3969 = vadd.f32 0.0, %v3968
      %v3970 = vpop.f32.mrf.mxu0
      %3971 = vmatprep.mubr.bf16.mxu0 %v3044
      %3972 = vmatmul.mubr.bf16.gmra.mxu0 %v3043
      %v3973 = vpop.f32.mrf.mxu0
      %v3974 = vadd.f32 0.0, %v3973
      %v3975 = vpop.f32.mrf.mxu0
      %v3976 = vpop.f32.mrf.mxu0
      %v3977 = vadd.f32 0.0, %v3976
      %v3978 = vpop.f32.mrf.mxu0
      %3979 = vmatprep.mubr.bf16.mxu0 %v3052
      %3980 = vmatmul.mubr.bf16.gmra.mxu0 %v3051
      %v3981 = vpop.f32.mrf.mxu0
      %v3982 = vadd.f32 0.0, %v3981
      %v3983 = vpop.f32.mrf.mxu0
      %v3984 = vpop.f32.mrf.mxu0
      %v3985 = vadd.f32 0.0, %v3984
      %v3986 = vpop.f32.mrf.mxu0
      %3987 = vmatprep.mubr.bf16.mxu0 %v3060
      %3988 = vmatmul.mubr.bf16.gmra.mxu0 %v3059
      %v3989 = vpop.f32.mrf.mxu0
      %v3990 = vadd.f32 0.0, %v3989
      %v3991 = vpop.f32.mrf.mxu0
      %v3992 = vpop.f32.mrf.mxu0
      %v3993 = vadd.f32 0.0, %v3992
      %v3994 = vpop.f32.mrf.mxu0
      %3995 = vmatprep.mubr.bf16.mxu0 %v3068
      %3996 = vmatmul.mubr.bf16.gmra.mxu0 %v3067
      %v3997 = vpop.f32.mrf.mxu0
      %v3998 = vadd.f32 0.0, %v3997
      %v3999 = vpop.f32.mrf.mxu0
      %v4000 = vpop.f32.mrf.mxu0
      %v4001 = vadd.f32 0.0, %v4000
      %v4002 = vpop.f32.mrf.mxu0
      %4003 = vmatprep.mubr.bf16.mxu0 %v3076
      %4004 = vmatmul.mubr.bf16.gmra.mxu0 %v3075
      %v4005 = vpop.f32.mrf.mxu0
      %v4006 = vadd.f32 0.0, %v4005
      %v4007 = vpop.f32.mrf.mxu0
      %v4008 = vpop.f32.mrf.mxu0
      %v4009 = vadd.f32 0.0, %v4008
      %v4010 = vpop.f32.mrf.mxu0
      %4011 = vmatprep.mubr.bf16.mxu0 %v3084
      %4012 = vmatmul.mubr.bf16.gmra.mxu0 %v3083
      %v4013 = vpop.f32.mrf.mxu0
      %v4014 = vadd.f32 0.0, %v4013
      %v4015 = vpop.f32.mrf.mxu0
      %v4016 = vpop.f32.mrf.mxu0
      %v4017 = vadd.f32 0.0, %v4016
      %v4018 = vpop.f32.mrf.mxu0
      %4019 = vmatprep.mubr.bf16.mxu0 %v3092
      %4020 = vmatmul.mubr.bf16.gmra.mxu0 %v3091
      %v4021 = vpop.f32.mrf.mxu0
      %v4022 = vadd.f32 0.0, %v4021
      %v4023 = vpop.f32.mrf.mxu0
      %v4024 = vpop.f32.mrf.mxu0
      %v4025 = vadd.f32 0.0, %v4024
      %v4026 = vpop.f32.mrf.mxu0
      %4027 = vmatprep.mubr.bf16.mxu0 %v3100
      %4028 = vmatmul.mubr.bf16.gmra.mxu0 %v3099
      %v4029 = vpop.f32.mrf.mxu0
      %v4030 = vadd.f32 0.0, %v4029
      %v4031 = vpop.f32.mrf.mxu0
      %v4032 = vpop.f32.mrf.mxu0
      %v4033 = vadd.f32 0.0, %v4032
      %v4034 = vpop.f32.mrf.mxu0
      %4035 = vmatprep.mubr.bf16.mxu0 %v3108
      %4036 = vmatmul.mubr.bf16.gmra.mxu0 %v3107
      %v4037 = vpop.f32.mrf.mxu0
      %v4038 = vadd.f32 0.0, %v4037
      %v4039 = vpop.f32.mrf.mxu0
      %v4040 = vpop.f32.mrf.mxu0
      %v4041 = vadd.f32 0.0, %v4040
      %v4042 = vpop.f32.mrf.mxu0
      %4043 = vmatprep.mubr.bf16.mxu0 %v3116
      %4044 = vmatmul.mubr.bf16.gmra.mxu0 %v3115
      %v4045 = vpop.f32.mrf.mxu0
      %v4046 = vadd.f32 0.0, %v4045
      %v4047 = vpop.f32.mrf.mxu0
      %v4048 = vpop.f32.mrf.mxu0
      %v4049 = vadd.f32 0.0, %v4048
      %v4050 = vpop.f32.mrf.mxu0
      %4051 = vmatprep.mubr.bf16.mxu0 %v3124
      %4052 = vmatmul.mubr.bf16.gmra.mxu0 %v3123
      %v4053 = vpop.f32.mrf.mxu0
      %v4054 = vadd.f32 0.0, %v4053
      %v4055 = vpop.f32.mrf.mxu0
      %v4056 = vpop.f32.mrf.mxu0
      %v4057 = vadd.f32 0.0, %v4056
      %v4058 = vpop.f32.mrf.mxu0
      %4059 = vmatprep.mubr.bf16.mxu0 %v3132
      %4060 = vmatmul.mubr.bf16.gmra.mxu0 %v3131
      %v4061 = vpop.f32.mrf.mxu0
      %v4062 = vadd.f32 0.0, %v4061
      %v4063 = vpop.f32.mrf.mxu0
      %v4064 = vpop.f32.mrf.mxu0
      %v4065 = vadd.f32 0.0, %v4064
      %v4066 = vpop.f32.mrf.mxu0
      %4067 = vmatprep.mubr.bf16.mxu0 %v3140
      %4068 = vmatmul.mubr.bf16.gmra.mxu0 %v3139
      %v4069 = vpop.f32.mrf.mxu0
      %v4070 = vadd.f32 0.0, %v4069
      %v4071 = vpop.f32.mrf.mxu0
      %v4072 = vpop.f32.mrf.mxu0
      %v4073 = vadd.f32 0.0, %v4072
      %v4074 = vpop.f32.mrf.mxu0
      %4075 = vmatprep.mubr.bf16.mxu0 %v3148
      %4076 = vmatmul.mubr.bf16.gmra.mxu0 %v3147
      %v4077 = vpop.f32.mrf.mxu0
      %v4078 = vadd.f32 0.0, %v4077
      %v4079 = vpop.f32.mrf.mxu0
      %v4080 = vpop.f32.mrf.mxu0
      %v4081 = vadd.f32 0.0, %v4080
      %v4082 = vpop.f32.mrf.mxu0
      %4083 = vmatprep.mubr.bf16.mxu0 %v3156
      %4084 = vmatmul.mubr.bf16.gmra.mxu0 %v3155
      %v4085 = vpop.f32.mrf.mxu0
      %v4086 = vadd.f32 0.0, %v4085
      %v4087 = vpop.f32.mrf.mxu0
      %v4088 = vpop.f32.mrf.mxu0
      %v4089 = vadd.f32 0.0, %v4088
      %v4090 = vpop.f32.mrf.mxu0
      %4091 = vmatprep.mubr.bf16.mxu0 %v3164
      %4092 = vmatmul.mubr.bf16.gmra.mxu0 %v3163
      %v4093 = vpop.f32.mrf.mxu0
      %v4094 = vadd.f32 0.0, %v4093
      %v4095 = vpop.f32.mrf.mxu0
      %v4096 = vpop.f32.mrf.mxu0
      %v4097 = vadd.f32 0.0, %v4096
      %v4098 = vpop.f32.mrf.mxu0
      %4099 = vmatprep.mubr.bf16.mxu0 %v3172
      %4100 = vmatmul.mubr.bf16.gmra.mxu0 %v3171
      %v4101 = vpop.f32.mrf.mxu0
      %v4102 = vadd.f32 0.0, %v4101
      %v4103 = vpop.f32.mrf.mxu0
      %v4104 = vpop.f32.mrf.mxu0
      %v4105 = vadd.f32 0.0, %v4104
      %v4106 = vpop.f32.mrf.mxu0
      %4107 = vmatprep.mubr.bf16.mxu0 %v3180
      %4108 = vmatmul.mubr.bf16.gmra.mxu0 %v3179
      %v4109 = vpop.f32.mrf.mxu0
      %v4110 = vadd.f32 0.0, %v4109
      %v4111 = vpop.f32.mrf.mxu0
      %v4112 = vpop.f32.mrf.mxu0
      %v4113 = vadd.f32 0.0, %v4112
      %v4114 = vpop.f32.mrf.mxu0
      %4115 = vmatprep.mubr.bf16.mxu0 %v3188
      %4116 = vmatmul.mubr.bf16.gmra.mxu0 %v3187
      %v4117 = vpop.f32.mrf.mxu0
      %v4118 = vadd.f32 0.0, %v4117
      %v4119 = vpop.f32.mrf.mxu0
      %v4120 = vpop.f32.mrf.mxu0
      %v4121 = vadd.f32 0.0, %v4120
      %v4122 = vpop.f32.mrf.mxu0
      %4123 = vmatprep.mubr.bf16.mxu0 %v3196
      %4124 = vmatmul.mubr.bf16.gmra.mxu0 %v3195
      %v4125 = vpop.f32.mrf.mxu0
      %v4126 = vadd.f32 0.0, %v4125
      %v4127 = vpop.f32.mrf.mxu0
      %v4128 = vpop.f32.mrf.mxu0
      %v4129 = vadd.f32 0.0, %v4128
      %v4130 = vpop.f32.mrf.mxu0
      %4131 = vmatprep.mubr.bf16.mxu0 %v3204
      %4132 = vmatmul.mubr.bf16.gmra.mxu0 %v3203
      %v4133 = vpop.f32.mrf.mxu0
      %v4134 = vadd.f32 0.0, %v4133
      %v4135 = vpop.f32.mrf.mxu0
      %v4136 = vpop.f32.mrf.mxu0
      %v4137 = vadd.f32 0.0, %v4136
      %v4138 = vpop.f32.mrf.mxu0
      %4139 = vmatprep.mubr.bf16.mxu0 %v3212
      %4140 = vmatmul.mubr.bf16.gmra.mxu0 %v3211
      %v4141 = vpop.f32.mrf.mxu0
      %v4142 = vadd.f32 0.0, %v4141
      %v4143 = vpop.f32.mrf.mxu0
      %v4144 = vpop.f32.mrf.mxu0
      %v4145 = vadd.f32 0.0, %v4144
      %v4146 = vpop.f32.mrf.mxu0
      %4147 = vmatprep.mubr.bf16.mxu0 %v3220
      %4148 = vmatmul.mubr.bf16.gmra.mxu0 %v3219
      %v4149 = vpop.f32.mrf.mxu0
      %v4150 = vadd.f32 0.0, %v4149
      %v4151 = vpop.f32.mrf.mxu0
      %v4152 = vpop.f32.mrf.mxu0
      %v4153 = vadd.f32 0.0, %v4152
      %v4154 = vpop.f32.mrf.mxu0
      %4155 = vmatprep.mubr.bf16.mxu0 %v3228
      %4156 = vmatmul.mubr.bf16.gmra.mxu0 %v3227
      %v4157 = vpop.f32.mrf.mxu0
      %v4158 = vadd.f32 0.0, %v4157
      %v4159 = vpop.f32.mrf.mxu0
      %v4160 = vpop.f32.mrf.mxu0
      %v4161 = vadd.f32 0.0, %v4160
      %v4162 = vpop.f32.mrf.mxu0
      %4163 = vmatprep.mubr.bf16.mxu0 %v3236
      %4164 = vmatmul.mubr.bf16.gmra.mxu0 %v3235
      %v4165 = vpop.f32.mrf.mxu0
      %v4166 = vadd.f32 0.0, %v4165
      %v4167 = vpop.f32.mrf.mxu0
      %v4168 = vpop.f32.mrf.mxu0
      %v4169 = vadd.f32 0.0, %v4168
      %v4170 = vpop.f32.mrf.mxu0
      %4171 = vmatprep.mubr.bf16.mxu0 %v3244
      %4172 = vmatmul.mubr.bf16.gmra.mxu0 %v3243
      %v4173 = vpop.f32.mrf.mxu0
      %v4174 = vadd.f32 0.0, %v4173
      %v4175 = vpop.f32.mrf.mxu0
      %v4176 = vpop.f32.mrf.mxu0
      %v4177 = vadd.f32 0.0, %v4176
      %v4178 = vpop.f32.mrf.mxu0
      %4179 = vmatprep.mubr.bf16.mxu0 %v3252
      %4180 = vmatmul.mubr.bf16.gmra.mxu0 %v3251
      %v4181 = vpop.f32.mrf.mxu0
      %v4182 = vadd.f32 0.0, %v4181
      %v4183 = vpop.f32.mrf.mxu0
      %v4184 = vpop.f32.mrf.mxu0
      %v4185 = vadd.f32 0.0, %v4184
      %v4186 = vpop.f32.mrf.mxu0
      %4187 = vmatprep.mubr.bf16.mxu0 %v3260
      %4188 = vmatmul.mubr.bf16.gmra.mxu0 %v3259
      %v4189 = vpop.f32.mrf.mxu0
      %v4190 = vadd.f32 0.0, %v4189
      %v4191 = vpop.f32.mrf.mxu0
      %v4192 = vpop.f32.mrf.mxu0
      %v4193 = vadd.f32 0.0, %v4192
      %v4194 = vpop.f32.mrf.mxu0
      %4195 = vmatprep.mubr.bf16.mxu0 %v3268
      %4196 = vmatmul.mubr.bf16.gmra.mxu0 %v3267
      %v4197 = vpop.f32.mrf.mxu0
      %v4198 = vadd.f32 0.0, %v4197
      %v4199 = vpop.f32.mrf.mxu0
      %v4200 = vpop.f32.mrf.mxu0
      %v4201 = vadd.f32 0.0, %v4200
      %v4202 = vpop.f32.mrf.mxu0
      %4203 = vmatprep.mubr.bf16.mxu0 %v3276
      %4204 = vmatmul.mubr.bf16.gmra.mxu0 %v3275
      %v4205 = vpop.f32.mrf.mxu0
      %v4206 = vadd.f32 0.0, %v4205
      %v4207 = vpop.f32.mrf.mxu0
      %v4208 = vpop.f32.mrf.mxu0
      %v4209 = vadd.f32 0.0, %v4208
      %v4210 = vpop.f32.mrf.mxu0
      %4211 = vdwg.mxu0
      %4212 = vmatprep.subr.bf16.mxu0 0
      %4213 = vmatpush1.bf16.msra.mxu0 %v3818
      %4214 = vmatprep.subr.bf16.mxu0 0
      %4215 = vmatpush1.bf16.msra.mxu0 %v3817
      %4216 = vmatprep.subr.bf16.mxu0 0
      %4217 = vmatpush1.bf16.msra.mxu0 %v3816
      %4218 = vmatprep.subr.bf16.mxu0 0
      %4219 = vmatpush1.bf16.msra.mxu0 %v3815
      %4220 = vmatprep.subr.bf16.mxu0 0
      %4221 = vmatpush1.bf16.msra.mxu0 %v3814
      %4222 = vmatprep.subr.bf16.mxu0 0
      %4223 = vmatpush1.bf16.msra.mxu0 %v3813
      %4224 = vmatprep.subr.bf16.mxu0 0
      %4225 = vmatpush1.bf16.msra.mxu0 %v3812
      %4226 = vmatprep.subr.bf16.mxu0 0
      %4227 = vmatpush1.bf16.msra.mxu0 %v3811
      %4228 = vmatprep.subr.bf16.mxu0 0
      %4229 = vmatpush2.bf16.msra.mxu0 %v3826
      %4230 = vmatprep.subr.bf16.mxu0 0
      %4231 = vmatpush2.bf16.msra.mxu0 %v3825
      %4232 = vmatprep.subr.bf16.mxu0 0
      %4233 = vmatpush2.bf16.msra.mxu0 %v3824
      %4234 = vmatprep.subr.bf16.mxu0 0
      %4235 = vmatpush2.bf16.msra.mxu0 %v3823
      %4236 = vmatprep.subr.bf16.mxu0 0
      %4237 = vmatpush2.bf16.msra.mxu0 %v3822
      %4238 = vmatprep.subr.bf16.mxu0 0
      %4239 = vmatpush2.bf16.msra.mxu0 %v3821
      %4240 = vmatprep.subr.bf16.mxu0 0
      %4241 = vmatpush2.bf16.msra.mxu0 %v3820
      %4242 = vmatprep.subr.bf16.mxu0 0
      %4243 = vmatpush2.bf16.msra.mxu0 %v3819
      %4244 = vmatprep.mubr.bf16.mxu0 %v3030
      %4245 = vmatmul.mubr.bf16.gmra.mxu0 %v3029
      %v4246 = vpop.f32.mrf.mxu0
      %v4247 = vadd.f32 %v3958, %v4246
      %v4248 = vpop.f32.mrf.mxu0
      %v4249 = vpop.f32.mrf.mxu0
      %v4250 = vadd.f32 %v3961, %v4249
      %v4251 = vpop.f32.mrf.mxu0
      %4252 = vmatprep.mubr.bf16.mxu0 %v3038
      %4253 = vmatmul.mubr.bf16.gmra.mxu0 %v3037
      %v4254 = vpop.f32.mrf.mxu0
      %v4255 = vadd.f32 %v3966, %v4254
      %v4256 = vpop.f32.mrf.mxu0
      %v4257 = vpop.f32.mrf.mxu0
      %v4258 = vadd.f32 %v3969, %v4257
      %v4259 = vpop.f32.mrf.mxu0
      %4260 = vmatprep.mubr.bf16.mxu0 %v3046
      %4261 = vmatmul.mubr.bf16.gmra.mxu0 %v3045
      %v4262 = vpop.f32.mrf.mxu0
      %v4263 = vadd.f32 %v3974, %v4262
      %v4264 = vpop.f32.mrf.mxu0
      %v4265 = vpop.f32.mrf.mxu0
      %v4266 = vadd.f32 %v3977, %v4265
      %v4267 = vpop.f32.mrf.mxu0
      %4268 = vmatprep.mubr.bf16.mxu0 %v3054
      %4269 = vmatmul.mubr.bf16.gmra.mxu0 %v3053
      %v4270 = vpop.f32.mrf.mxu0
      %v4271 = vadd.f32 %v3982, %v4270
      %v4272 = vpop.f32.mrf.mxu0
      %v4273 = vpop.f32.mrf.mxu0
      %v4274 = vadd.f32 %v3985, %v4273
      %v4275 = vpop.f32.mrf.mxu0
      %4276 = vmatprep.mubr.bf16.mxu0 %v3062
      %4277 = vmatmul.mubr.bf16.gmra.mxu0 %v3061
      %v4278 = vpop.f32.mrf.mxu0
      %v4279 = vadd.f32 %v3990, %v4278
      %v4280 = vpop.f32.mrf.mxu0
      %v4281 = vpop.f32.mrf.mxu0
      %v4282 = vadd.f32 %v3993, %v4281
      %v4283 = vpop.f32.mrf.mxu0
      %4284 = vmatprep.mubr.bf16.mxu0 %v3070
      %4285 = vmatmul.mubr.bf16.gmra.mxu0 %v3069
      %v4286 = vpop.f32.mrf.mxu0
      %v4287 = vadd.f32 %v3998, %v4286
      %v4288 = vpop.f32.mrf.mxu0
      %v4289 = vpop.f32.mrf.mxu0
      %v4290 = vadd.f32 %v4001, %v4289
      %v4291 = vpop.f32.mrf.mxu0
      %4292 = vmatprep.mubr.bf16.mxu0 %v3078
      %4293 = vmatmul.mubr.bf16.gmra.mxu0 %v3077
      %v4294 = vpop.f32.mrf.mxu0
      %v4295 = vadd.f32 %v4006, %v4294
      %v4296 = vpop.f32.mrf.mxu0
      %v4297 = vpop.f32.mrf.mxu0
      %v4298 = vadd.f32 %v4009, %v4297
      %v4299 = vpop.f32.mrf.mxu0
      %4300 = vmatprep.mubr.bf16.mxu0 %v3086
      %4301 = vmatmul.mubr.bf16.gmra.mxu0 %v3085
      %v4302 = vpop.f32.mrf.mxu0
      %v4303 = vadd.f32 %v4014, %v4302
      %v4304 = vpop.f32.mrf.mxu0
      %v4305 = vpop.f32.mrf.mxu0
      %v4306 = vadd.f32 %v4017, %v4305
      %v4307 = vpop.f32.mrf.mxu0
      %4308 = vmatprep.mubr.bf16.mxu0 %v3094
      %4309 = vmatmul.mubr.bf16.gmra.mxu0 %v3093
      %v4310 = vpop.f32.mrf.mxu0
      %v4311 = vadd.f32 %v4022, %v4310
      %v4312 = vpop.f32.mrf.mxu0
      %v4313 = vpop.f32.mrf.mxu0
      %v4314 = vadd.f32 %v4025, %v4313
      %v4315 = vpop.f32.mrf.mxu0
      %4316 = vmatprep.mubr.bf16.mxu0 %v3102
      %4317 = vmatmul.mubr.bf16.gmra.mxu0 %v3101
      %v4318 = vpop.f32.mrf.mxu0
      %v4319 = vadd.f32 %v4030, %v4318
      %v4320 = vpop.f32.mrf.mxu0
      %v4321 = vpop.f32.mrf.mxu0
      %v4322 = vadd.f32 %v4033, %v4321
      %v4323 = vpop.f32.mrf.mxu0
      %4324 = vmatprep.mubr.bf16.mxu0 %v3110
      %4325 = vmatmul.mubr.bf16.gmra.mxu0 %v3109
      %v4326 = vpop.f32.mrf.mxu0
      %v4327 = vadd.f32 %v4038, %v4326
      %v4328 = vpop.f32.mrf.mxu0
      %v4329 = vpop.f32.mrf.mxu0
      %v4330 = vadd.f32 %v4041, %v4329
      %v4331 = vpop.f32.mrf.mxu0
      %4332 = vmatprep.mubr.bf16.mxu0 %v3118
      %4333 = vmatmul.mubr.bf16.gmra.mxu0 %v3117
      %v4334 = vpop.f32.mrf.mxu0
      %v4335 = vadd.f32 %v4046, %v4334
      %v4336 = vpop.f32.mrf.mxu0
      %v4337 = vpop.f32.mrf.mxu0
      %v4338 = vadd.f32 %v4049, %v4337
      %v4339 = vpop.f32.mrf.mxu0
      %4340 = vmatprep.mubr.bf16.mxu0 %v3126
      %4341 = vmatmul.mubr.bf16.gmra.mxu0 %v3125
      %v4342 = vpop.f32.mrf.mxu0
      %v4343 = vadd.f32 %v4054, %v4342
      %v4344 = vpop.f32.mrf.mxu0
      %v4345 = vpop.f32.mrf.mxu0
      %v4346 = vadd.f32 %v4057, %v4345
      %v4347 = vpop.f32.mrf.mxu0
      %4348 = vmatprep.mubr.bf16.mxu0 %v3134
      %4349 = vmatmul.mubr.bf16.gmra.mxu0 %v3133
      %v4350 = vpop.f32.mrf.mxu0
      %v4351 = vadd.f32 %v4062, %v4350
      %v4352 = vpop.f32.mrf.mxu0
      %v4353 = vpop.f32.mrf.mxu0
      %v4354 = vadd.f32 %v4065, %v4353
      %v4355 = vpop.f32.mrf.mxu0
      %4356 = vmatprep.mubr.bf16.mxu0 %v3142
      %4357 = vmatmul.mubr.bf16.gmra.mxu0 %v3141
      %v4358 = vpop.f32.mrf.mxu0
      %v4359 = vadd.f32 %v4070, %v4358
      %v4360 = vpop.f32.mrf.mxu0
      %v4361 = vpop.f32.mrf.mxu0
      %v4362 = vadd.f32 %v4073, %v4361
      %v4363 = vpop.f32.mrf.mxu0
      %4364 = vmatprep.mubr.bf16.mxu0 %v3150
      %4365 = vmatmul.mubr.bf16.gmra.mxu0 %v3149
      %v4366 = vpop.f32.mrf.mxu0
      %v4367 = vadd.f32 %v4078, %v4366
      %v4368 = vpop.f32.mrf.mxu0
      %v4369 = vpop.f32.mrf.mxu0
      %v4370 = vadd.f32 %v4081, %v4369
      %v4371 = vpop.f32.mrf.mxu0
      %4372 = vmatprep.mubr.bf16.mxu0 %v3158
      %4373 = vmatmul.mubr.bf16.gmra.mxu0 %v3157
      %v4374 = vpop.f32.mrf.mxu0
      %v4375 = vadd.f32 %v4086, %v4374
      %v4376 = vpop.f32.mrf.mxu0
      %v4377 = vpop.f32.mrf.mxu0
      %v4378 = vadd.f32 %v4089, %v4377
      %v4379 = vpop.f32.mrf.mxu0
      %4380 = vmatprep.mubr.bf16.mxu0 %v3166
      %4381 = vmatmul.mubr.bf16.gmra.mxu0 %v3165
      %v4382 = vpop.f32.mrf.mxu0
      %v4383 = vadd.f32 %v4094, %v4382
      %v4384 = vpop.f32.mrf.mxu0
      %v4385 = vpop.f32.mrf.mxu0
      %v4386 = vadd.f32 %v4097, %v4385
      %v4387 = vpop.f32.mrf.mxu0
      %4388 = vmatprep.mubr.bf16.mxu0 %v3174
      %4389 = vmatmul.mubr.bf16.gmra.mxu0 %v3173
      %v4390 = vpop.f32.mrf.mxu0
      %v4391 = vadd.f32 %v4102, %v4390
      %v4392 = vpop.f32.mrf.mxu0
      %v4393 = vpop.f32.mrf.mxu0
      %v4394 = vadd.f32 %v4105, %v4393
      %v4395 = vpop.f32.mrf.mxu0
      %4396 = vmatprep.mubr.bf16.mxu0 %v3182
      %4397 = vmatmul.mubr.bf16.gmra.mxu0 %v3181
      %v4398 = vpop.f32.mrf.mxu0
      %v4399 = vadd.f32 %v4110, %v4398
      %v4400 = vpop.f32.mrf.mxu0
      %v4401 = vpop.f32.mrf.mxu0
      %v4402 = vadd.f32 %v4113, %v4401
      %v4403 = vpop.f32.mrf.mxu0
      %4404 = vmatprep.mubr.bf16.mxu0 %v3190
      %4405 = vmatmul.mubr.bf16.gmra.mxu0 %v3189
      %v4406 = vpop.f32.mrf.mxu0
      %v4407 = vadd.f32 %v4118, %v4406
      %v4408 = vpop.f32.mrf.mxu0
      %v4409 = vpop.f32.mrf.mxu0
      %v4410 = vadd.f32 %v4121, %v4409
      %v4411 = vpop.f32.mrf.mxu0
      %4412 = vmatprep.mubr.bf16.mxu0 %v3198
      %4413 = vmatmul.mubr.bf16.gmra.mxu0 %v3197
      %v4414 = vpop.f32.mrf.mxu0
      %v4415 = vadd.f32 %v4126, %v4414
      %v4416 = vpop.f32.mrf.mxu0
      %v4417 = vpop.f32.mrf.mxu0
      %v4418 = vadd.f32 %v4129, %v4417
      %v4419 = vpop.f32.mrf.mxu0
      %4420 = vmatprep.mubr.bf16.mxu0 %v3206
      %4421 = vmatmul.mubr.bf16.gmra.mxu0 %v3205
      %v4422 = vpop.f32.mrf.mxu0
      %v4423 = vadd.f32 %v4134, %v4422
      %v4424 = vpop.f32.mrf.mxu0
      %v4425 = vpop.f32.mrf.mxu0
      %v4426 = vadd.f32 %v4137, %v4425
      %v4427 = vpop.f32.mrf.mxu0
      %4428 = vmatprep.mubr.bf16.mxu0 %v3214
      %4429 = vmatmul.mubr.bf16.gmra.mxu0 %v3213
      %v4430 = vpop.f32.mrf.mxu0
      %v4431 = vadd.f32 %v4142, %v4430
      %v4432 = vpop.f32.mrf.mxu0
      %v4433 = vpop.f32.mrf.mxu0
      %v4434 = vadd.f32 %v4145, %v4433
      %v4435 = vpop.f32.mrf.mxu0
      %4436 = vmatprep.mubr.bf16.mxu0 %v3222
      %4437 = vmatmul.mubr.bf16.gmra.mxu0 %v3221
      %v4438 = vpop.f32.mrf.mxu0
      %v4439 = vadd.f32 %v4150, %v4438
      %v4440 = vpop.f32.mrf.mxu0
      %v4441 = vpop.f32.mrf.mxu0
      %v4442 = vadd.f32 %v4153, %v4441
      %v4443 = vpop.f32.mrf.mxu0
      %4444 = vmatprep.mubr.bf16.mxu0 %v3230
      %4445 = vmatmul.mubr.bf16.gmra.mxu0 %v3229
      %v4446 = vpop.f32.mrf.mxu0
      %v4447 = vadd.f32 %v4158, %v4446
      %v4448 = vpop.f32.mrf.mxu0
      %v4449 = vpop.f32.mrf.mxu0
      %v4450 = vadd.f32 %v4161, %v4449
      %v4451 = vpop.f32.mrf.mxu0
      %4452 = vmatprep.mubr.bf16.mxu0 %v3238
      %4453 = vmatmul.mubr.bf16.gmra.mxu0 %v3237
      %v4454 = vpop.f32.mrf.mxu0
      %v4455 = vadd.f32 %v4166, %v4454
      %v4456 = vpop.f32.mrf.mxu0
      %v4457 = vpop.f32.mrf.mxu0
      %v4458 = vadd.f32 %v4169, %v4457
      %v4459 = vpop.f32.mrf.mxu0
      %4460 = vmatprep.mubr.bf16.mxu0 %v3246
      %4461 = vmatmul.mubr.bf16.gmra.mxu0 %v3245
      %v4462 = vpop.f32.mrf.mxu0
      %v4463 = vadd.f32 %v4174, %v4462
      %v4464 = vpop.f32.mrf.mxu0
      %v4465 = vpop.f32.mrf.mxu0
      %v4466 = vadd.f32 %v4177, %v4465
      %v4467 = vpop.f32.mrf.mxu0
      %4468 = vmatprep.mubr.bf16.mxu0 %v3254
      %4469 = vmatmul.mubr.bf16.gmra.mxu0 %v3253
      %v4470 = vpop.f32.mrf.mxu0
      %v4471 = vadd.f32 %v4182, %v4470
      %v4472 = vpop.f32.mrf.mxu0
      %v4473 = vpop.f32.mrf.mxu0
      %v4474 = vadd.f32 %v4185, %v4473
      %v4475 = vpop.f32.mrf.mxu0
      %4476 = vmatprep.mubr.bf16.mxu0 %v3262
      %4477 = vmatmul.mubr.bf16.gmra.mxu0 %v3261
      %v4478 = vpop.f32.mrf.mxu0
      %v4479 = vadd.f32 %v4190, %v4478
      %v4480 = vpop.f32.mrf.mxu0
      %v4481 = vpop.f32.mrf.mxu0
      %v4482 = vadd.f32 %v4193, %v4481
      %v4483 = vpop.f32.mrf.mxu0
      %4484 = vmatprep.mubr.bf16.mxu0 %v3270
      %4485 = vmatmul.mubr.bf16.gmra.mxu0 %v3269
      %v4486 = vpop.f32.mrf.mxu0
      %v4487 = vadd.f32 %v4198, %v4486
      %v4488 = vpop.f32.mrf.mxu0
      %v4489 = vpop.f32.mrf.mxu0
      %v4490 = vadd.f32 %v4201, %v4489
      %v4491 = vpop.f32.mrf.mxu0
      %4492 = vmatprep.mubr.bf16.mxu0 %v3278
      %4493 = vmatmul.mubr.bf16.gmra.mxu0 %v3277
      %v4494 = vpop.f32.mrf.mxu0
      %v4495 = vadd.f32 %v4206, %v4494
      %v4496 = vpop.f32.mrf.mxu0
      %v4497 = vpop.f32.mrf.mxu0
      %v4498 = vadd.f32 %v4209, %v4497
      %v4499 = vpop.f32.mrf.mxu0
      %4500 = vdwg.mxu0
      %4501 = vmatprep.subr.bf16.mxu0 0
      %4502 = vmatpush1.bf16.msra.mxu0 %v3834
      %4503 = vmatprep.subr.bf16.mxu0 0
      %4504 = vmatpush1.bf16.msra.mxu0 %v3833
      %4505 = vmatprep.subr.bf16.mxu0 0
      %4506 = vmatpush1.bf16.msra.mxu0 %v3832
      %4507 = vmatprep.subr.bf16.mxu0 0
      %4508 = vmatpush1.bf16.msra.mxu0 %v3831
      %4509 = vmatprep.subr.bf16.mxu0 0
      %4510 = vmatpush1.bf16.msra.mxu0 %v3830
      %4511 = vmatprep.subr.bf16.mxu0 0
      %4512 = vmatpush1.bf16.msra.mxu0 %v3829
      %4513 = vmatprep.subr.bf16.mxu0 0
      %4514 = vmatpush1.bf16.msra.mxu0 %v3828
      %4515 = vmatprep.subr.bf16.mxu0 0
      %4516 = vmatpush1.bf16.msra.mxu0 %v3827
      %4517 = vmatprep.subr.bf16.mxu0 0
      %4518 = vmatpush2.bf16.msra.mxu0 %v3842
      %4519 = vmatprep.subr.bf16.mxu0 0
      %4520 = vmatpush2.bf16.msra.mxu0 %v3841
      %4521 = vmatprep.subr.bf16.mxu0 0
      %4522 = vmatpush2.bf16.msra.mxu0 %v3840
      %4523 = vmatprep.subr.bf16.mxu0 0
      %4524 = vmatpush2.bf16.msra.mxu0 %v3839
      %4525 = vmatprep.subr.bf16.mxu0 0
      %4526 = vmatpush2.bf16.msra.mxu0 %v3838
      %4527 = vmatprep.subr.bf16.mxu0 0
      %4528 = vmatpush2.bf16.msra.mxu0 %v3837
      %4529 = vmatprep.subr.bf16.mxu0 0
      %4530 = vmatpush2.bf16.msra.mxu0 %v3836
      %4531 = vmatprep.subr.bf16.mxu0 0
      %4532 = vmatpush2.bf16.msra.mxu0 %v3835
      %4533 = vmatprep.mubr.bf16.mxu0 %v3032
      %4534 = vmatmul.mubr.bf16.gmra.mxu0 %v3031
      %v4535 = vpop.f32.mrf.mxu0
      %v4536 = vadd.f32 %v4247, %v4535
      %v4537 = vpop.f32.mrf.mxu0
      %v4538 = vpop.f32.mrf.mxu0
      %v4539 = vadd.f32 %v4250, %v4538
      %v4540 = vpop.f32.mrf.mxu0
      %4541 = vmatprep.mubr.bf16.mxu0 %v3040
      %4542 = vmatmul.mubr.bf16.gmra.mxu0 %v3039
      %v4543 = vpop.f32.mrf.mxu0
      %v4544 = vadd.f32 %v4255, %v4543
      %v4545 = vpop.f32.mrf.mxu0
      %v4546 = vpop.f32.mrf.mxu0
      %v4547 = vadd.f32 %v4258, %v4546
      %v4548 = vpop.f32.mrf.mxu0
      %4549 = vmatprep.mubr.bf16.mxu0 %v3048
      %4550 = vmatmul.mubr.bf16.gmra.mxu0 %v3047
      %v4551 = vpop.f32.mrf.mxu0
      %v4552 = vadd.f32 %v4263, %v4551
      %v4553 = vpop.f32.mrf.mxu0
      %v4554 = vpop.f32.mrf.mxu0
      %v4555 = vadd.f32 %v4266, %v4554
      %v4556 = vpop.f32.mrf.mxu0
      %4557 = vmatprep.mubr.bf16.mxu0 %v3056
      %4558 = vmatmul.mubr.bf16.gmra.mxu0 %v3055
      %v4559 = vpop.f32.mrf.mxu0
      %v4560 = vadd.f32 %v4271, %v4559
      %v4561 = vpop.f32.mrf.mxu0
      %v4562 = vpop.f32.mrf.mxu0
      %v4563 = vadd.f32 %v4274, %v4562
      %v4564 = vpop.f32.mrf.mxu0
      %4565 = vmatprep.mubr.bf16.mxu0 %v3064
      %4566 = vmatmul.mubr.bf16.gmra.mxu0 %v3063
      %v4567 = vpop.f32.mrf.mxu0
      %v4568 = vadd.f32 %v4279, %v4567
      %v4569 = vpop.f32.mrf.mxu0
      %v4570 = vpop.f32.mrf.mxu0
      %v4571 = vadd.f32 %v4282, %v4570
      %v4572 = vpop.f32.mrf.mxu0
      %4573 = vmatprep.mubr.bf16.mxu0 %v3072
      %4574 = vmatmul.mubr.bf16.gmra.mxu0 %v3071
      %v4575 = vpop.f32.mrf.mxu0
      %v4576 = vadd.f32 %v4287, %v4575
      %v4577 = vpop.f32.mrf.mxu0
      %v4578 = vpop.f32.mrf.mxu0
      %v4579 = vadd.f32 %v4290, %v4578
      %v4580 = vpop.f32.mrf.mxu0
      %4581 = vmatprep.mubr.bf16.mxu0 %v3080
      %4582 = vmatmul.mubr.bf16.gmra.mxu0 %v3079
      %v4583 = vpop.f32.mrf.mxu0
      %v4584 = vadd.f32 %v4295, %v4583
      %v4585 = vpop.f32.mrf.mxu0
      %v4586 = vpop.f32.mrf.mxu0
      %v4587 = vadd.f32 %v4298, %v4586
      %v4588 = vpop.f32.mrf.mxu0
      %4589 = vmatprep.mubr.bf16.mxu0 %v3088
      %4590 = vmatmul.mubr.bf16.gmra.mxu0 %v3087
      %v4591 = vpop.f32.mrf.mxu0
      %v4592 = vadd.f32 %v4303, %v4591
      %v4593 = vpop.f32.mrf.mxu0
      %v4594 = vpop.f32.mrf.mxu0
      %v4595 = vadd.f32 %v4306, %v4594
      %v4596 = vpop.f32.mrf.mxu0
      %4597 = vmatprep.mubr.bf16.mxu0 %v3096
      %4598 = vmatmul.mubr.bf16.gmra.mxu0 %v3095
      %v4599 = vpop.f32.mrf.mxu0
      %v4600 = vadd.f32 %v4311, %v4599
      %v4601 = vpop.f32.mrf.mxu0
      %v4602 = vpop.f32.mrf.mxu0
      %v4603 = vadd.f32 %v4314, %v4602
      %v4604 = vpop.f32.mrf.mxu0
      %4605 = vmatprep.mubr.bf16.mxu0 %v3104
      %4606 = vmatmul.mubr.bf16.gmra.mxu0 %v3103
      %v4607 = vpop.f32.mrf.mxu0
      %v4608 = vadd.f32 %v4319, %v4607
      %v4609 = vpop.f32.mrf.mxu0
      %v4610 = vpop.f32.mrf.mxu0
      %v4611 = vadd.f32 %v4322, %v4610
      %v4612 = vpop.f32.mrf.mxu0
      %4613 = vmatprep.mubr.bf16.mxu0 %v3112
      %4614 = vmatmul.mubr.bf16.gmra.mxu0 %v3111
      %v4615 = vpop.f32.mrf.mxu0
      %v4616 = vadd.f32 %v4327, %v4615
      %v4617 = vpop.f32.mrf.mxu0
      %v4618 = vpop.f32.mrf.mxu0
      %v4619 = vadd.f32 %v4330, %v4618
      %v4620 = vpop.f32.mrf.mxu0
      %4621 = vmatprep.mubr.bf16.mxu0 %v3120
      %4622 = vmatmul.mubr.bf16.gmra.mxu0 %v3119
      %v4623 = vpop.f32.mrf.mxu0
      %v4624 = vadd.f32 %v4335, %v4623
      %v4625 = vpop.f32.mrf.mxu0
      %v4626 = vpop.f32.mrf.mxu0
      %v4627 = vadd.f32 %v4338, %v4626
      %v4628 = vpop.f32.mrf.mxu0
      %4629 = vmatprep.mubr.bf16.mxu0 %v3128
      %4630 = vmatmul.mubr.bf16.gmra.mxu0 %v3127
      %v4631 = vpop.f32.mrf.mxu0
      %v4632 = vadd.f32 %v4343, %v4631
      %v4633 = vpop.f32.mrf.mxu0
      %v4634 = vpop.f32.mrf.mxu0
      %v4635 = vadd.f32 %v4346, %v4634
      %v4636 = vpop.f32.mrf.mxu0
      %4637 = vmatprep.mubr.bf16.mxu0 %v3136
      %4638 = vmatmul.mubr.bf16.gmra.mxu0 %v3135
      %v4639 = vpop.f32.mrf.mxu0
      %v4640 = vadd.f32 %v4351, %v4639
      %v4641 = vpop.f32.mrf.mxu0
      %v4642 = vpop.f32.mrf.mxu0
      %v4643 = vadd.f32 %v4354, %v4642
      %v4644 = vpop.f32.mrf.mxu0
      %4645 = vmatprep.mubr.bf16.mxu0 %v3144
      %4646 = vmatmul.mubr.bf16.gmra.mxu0 %v3143
      %v4647 = vpop.f32.mrf.mxu0
      %v4648 = vadd.f32 %v4359, %v4647
      %v4649 = vpop.f32.mrf.mxu0
      %v4650 = vpop.f32.mrf.mxu0
      %v4651 = vadd.f32 %v4362, %v4650
      %v4652 = vpop.f32.mrf.mxu0
      %4653 = vmatprep.mubr.bf16.mxu0 %v3152
      %4654 = vmatmul.mubr.bf16.gmra.mxu0 %v3151
      %v4655 = vpop.f32.mrf.mxu0
      %v4656 = vadd.f32 %v4367, %v4655
      %v4657 = vpop.f32.mrf.mxu0
      %v4658 = vpop.f32.mrf.mxu0
      %v4659 = vadd.f32 %v4370, %v4658
      %v4660 = vpop.f32.mrf.mxu0
      %4661 = vmatprep.mubr.bf16.mxu0 %v3160
      %4662 = vmatmul.mubr.bf16.gmra.mxu0 %v3159
      %v4663 = vpop.f32.mrf.mxu0
      %v4664 = vadd.f32 %v4375, %v4663
      %v4665 = vpop.f32.mrf.mxu0
      %v4666 = vpop.f32.mrf.mxu0
      %v4667 = vadd.f32 %v4378, %v4666
      %v4668 = vpop.f32.mrf.mxu0
      %4669 = vmatprep.mubr.bf16.mxu0 %v3168
      %4670 = vmatmul.mubr.bf16.gmra.mxu0 %v3167
      %v4671 = vpop.f32.mrf.mxu0
      %v4672 = vadd.f32 %v4383, %v4671
      %v4673 = vpop.f32.mrf.mxu0
      %v4674 = vpop.f32.mrf.mxu0
      %v4675 = vadd.f32 %v4386, %v4674
      %v4676 = vpop.f32.mrf.mxu0
      %4677 = vmatprep.mubr.bf16.mxu0 %v3176
      %4678 = vmatmul.mubr.bf16.gmra.mxu0 %v3175
      %v4679 = vpop.f32.mrf.mxu0
      %v4680 = vadd.f32 %v4391, %v4679
      %v4681 = vpop.f32.mrf.mxu0
      %v4682 = vpop.f32.mrf.mxu0
      %v4683 = vadd.f32 %v4394, %v4682
      %v4684 = vpop.f32.mrf.mxu0
      %4685 = vmatprep.mubr.bf16.mxu0 %v3184
      %4686 = vmatmul.mubr.bf16.gmra.mxu0 %v3183
      %v4687 = vpop.f32.mrf.mxu0
      %v4688 = vadd.f32 %v4399, %v4687
      %v4689 = vpop.f32.mrf.mxu0
      %v4690 = vpop.f32.mrf.mxu0
      %v4691 = vadd.f32 %v4402, %v4690
      %v4692 = vpop.f32.mrf.mxu0
      %4693 = vmatprep.mubr.bf16.mxu0 %v3192
      %4694 = vmatmul.mubr.bf16.gmra.mxu0 %v3191
      %v4695 = vpop.f32.mrf.mxu0
      %v4696 = vadd.f32 %v4407, %v4695
      %v4697 = vpop.f32.mrf.mxu0
      %v4698 = vpop.f32.mrf.mxu0
      %v4699 = vadd.f32 %v4410, %v4698
      %v4700 = vpop.f32.mrf.mxu0
      %4701 = vmatprep.mubr.bf16.mxu0 %v3200
      %4702 = vmatmul.mubr.bf16.gmra.mxu0 %v3199
      %v4703 = vpop.f32.mrf.mxu0
      %v4704 = vadd.f32 %v4415, %v4703
      %v4705 = vpop.f32.mrf.mxu0
      %v4706 = vpop.f32.mrf.mxu0
      %v4707 = vadd.f32 %v4418, %v4706
      %v4708 = vpop.f32.mrf.mxu0
      %4709 = vmatprep.mubr.bf16.mxu0 %v3208
      %4710 = vmatmul.mubr.bf16.gmra.mxu0 %v3207
      %v4711 = vpop.f32.mrf.mxu0
      %v4712 = vadd.f32 %v4423, %v4711
      %v4713 = vpop.f32.mrf.mxu0
      %v4714 = vpop.f32.mrf.mxu0
      %v4715 = vadd.f32 %v4426, %v4714
      %v4716 = vpop.f32.mrf.mxu0
      %4717 = vmatprep.mubr.bf16.mxu0 %v3216
      %4718 = vmatmul.mubr.bf16.gmra.mxu0 %v3215
      %v4719 = vpop.f32.mrf.mxu0
      %v4720 = vadd.f32 %v4431, %v4719
      %v4721 = vpop.f32.mrf.mxu0
      %v4722 = vpop.f32.mrf.mxu0
      %v4723 = vadd.f32 %v4434, %v4722
      %v4724 = vpop.f32.mrf.mxu0
      %4725 = vmatprep.mubr.bf16.mxu0 %v3224
      %4726 = vmatmul.mubr.bf16.gmra.mxu0 %v3223
      %v4727 = vpop.f32.mrf.mxu0
      %v4728 = vadd.f32 %v4439, %v4727
      %v4729 = vpop.f32.mrf.mxu0
      %v4730 = vpop.f32.mrf.mxu0
      %v4731 = vadd.f32 %v4442, %v4730
      %v4732 = vpop.f32.mrf.mxu0
      %4733 = vmatprep.mubr.bf16.mxu0 %v3232
      %4734 = vmatmul.mubr.bf16.gmra.mxu0 %v3231
      %v4735 = vpop.f32.mrf.mxu0
      %v4736 = vadd.f32 %v4447, %v4735
      %v4737 = vpop.f32.mrf.mxu0
      %v4738 = vpop.f32.mrf.mxu0
      %v4739 = vadd.f32 %v4450, %v4738
      %v4740 = vpop.f32.mrf.mxu0
      %4741 = vmatprep.mubr.bf16.mxu0 %v3240
      %4742 = vmatmul.mubr.bf16.gmra.mxu0 %v3239
      %v4743 = vpop.f32.mrf.mxu0
      %v4744 = vadd.f32 %v4455, %v4743
      %v4745 = vpop.f32.mrf.mxu0
      %v4746 = vpop.f32.mrf.mxu0
      %v4747 = vadd.f32 %v4458, %v4746
      %v4748 = vpop.f32.mrf.mxu0
      %4749 = vmatprep.mubr.bf16.mxu0 %v3248
      %4750 = vmatmul.mubr.bf16.gmra.mxu0 %v3247
      %v4751 = vpop.f32.mrf.mxu0
      %v4752 = vadd.f32 %v4463, %v4751
      %v4753 = vpop.f32.mrf.mxu0
      %v4754 = vpop.f32.mrf.mxu0
      %v4755 = vadd.f32 %v4466, %v4754
      %v4756 = vpop.f32.mrf.mxu0
      %4757 = vmatprep.mubr.bf16.mxu0 %v3256
      %4758 = vmatmul.mubr.bf16.gmra.mxu0 %v3255
      %v4759 = vpop.f32.mrf.mxu0
      %v4760 = vadd.f32 %v4471, %v4759
      %v4761 = vpop.f32.mrf.mxu0
      %v4762 = vpop.f32.mrf.mxu0
      %v4763 = vadd.f32 %v4474, %v4762
      %v4764 = vpop.f32.mrf.mxu0
      %4765 = vmatprep.mubr.bf16.mxu0 %v3264
      %4766 = vmatmul.mubr.bf16.gmra.mxu0 %v3263
      %v4767 = vpop.f32.mrf.mxu0
      %v4768 = vadd.f32 %v4479, %v4767
      %v4769 = vpop.f32.mrf.mxu0
      %v4770 = vpop.f32.mrf.mxu0
      %v4771 = vadd.f32 %v4482, %v4770
      %v4772 = vpop.f32.mrf.mxu0
      %4773 = vmatprep.mubr.bf16.mxu0 %v3272
      %4774 = vmatmul.mubr.bf16.gmra.mxu0 %v3271
      %v4775 = vpop.f32.mrf.mxu0
      %v4776 = vadd.f32 %v4487, %v4775
      %v4777 = vpop.f32.mrf.mxu0
      %v4778 = vpop.f32.mrf.mxu0
      %v4779 = vadd.f32 %v4490, %v4778
      %v4780 = vpop.f32.mrf.mxu0
      %4781 = vmatprep.mubr.bf16.mxu0 %v3280
      %4782 = vmatmul.mubr.bf16.gmra.mxu0 %v3279
      %v4783 = vpop.f32.mrf.mxu0
      %v4784 = vadd.f32 %v4495, %v4783
      %v4785 = vpop.f32.mrf.mxu0
      %v4786 = vpop.f32.mrf.mxu0
      %v4787 = vadd.f32 %v4498, %v4786
      %v4788 = vpop.f32.mrf.mxu0
      %4789 = vdwg.mxu0
      %4790 = vmatprep.subr.bf16.mxu0 0
      %4791 = vmatpush1.bf16.msra.mxu0 %v3850
      %4792 = vmatprep.subr.bf16.mxu0 0
      %4793 = vmatpush1.bf16.msra.mxu0 %v3849
      %4794 = vmatprep.subr.bf16.mxu0 0
      %4795 = vmatpush1.bf16.msra.mxu0 %v3848
      %4796 = vmatprep.subr.bf16.mxu0 0
      %4797 = vmatpush1.bf16.msra.mxu0 %v3847
      %4798 = vmatprep.subr.bf16.mxu0 0
      %4799 = vmatpush1.bf16.msra.mxu0 %v3846
      %4800 = vmatprep.subr.bf16.mxu0 0
      %4801 = vmatpush1.bf16.msra.mxu0 %v3845
      %4802 = vmatprep.subr.bf16.mxu0 0
      %4803 = vmatpush1.bf16.msra.mxu0 %v3844
      %4804 = vmatprep.subr.bf16.mxu0 0
      %4805 = vmatpush1.bf16.msra.mxu0 %v3843
      %4806 = vmatprep.subr.bf16.mxu0 0
      %4807 = vmatpush2.bf16.msra.mxu0 %v3858
      %4808 = vmatprep.subr.bf16.mxu0 0
      %4809 = vmatpush2.bf16.msra.mxu0 %v3857
      %4810 = vmatprep.subr.bf16.mxu0 0
      %4811 = vmatpush2.bf16.msra.mxu0 %v3856
      %4812 = vmatprep.subr.bf16.mxu0 0
      %4813 = vmatpush2.bf16.msra.mxu0 %v3855
      %4814 = vmatprep.subr.bf16.mxu0 0
      %4815 = vmatpush2.bf16.msra.mxu0 %v3854
      %4816 = vmatprep.subr.bf16.mxu0 0
      %4817 = vmatpush2.bf16.msra.mxu0 %v3853
      %4818 = vmatprep.subr.bf16.mxu0 0
      %4819 = vmatpush2.bf16.msra.mxu0 %v3852
      %4820 = vmatprep.subr.bf16.mxu0 0
      %4821 = vmatpush2.bf16.msra.mxu0 %v3851
      %4822 = vmatprep.mubr.bf16.mxu0 %v3034
      %4823 = vmatmul.mubr.bf16.gmra.mxu0 %v3033
      %v4824 = vpop.f32.mrf.mxu0
      %v4825 = vadd.f32 %v4536, %v4824
      %v4826 = vpop.f32.mrf.mxu0
      %v4827 = vpop.f32.mrf.mxu0
      %v4828 = vadd.f32 %v4539, %v4827
      %v4829 = vpop.f32.mrf.mxu0
      %4830 = vmatprep.mubr.bf16.mxu0 %v3042
      %4831 = vmatmul.mubr.bf16.gmra.mxu0 %v3041
      %v4832 = vpop.f32.mrf.mxu0
      %v4833 = vadd.f32 %v4544, %v4832
      %v4834 = vpop.f32.mrf.mxu0
      %v4835 = vpop.f32.mrf.mxu0
      %v4836 = vadd.f32 %v4547, %v4835
      %v4837 = vpop.f32.mrf.mxu0
      %4838 = vmatprep.mubr.bf16.mxu0 %v3050
      %4839 = vmatmul.mubr.bf16.gmra.mxu0 %v3049
      %v4840 = vpop.f32.mrf.mxu0
      %v4841 = vadd.f32 %v4552, %v4840
      %v4842 = vpop.f32.mrf.mxu0
      %v4843 = vpop.f32.mrf.mxu0
      %v4844 = vadd.f32 %v4555, %v4843
      %v4845 = vpop.f32.mrf.mxu0
      %4846 = vmatprep.mubr.bf16.mxu0 %v3058
      %4847 = vmatmul.mubr.bf16.gmra.mxu0 %v3057
      %v4848 = vpop.f32.mrf.mxu0
      %v4849 = vadd.f32 %v4560, %v4848
      %v4850 = vpop.f32.mrf.mxu0
      %v4851 = vpop.f32.mrf.mxu0
      %v4852 = vadd.f32 %v4563, %v4851
      %v4853 = vpop.f32.mrf.mxu0
      %4854 = vmatprep.mubr.bf16.mxu0 %v3066
      %4855 = vmatmul.mubr.bf16.gmra.mxu0 %v3065
      %v4856 = vpop.f32.mrf.mxu0
      %v4857 = vadd.f32 %v4568, %v4856
      %v4858 = vpop.f32.mrf.mxu0
      %v4859 = vpop.f32.mrf.mxu0
      %v4860 = vadd.f32 %v4571, %v4859
      %v4861 = vpop.f32.mrf.mxu0
      %4862 = vmatprep.mubr.bf16.mxu0 %v3074
      %4863 = vmatmul.mubr.bf16.gmra.mxu0 %v3073
      %v4864 = vpop.f32.mrf.mxu0
      %v4865 = vadd.f32 %v4576, %v4864
      %v4866 = vpop.f32.mrf.mxu0
      %v4867 = vpop.f32.mrf.mxu0
      %v4868 = vadd.f32 %v4579, %v4867
      %v4869 = vpop.f32.mrf.mxu0
      %4870 = vmatprep.mubr.bf16.mxu0 %v3082
      %4871 = vmatmul.mubr.bf16.gmra.mxu0 %v3081
      %v4872 = vpop.f32.mrf.mxu0
      %v4873 = vadd.f32 %v4584, %v4872
      %v4874 = vpop.f32.mrf.mxu0
      %v4875 = vpop.f32.mrf.mxu0
      %v4876 = vadd.f32 %v4587, %v4875
      %v4877 = vpop.f32.mrf.mxu0
      %4878 = vmatprep.mubr.bf16.mxu0 %v3090
      %4879 = vmatmul.mubr.bf16.gmra.mxu0 %v3089
      %v4880 = vpop.f32.mrf.mxu0
      %v4881 = vadd.f32 %v4592, %v4880
      %v4882 = vpop.f32.mrf.mxu0
      %v4883 = vpop.f32.mrf.mxu0
      %v4884 = vadd.f32 %v4595, %v4883
      %v4885 = vpop.f32.mrf.mxu0
      %4886 = vmatprep.mubr.bf16.mxu0 %v3098
      %4887 = vmatmul.mubr.bf16.gmra.mxu0 %v3097
      %v4888 = vpop.f32.mrf.mxu0
      %v4889 = vadd.f32 %v4600, %v4888
      %v4890 = vpop.f32.mrf.mxu0
      %v4891 = vpop.f32.mrf.mxu0
      %v4892 = vadd.f32 %v4603, %v4891
      %v4893 = vpop.f32.mrf.mxu0
      %4894 = vmatprep.mubr.bf16.mxu0 %v3106
      %4895 = vmatmul.mubr.bf16.gmra.mxu0 %v3105
      %v4896 = vpop.f32.mrf.mxu0
      %v4897 = vadd.f32 %v4608, %v4896
      %v4898 = vpop.f32.mrf.mxu0
      %v4899 = vpop.f32.mrf.mxu0
      %v4900 = vadd.f32 %v4611, %v4899
      %v4901 = vpop.f32.mrf.mxu0
      %4902 = vmatprep.mubr.bf16.mxu0 %v3114
      %4903 = vmatmul.mubr.bf16.gmra.mxu0 %v3113
      %v4904 = vpop.f32.mrf.mxu0
      %v4905 = vadd.f32 %v4616, %v4904
      %v4906 = vpop.f32.mrf.mxu0
      %v4907 = vpop.f32.mrf.mxu0
      %v4908 = vadd.f32 %v4619, %v4907
      %v4909 = vpop.f32.mrf.mxu0
      %4910 = vmatprep.mubr.bf16.mxu0 %v3122
      %4911 = vmatmul.mubr.bf16.gmra.mxu0 %v3121
      %v4912 = vpop.f32.mrf.mxu0
      %v4913 = vadd.f32 %v4624, %v4912
      %v4914 = vpop.f32.mrf.mxu0
      %v4915 = vpop.f32.mrf.mxu0
      %v4916 = vadd.f32 %v4627, %v4915
      %v4917 = vpop.f32.mrf.mxu0
      %4918 = vmatprep.mubr.bf16.mxu0 %v3130
      %4919 = vmatmul.mubr.bf16.gmra.mxu0 %v3129
      %v4920 = vpop.f32.mrf.mxu0
      %v4921 = vadd.f32 %v4632, %v4920
      %v4922 = vpop.f32.mrf.mxu0
      %v4923 = vpop.f32.mrf.mxu0
      %v4924 = vadd.f32 %v4635, %v4923
      %v4925 = vpop.f32.mrf.mxu0
      %4926 = vmatprep.mubr.bf16.mxu0 %v3138
      %4927 = vmatmul.mubr.bf16.gmra.mxu0 %v3137
      %v4928 = vpop.f32.mrf.mxu0
      %v4929 = vadd.f32 %v4640, %v4928
      %v4930 = vpop.f32.mrf.mxu0
      %v4931 = vpop.f32.mrf.mxu0
      %v4932 = vadd.f32 %v4643, %v4931
      %v4933 = vpop.f32.mrf.mxu0
      %4934 = vmatprep.mubr.bf16.mxu0 %v3146
      %4935 = vmatmul.mubr.bf16.gmra.mxu0 %v3145
      %v4936 = vpop.f32.mrf.mxu0
      %v4937 = vadd.f32 %v4648, %v4936
      %v4938 = vpop.f32.mrf.mxu0
      %v4939 = vpop.f32.mrf.mxu0
      %v4940 = vadd.f32 %v4651, %v4939
      %v4941 = vpop.f32.mrf.mxu0
      %4942 = vmatprep.mubr.bf16.mxu0 %v3154
      %4943 = vmatmul.mubr.bf16.gmra.mxu0 %v3153
      %v4944 = vpop.f32.mrf.mxu0
      %v4945 = vadd.f32 %v4656, %v4944
      %v4946 = vpop.f32.mrf.mxu0
      %v4947 = vpop.f32.mrf.mxu0
      %v4948 = vadd.f32 %v4659, %v4947
      %v4949 = vpop.f32.mrf.mxu0
      %4950 = vmatprep.mubr.bf16.mxu0 %v3162
      %4951 = vmatmul.mubr.bf16.gmra.mxu0 %v3161
      %v4952 = vpop.f32.mrf.mxu0
      %v4953 = vadd.f32 %v4664, %v4952
      %v4954 = vpop.f32.mrf.mxu0
      %v4955 = vpop.f32.mrf.mxu0
      %v4956 = vadd.f32 %v4667, %v4955
      %v4957 = vpop.f32.mrf.mxu0
      %4958 = vmatprep.mubr.bf16.mxu0 %v3170
      %4959 = vmatmul.mubr.bf16.gmra.mxu0 %v3169
      %v4960 = vpop.f32.mrf.mxu0
      %v4961 = vadd.f32 %v4672, %v4960
      %v4962 = vpop.f32.mrf.mxu0
      %v4963 = vpop.f32.mrf.mxu0
      %v4964 = vadd.f32 %v4675, %v4963
      %v4965 = vpop.f32.mrf.mxu0
      %4966 = vmatprep.mubr.bf16.mxu0 %v3178
      %4967 = vmatmul.mubr.bf16.gmra.mxu0 %v3177
      %v4968 = vpop.f32.mrf.mxu0
      %v4969 = vadd.f32 %v4680, %v4968
      %v4970 = vpop.f32.mrf.mxu0
      %v4971 = vpop.f32.mrf.mxu0
      %v4972 = vadd.f32 %v4683, %v4971
      %v4973 = vpop.f32.mrf.mxu0
      %4974 = vmatprep.mubr.bf16.mxu0 %v3186
      %4975 = vmatmul.mubr.bf16.gmra.mxu0 %v3185
      %v4976 = vpop.f32.mrf.mxu0
      %v4977 = vadd.f32 %v4688, %v4976
      %v4978 = vpop.f32.mrf.mxu0
      %v4979 = vpop.f32.mrf.mxu0
      %v4980 = vadd.f32 %v4691, %v4979
      %v4981 = vpop.f32.mrf.mxu0
      %4982 = vmatprep.mubr.bf16.mxu0 %v3194
      %4983 = vmatmul.mubr.bf16.gmra.mxu0 %v3193
      %v4984 = vpop.f32.mrf.mxu0
      %v4985 = vadd.f32 %v4696, %v4984
      %v4986 = vpop.f32.mrf.mxu0
      %v4987 = vpop.f32.mrf.mxu0
      %v4988 = vadd.f32 %v4699, %v4987
      %v4989 = vpop.f32.mrf.mxu0
      %4990 = vmatprep.mubr.bf16.mxu0 %v3202
      %4991 = vmatmul.mubr.bf16.gmra.mxu0 %v3201
      %v4992 = vpop.f32.mrf.mxu0
      %v4993 = vadd.f32 %v4704, %v4992
      %v4994 = vpop.f32.mrf.mxu0
      %v4995 = vpop.f32.mrf.mxu0
      %v4996 = vadd.f32 %v4707, %v4995
      %v4997 = vpop.f32.mrf.mxu0
      %4998 = vmatprep.mubr.bf16.mxu0 %v3210
      %4999 = vmatmul.mubr.bf16.gmra.mxu0 %v3209
      %v5000 = vpop.f32.mrf.mxu0
      %v5001 = vadd.f32 %v4712, %v5000
      %v5002 = vpop.f32.mrf.mxu0
      %v5003 = vpop.f32.mrf.mxu0
      %v5004 = vadd.f32 %v4715, %v5003
      %v5005 = vpop.f32.mrf.mxu0
      %5006 = vmatprep.mubr.bf16.mxu0 %v3218
      %5007 = vmatmul.mubr.bf16.gmra.mxu0 %v3217
      %v5008 = vpop.f32.mrf.mxu0
      %v5009 = vadd.f32 %v4720, %v5008
      %v5010 = vpop.f32.mrf.mxu0
      %v5011 = vpop.f32.mrf.mxu0
      %v5012 = vadd.f32 %v4723, %v5011
      %v5013 = vpop.f32.mrf.mxu0
      %5014 = vmatprep.mubr.bf16.mxu0 %v3226
      %5015 = vmatmul.mubr.bf16.gmra.mxu0 %v3225
      %v5016 = vpop.f32.mrf.mxu0
      %v5017 = vadd.f32 %v4728, %v5016
      %v5018 = vpop.f32.mrf.mxu0
      %v5019 = vpop.f32.mrf.mxu0
      %v5020 = vadd.f32 %v4731, %v5019
      %v5021 = vpop.f32.mrf.mxu0
      %5022 = vmatprep.mubr.bf16.mxu0 %v3234
      %5023 = vmatmul.mubr.bf16.gmra.mxu0 %v3233
      %v5024 = vpop.f32.mrf.mxu0
      %v5025 = vadd.f32 %v4736, %v5024
      %v5026 = vpop.f32.mrf.mxu0
      %v5027 = vpop.f32.mrf.mxu0
      %v5028 = vadd.f32 %v4739, %v5027
      %v5029 = vpop.f32.mrf.mxu0
      %5030 = vmatprep.mubr.bf16.mxu0 %v3242
      %5031 = vmatmul.mubr.bf16.gmra.mxu0 %v3241
      %v5032 = vpop.f32.mrf.mxu0
      %v5033 = vadd.f32 %v4744, %v5032
      %v5034 = vpop.f32.mrf.mxu0
      %v5035 = vpop.f32.mrf.mxu0
      %v5036 = vadd.f32 %v4747, %v5035
      %v5037 = vpop.f32.mrf.mxu0
      %5038 = vmatprep.mubr.bf16.mxu0 %v3250
      %5039 = vmatmul.mubr.bf16.gmra.mxu0 %v3249
      %v5040 = vpop.f32.mrf.mxu0
      %v5041 = vadd.f32 %v4752, %v5040
      %v5042 = vpop.f32.mrf.mxu0
      %v5043 = vpop.f32.mrf.mxu0
      %v5044 = vadd.f32 %v4755, %v5043
      %v5045 = vpop.f32.mrf.mxu0
      %5046 = vmatprep.mubr.bf16.mxu0 %v3258
      %5047 = vmatmul.mubr.bf16.gmra.mxu0 %v3257
      %v5048 = vpop.f32.mrf.mxu0
      %v5049 = vadd.f32 %v4760, %v5048
      %v5050 = vpop.f32.mrf.mxu0
      %v5051 = vpop.f32.mrf.mxu0
      %v5052 = vadd.f32 %v4763, %v5051
      %v5053 = vpop.f32.mrf.mxu0
      %5054 = vmatprep.mubr.bf16.mxu0 %v3266
      %5055 = vmatmul.mubr.bf16.gmra.mxu0 %v3265
      %v5056 = vpop.f32.mrf.mxu0
      %v5057 = vadd.f32 %v4768, %v5056
      %v5058 = vpop.f32.mrf.mxu0
      %v5059 = vpop.f32.mrf.mxu0
      %v5060 = vadd.f32 %v4771, %v5059
      %v5061 = vpop.f32.mrf.mxu0
      %5062 = vmatprep.mubr.bf16.mxu0 %v3274
      %5063 = vmatmul.mubr.bf16.gmra.mxu0 %v3273
      %v5064 = vpop.f32.mrf.mxu0
      %v5065 = vadd.f32 %v4776, %v5064
      %v5066 = vpop.f32.mrf.mxu0
      %v5067 = vpop.f32.mrf.mxu0
      %v5068 = vadd.f32 %v4779, %v5067
      %v5069 = vpop.f32.mrf.mxu0
      %5070 = vmatprep.mubr.bf16.mxu0 %v3282
      %5071 = vmatmul.mubr.bf16.gmra.mxu0 %v3281
      %v5072 = vpop.f32.mrf.mxu0
      %v5073 = vadd.f32 %v4784, %v5072
      %v5074 = vpop.f32.mrf.mxu0
      %v5075 = vpop.f32.mrf.mxu0
      %v5076 = vadd.f32 %v4787, %v5075
      %v5077 = vpop.f32.mrf.mxu0
      %5078 = vdwg.mxu0
      %v5079 = vmax.f32 %v4825, 0.0
      %v5080 = vmax.f32 %v4828, 0.0
      %v5081 = vmax.f32 %v4833, 0.0
      %v5082 = vmax.f32 %v4836, 0.0
      %v5083 = vmax.f32 %v4841, 0.0
      %v5084 = vmax.f32 %v4844, 0.0
      %v5085 = vmax.f32 %v4849, 0.0
      %v5086 = vmax.f32 %v4852, 0.0
      %v5087 = vmax.f32 %v4857, 0.0
      %v5088 = vmax.f32 %v4860, 0.0
      %v5089 = vmax.f32 %v4865, 0.0
      %v5090 = vmax.f32 %v4868, 0.0
      %v5091 = vmax.f32 %v4873, 0.0
      %v5092 = vmax.f32 %v4876, 0.0
      %v5093 = vmax.f32 %v4881, 0.0
      %v5094 = vmax.f32 %v4884, 0.0
      %v5095 = vmax.f32 %v4889, 0.0
      %v5096 = vmax.f32 %v4892, 0.0
      %v5097 = vmax.f32 %v4897, 0.0
      %v5098 = vmax.f32 %v4900, 0.0
      %v5099 = vmax.f32 %v4905, 0.0
      %v5100 = vmax.f32 %v4908, 0.0
      %v5101 = vmax.f32 %v4913, 0.0
      %v5102 = vmax.f32 %v4916, 0.0
      %v5103 = vmax.f32 %v4921, 0.0
      %v5104 = vmax.f32 %v4924, 0.0
      %v5105 = vmax.f32 %v4929, 0.0
      %v5106 = vmax.f32 %v4932, 0.0
      %v5107 = vmax.f32 %v4937, 0.0
      %v5108 = vmax.f32 %v4940, 0.0
      %v5109 = vmax.f32 %v4945, 0.0
      %v5110 = vmax.f32 %v4948, 0.0
      %v5111 = vmax.f32 %v4953, 0.0
      %v5112 = vmax.f32 %v4956, 0.0
      %v5113 = vmax.f32 %v4961, 0.0
      %v5114 = vmax.f32 %v4964, 0.0
      %v5115 = vmax.f32 %v4969, 0.0
      %v5116 = vmax.f32 %v4972, 0.0
      %v5117 = vmax.f32 %v4977, 0.0
      %v5118 = vmax.f32 %v4980, 0.0
      %v5119 = vmax.f32 %v4985, 0.0
      %v5120 = vmax.f32 %v4988, 0.0
      %v5121 = vmax.f32 %v4993, 0.0
      %v5122 = vmax.f32 %v4996, 0.0
      %v5123 = vmax.f32 %v5001, 0.0
      %v5124 = vmax.f32 %v5004, 0.0
      %v5125 = vmax.f32 %v5009, 0.0
      %v5126 = vmax.f32 %v5012, 0.0
      %v5127 = vmax.f32 %v5017, 0.0
      %v5128 = vmax.f32 %v5020, 0.0
      %v5129 = vmax.f32 %v5025, 0.0
      %v5130 = vmax.f32 %v5028, 0.0
      %v5131 = vmax.f32 %v5033, 0.0
      %v5132 = vmax.f32 %v5036, 0.0
      %v5133 = vmax.f32 %v5041, 0.0
      %v5134 = vmax.f32 %v5044, 0.0
      %v5135 = vmax.f32 %v5049, 0.0
      %v5136 = vmax.f32 %v5052, 0.0
      %v5137 = vmax.f32 %v5057, 0.0
      %v5138 = vmax.f32 %v5060, 0.0
      %v5139 = vmax.f32 %v5065, 0.0
      %v5140 = vmax.f32 %v5068, 0.0
      %v5141 = vmax.f32 %v5073, 0.0
      %v5142 = vmax.f32 %v5076, 0.0
      %v5143 = vpack.c.bf16 %v5080, %v5079
      %v5144 = vpack.c.bf16 %v5082, %v5081
      %v5145 = vpack.c.bf16 %v5084, %v5083
      %v5146 = vpack.c.bf16 %v5086, %v5085
      %v5147 = vpack.c.bf16 %v5088, %v5087
      %v5148 = vpack.c.bf16 %v5090, %v5089
      %v5149 = vpack.c.bf16 %v5092, %v5091
      %v5150 = vpack.c.bf16 %v5094, %v5093
      %v5151 = vpack.c.bf16 %v5096, %v5095
      %v5152 = vpack.c.bf16 %v5098, %v5097
      %v5153 = vpack.c.bf16 %v5100, %v5099
      %v5154 = vpack.c.bf16 %v5102, %v5101
      %v5155 = vpack.c.bf16 %v5104, %v5103
      %v5156 = vpack.c.bf16 %v5106, %v5105
      %v5157 = vpack.c.bf16 %v5108, %v5107
      %v5158 = vpack.c.bf16 %v5110, %v5109
      %v5159 = vpack.c.bf16 %v5112, %v5111
      %v5160 = vpack.c.bf16 %v5114, %v5113
      %v5161 = vpack.c.bf16 %v5116, %v5115
      %v5162 = vpack.c.bf16 %v5118, %v5117
      %v5163 = vpack.c.bf16 %v5120, %v5119
      %v5164 = vpack.c.bf16 %v5122, %v5121
      %v5165 = vpack.c.bf16 %v5124, %v5123
      %v5166 = vpack.c.bf16 %v5126, %v5125
      %v5167 = vpack.c.bf16 %v5128, %v5127
      %v5168 = vpack.c.bf16 %v5130, %v5129
      %v5169 = vpack.c.bf16 %v5132, %v5131
      %v5170 = vpack.c.bf16 %v5134, %v5133
      %v5171 = vpack.c.bf16 %v5136, %v5135
      %v5172 = vpack.c.bf16 %v5138, %v5137
      %v5173 = vpack.c.bf16 %v5140, %v5139
      %v5174 = vpack.c.bf16 %v5142, %v5141
      %v5207 = vunpack.c.l.b16 %v5143
      %v5208 = vunpack.c.h.b16 %v5143
      %v5209 = vunpack.c.l.b16 %v5144
      %v5210 = vunpack.c.h.b16 %v5144
      %v5211 = vunpack.c.l.b16 %v5145
      %v5212 = vunpack.c.h.b16 %v5145
      %v5213 = vunpack.c.l.b16 %v5146
      %v5214 = vunpack.c.h.b16 %v5146
      %v5215 = vunpack.c.l.b16 %v5147
      %v5216 = vunpack.c.h.b16 %v5147
      %v5217 = vunpack.c.l.b16 %v5148
      %v5218 = vunpack.c.h.b16 %v5148
      %v5219 = vunpack.c.l.b16 %v5149
      %v5220 = vunpack.c.h.b16 %v5149
      %v5221 = vunpack.c.l.b16 %v5150
      %v5222 = vunpack.c.h.b16 %v5150
      %v5223 = vunpack.c.l.b16 %v5151
      %v5224 = vunpack.c.h.b16 %v5151
      %v5225 = vunpack.c.l.b16 %v5152
      %v5226 = vunpack.c.h.b16 %v5152
      %v5227 = vunpack.c.l.b16 %v5153
      %v5228 = vunpack.c.h.b16 %v5153
      %v5229 = vunpack.c.l.b16 %v5154
      %v5230 = vunpack.c.h.b16 %v5154
      %v5231 = vunpack.c.l.b16 %v5155
      %v5232 = vunpack.c.h.b16 %v5155
      %v5233 = vunpack.c.l.b16 %v5156
      %v5234 = vunpack.c.h.b16 %v5156
      %v5235 = vunpack.c.l.b16 %v5157
      %v5236 = vunpack.c.h.b16 %v5157
      %v5237 = vunpack.c.l.b16 %v5158
      %v5238 = vunpack.c.h.b16 %v5158
      %v5239 = vunpack.c.l.b16 %v5159
      %v5240 = vunpack.c.h.b16 %v5159
      %v5241 = vunpack.c.l.b16 %v5160
      %v5242 = vunpack.c.h.b16 %v5160
      %v5243 = vunpack.c.l.b16 %v5161
      %v5244 = vunpack.c.h.b16 %v5161
      %v5245 = vunpack.c.l.b16 %v5162
      %v5246 = vunpack.c.h.b16 %v5162
      %v5247 = vunpack.c.l.b16 %v5163
      %v5248 = vunpack.c.h.b16 %v5163
      %v5249 = vunpack.c.l.b16 %v5164
      %v5250 = vunpack.c.h.b16 %v5164
      %v5251 = vunpack.c.l.b16 %v5165
      %v5252 = vunpack.c.h.b16 %v5165
      %v5253 = vunpack.c.l.b16 %v5166
      %v5254 = vunpack.c.h.b16 %v5166
      %v5255 = vunpack.c.l.b16 %v5167
      %v5256 = vunpack.c.h.b16 %v5167
      %v5257 = vunpack.c.l.b16 %v5168
      %v5258 = vunpack.c.h.b16 %v5168
      %v5259 = vunpack.c.l.b16 %v5169
      %v5260 = vunpack.c.h.b16 %v5169
      %v5261 = vunpack.c.l.b16 %v5170
      %v5262 = vunpack.c.h.b16 %v5170
      %v5263 = vunpack.c.l.b16 %v5171
      %v5264 = vunpack.c.h.b16 %v5171
      %v5265 = vunpack.c.l.b16 %v5172
      %v5266 = vunpack.c.h.b16 %v5172
      %v5267 = vunpack.c.l.b16 %v5173
      %v5268 = vunpack.c.h.b16 %v5173
      %v5269 = vunpack.c.l.b16 %v5174
      %v5270 = vunpack.c.h.b16 %v5174
      %v5271 = vpack.c.b16 %v5207, %v5207
      %v5272 = vpack.c.b16 %v5208, %v5208
      %v5273 = vpack.c.b16 %v5209, %v5209
      %v5274 = vpack.c.b16 %v5210, %v5210
      %v5275 = vpack.c.b16 %v5211, %v5211
      %v5276 = vpack.c.b16 %v5212, %v5212
      %v5277 = vpack.c.b16 %v5213, %v5213
      %v5278 = vpack.c.b16 %v5214, %v5214
      %v5279 = vpack.c.b16 %v5215, %v5215
      %v5280 = vpack.c.b16 %v5216, %v5216
      %v5281 = vpack.c.b16 %v5217, %v5217
      %v5282 = vpack.c.b16 %v5218, %v5218
      %v5283 = vpack.c.b16 %v5219, %v5219
      %v5284 = vpack.c.b16 %v5220, %v5220
      %v5285 = vpack.c.b16 %v5221, %v5221
      %v5286 = vpack.c.b16 %v5222, %v5222
      %v5287 = vpack.c.b16 %v5223, %v5223
      %v5288 = vpack.c.b16 %v5224, %v5224
      %v5289 = vpack.c.b16 %v5225, %v5225
      %v5290 = vpack.c.b16 %v5226, %v5226
      %v5291 = vpack.c.b16 %v5227, %v5227
      %v5292 = vpack.c.b16 %v5228, %v5228
      %v5293 = vpack.c.b16 %v5229, %v5229
      %v5294 = vpack.c.b16 %v5230, %v5230
      %v5295 = vpack.c.b16 %v5231, %v5231
      %v5296 = vpack.c.b16 %v5232, %v5232
      %v5297 = vpack.c.b16 %v5233, %v5233
      %v5298 = vpack.c.b16 %v5234, %v5234
      %v5299 = vpack.c.b16 %v5235, %v5235
      %v5300 = vpack.c.b16 %v5236, %v5236
      %v5301 = vpack.c.b16 %v5237, %v5237
      %v5302 = vpack.c.b16 %v5238, %v5238
      %v5303 = vpack.c.b16 %v5239, %v5239
      %v5304 = vpack.c.b16 %v5240, %v5240
      %v5305 = vpack.c.b16 %v5241, %v5241
      %v5306 = vpack.c.b16 %v5242, %v5242
      %v5307 = vpack.c.b16 %v5243, %v5243
      %v5308 = vpack.c.b16 %v5244, %v5244
      %v5309 = vpack.c.b16 %v5245, %v5245
      %v5310 = vpack.c.b16 %v5246, %v5246
      %v5311 = vpack.c.b16 %v5247, %v5247
      %v5312 = vpack.c.b16 %v5248, %v5248
      %v5313 = vpack.c.b16 %v5249, %v5249
      %v5314 = vpack.c.b16 %v5250, %v5250
      %v5315 = vpack.c.b16 %v5251, %v5251
      %v5316 = vpack.c.b16 %v5252, %v5252
      %v5317 = vpack.c.b16 %v5253, %v5253
      %v5318 = vpack.c.b16 %v5254, %v5254
      %v5319 = vpack.c.b16 %v5255, %v5255
      %v5320 = vpack.c.b16 %v5256, %v5256
      %v5321 = vpack.c.b16 %v5257, %v5257
      %v5322 = vpack.c.b16 %v5258, %v5258
      %v5323 = vpack.c.b16 %v5259, %v5259
      %v5324 = vpack.c.b16 %v5260, %v5260
      %v5325 = vpack.c.b16 %v5261, %v5261
      %v5326 = vpack.c.b16 %v5262, %v5262
      %v5327 = vpack.c.b16 %v5263, %v5263
      %v5328 = vpack.c.b16 %v5264, %v5264
      %v5329 = vpack.c.b16 %v5265, %v5265
      %v5330 = vpack.c.b16 %v5266, %v5266
      %v5331 = vpack.c.b16 %v5267, %v5267
      %v5332 = vpack.c.b16 %v5268, %v5268
      %v5333 = vpack.c.b16 %v5269, %v5269
      %v5334 = vpack.c.b16 %v5270, %v5270
      %5399 = vst [vmem:[%s201] sm:$0xf] %v5271
      %5400 = vst [vmem:[%s201 + $0x4] sm:$0xf] %v5272
      %5401 = vst [vmem:[%s201 + $0x8] sm:$0xf] %v5273
      %5402 = vst [vmem:[%s201 + $0xc] sm:$0xf] %v5274
      %5403 = vst [vmem:[%s201 + $0x10] sm:$0xf] %v5275
      %5404 = vst [vmem:[%s201 + $0x14] sm:$0xf] %v5276
      %5405 = vst [vmem:[%s201 + $0x18] sm:$0xf] %v5277
      %5406 = vst [vmem:[%s201 + $0x1c] sm:$0xf] %v5278
      %5407 = vst [vmem:[%s201 + $0x20] sm:$0xf] %v5279
      %5408 = vst [vmem:[%s201 + $0x24] sm:$0xf] %v5280
      %5409 = vst [vmem:[%s201 + $0x28] sm:$0xf] %v5281
      %5410 = vst [vmem:[%s201 + $0x2c] sm:$0xf] %v5282
      %5411 = vst [vmem:[%s201 + $0x30] sm:$0xf] %v5283
      %5412 = vst [vmem:[%s201 + $0x34] sm:$0xf] %v5284
      %5413 = vst [vmem:[%s201 + $0x38] sm:$0xf] %v5285
      %5414 = vst [vmem:[%s201 + $0x3c] sm:$0xf] %v5286
      %5415 = vst [vmem:[%s201 + $0x40] sm:$0xf] %v5287
      %5416 = vst [vmem:[%s201 + $0x44] sm:$0xf] %v5288
      %5417 = vst [vmem:[%s201 + $0x48] sm:$0xf] %v5289
      %5418 = vst [vmem:[%s201 + $0x4c] sm:$0xf] %v5290
      %5419 = vst [vmem:[%s201 + $0x50] sm:$0xf] %v5291
      %5420 = vst [vmem:[%s201 + $0x54] sm:$0xf] %v5292
      %5421 = vst [vmem:[%s201 + $0x58] sm:$0xf] %v5293
      %5422 = vst [vmem:[%s201 + $0x5c] sm:$0xf] %v5294
      %5423 = vst [vmem:[%s201 + $0x60] sm:$0xf] %v5295
      %5424 = vst [vmem:[%s201 + $0x64] sm:$0xf] %v5296
      %5425 = vst [vmem:[%s201 + $0x68] sm:$0xf] %v5297
      %5426 = vst [vmem:[%s201 + $0x6c] sm:$0xf] %v5298
      %5427 = vst [vmem:[%s201 + $0x70] sm:$0xf] %v5299
      %5428 = vst [vmem:[%s201 + $0x74] sm:$0xf] %v5300
      %5429 = vst [vmem:[%s201 + $0x78] sm:$0xf] %v5301
      %5430 = vst [vmem:[%s201 + $0x7c] sm:$0xf] %v5302
      %5431 = vst [vmem:[%s201 + $0x80] sm:$0xf] %v5303
      %5432 = vst [vmem:[%s201 + $0x84] sm:$0xf] %v5304
      %5433 = vst [vmem:[%s201 + $0x88] sm:$0xf] %v5305
      %5434 = vst [vmem:[%s201 + $0x8c] sm:$0xf] %v5306
      %5435 = vst [vmem:[%s201 + $0x90] sm:$0xf] %v5307
      %5436 = vst [vmem:[%s201 + $0x94] sm:$0xf] %v5308
      %5437 = vst [vmem:[%s201 + $0x98] sm:$0xf] %v5309
      %5438 = vst [vmem:[%s201 + $0x9c] sm:$0xf] %v5310
      %5439 = vst [vmem:[%s201 + $0xa0] sm:$0xf] %v5311
      %5440 = vst [vmem:[%s201 + $0xa4] sm:$0xf] %v5312
      %5441 = vst [vmem:[%s201 + $0xa8] sm:$0xf] %v5313
      %5442 = vst [vmem:[%s201 + $0xac] sm:$0xf] %v5314
      %5443 = vst [vmem:[%s201 + $0xb0] sm:$0xf] %v5315
      %5444 = vst [vmem:[%s201 + $0xb4] sm:$0xf] %v5316
      %5445 = vst [vmem:[%s201 + $0xb8] sm:$0xf] %v5317
      %5446 = vst [vmem:[%s201 + $0xbc] sm:$0xf] %v5318
      %5447 = vst [vmem:[%s201 + $0xc0] sm:$0xf] %v5319
      %5448 = vst [vmem:[%s201 + $0xc4] sm:$0xf] %v5320
      %5449 = vst [vmem:[%s201 + $0xc8] sm:$0xf] %v5321
      %5450 = vst [vmem:[%s201 + $0xcc] sm:$0xf] %v5322
      %5451 = vst [vmem:[%s201 + $0xd0] sm:$0xf] %v5323
      %5452 = vst [vmem:[%s201 + $0xd4] sm:$0xf] %v5324
      %5453 = vst [vmem:[%s201 + $0xd8] sm:$0xf] %v5325
      %5454 = vst [vmem:[%s201 + $0xdc] sm:$0xf] %v5326
      %5455 = vst [vmem:[%s201 + $0xe0] sm:$0xf] %v5327
      %5456 = vst [vmem:[%s201 + $0xe4] sm:$0xf] %v5328
      %5457 = vst [vmem:[%s201 + $0xe8] sm:$0xf] %v5329
      %5458 = vst [vmem:[%s201 + $0xec] sm:$0xf] %v5330
      %5459 = vst [vmem:[%s201 + $0xf0] sm:$0xf] %v5331
      %5460 = vst [vmem:[%s201 + $0xf4] sm:$0xf] %v5332
      %5461 = vst [vmem:[%s201 + $0xf8] sm:$0xf] %v5333
      %5462 = vst [vmem:[%s201 + $0xfc] sm:$0xf] %v5334
      %p5463 = scmp.lt.s32.totalorder %s18, 1
      %s5464 = scalar_select %p5463, %s18, 1
      %p5465 = scmp.lt.s32.totalorder %s19, 0
      %s5466 = scalar_select %p5465, %s19, 0
      %s5467 = smul.addr %s5464, 64
      %s5468 = sadd.s32 %s5466, %s5467
      %s5469 = smul.addr %s5468, 4
      %s5470 = scalar_lea.vmem %s3, %s5469
      // Predicated region
      $region33: #{_lambda_.1} parent=31 // pred_check
        %p5471 = pneg %p116
      $region34: #{_lambda_.1} parent=31 // pred_check_branch
        %5473 = sbr.rel (%p5471) target = $region36
      $region35: #{_lambda_.1} parent=31 // pred_region
        _
      $region36: #{_lambda_.1} parent=31 // pred_fallthru
        _
    $region32: #{_lambda_.1} parent=5 // pred_fallthru
      _
    %p5474 = scmp.le.s32.totalorder 2, %s9
    // Predicated region
    $region37: #{_lambda_.1} parent=5 // pred_check
      %p5475 = pneg %p5474
    $region38: #{_lambda_.1} parent=5 // pred_check_branch
      %5477 = sbr.rel (%p5475) target = $region40
    $region39: #{_lambda_.1} parent=5 // pred_region
      %s5478 = ssub.s32 %s9, 2
      // Predicated region
      $region41: #{_lambda_.1} parent=39 // pred_check
        %p5479 = pneg %p122
      $region42: #{_lambda_.1} parent=39 // pred_check_branch
        %5481 = sbr.rel (%p5479) target = $region44
      $region43: #{_lambda_.1} parent=39 // pred_region
        %p5482 = scmp.lt.s32.totalorder %s20, 1
        %s5483 = scalar_select %p5482, %s20, 1
        %p5484 = scmp.lt.s32.totalorder %s21, 0
        %s5485 = scalar_select %p5484, %s21, 0
        %s5486 = smul.addr %s5483, 64
        %s5487 = sadd.s32 %s5485, %s5486
        %s5488 = smul.addr %s5487, 4
        %s5489 = scalar_lea.vmem %s3, %s5488
      $region44: #{_lambda_.1} parent=39 // pred_fallthru
        _
    $region40: #{_lambda_.1} parent=5 // pred_fallthru
      _
  $region6: #{_lambda_.1} parent=0 // loop_footer
    %s13 = sadd.s32 1, %s9
  $region7: #{_lambda_.1} parent=0 // loop_footer_branch
    %8 = sbr.rel target = $region3
  $region8: #{_lambda_.1} parent=0 // loop_exit
    _

</llo_original>
